<compile_context>
chip_gen: v6e
topology: v6e:2x2x1
jax: 0.10.0
libtpu: 0.0.40
codegen_flags: <defaults>
</compile_context>

<pallas_src>
import numpy as np
import jax
import jax.numpy as jnp
from jax.experimental import pallas as pl
from jax.experimental.pallas import tpu as pltpu


OFF = 8                                   # sublane-aligned interior column offset in xp
PATCH_BUDGET_BYTES = 4 * 1024 * 1024      # max resident in-kernel im2col patch (bf16)
KP_RGB = 32                               # padded K for the pre-im2col'ed RGB conv (9*3 -> 32)


# ---------------------------------------------------------------------------
# Fused VGG block kernel: [conv3x3 + bias + ReLU] * n_conv  ->  maxpool2x2(+indices)
# ---------------------------------------------------------------------------
def _make_block_kernel(H, W, conv_meta):
    """conv_meta: tuple of (kind, cin, cout) per 3x3 conv.

    kind == "patch":  block input already im2col'ed by the wrapper
                      (shape (H, W, KP_RGB) bf16); weight (KP_RGB, cout) bf16.
    kind == "im2col": in-kernel lane-axis concat of the 9 taps; weight (9*cin, cout).
    kind == "tap":    9 accumulated K=cin matmuls; weight (9, cin, cout).
    """
    n_conv = len(conv_meta)
    Ho, Wo = H // 2, W // 2
    c_last = conv_meta[-1][2]
    Wp = W + 2 * OFF                       # padded scratch width; interior cols [OFF, OFF+W)

    def kernel(*refs):
        x_ref = refs[0]
        o_ref = refs[1 + 2 * n_conv]
        i_ref = refs[2 + 2 * n_conv]
        scratch = list(refs[3 + 2 * n_conv:])
        xs_ref = scratch[-1]               # f32 staging for the pool's strided reads
        xp_refs = scratch[:-1]             # per-conv padded activations (bf16)

        xp_i = 0
        x = None
        for ci, (kind, cin, cout) in enumerate(conv_meta):
            w_ref = refs[1 + 2 * ci]
            b_ref = refs[2 + 2 * ci]       # (1, cout) f32
            last = ci == n_conv - 1

            if kind == "patch":
                # Wrapper already folded the zero padding + 3x3 neighborhood into the
                # channel dim: a single bf16 MXU matmul with K = KP_RGB.
                patch = x_ref[...].reshape(H * W, x_ref.shape[-1])
                acc = jnp.dot(patch, w_ref[...], preferred_element_type=jnp.float32)
            else:
                xp = xp_refs[xp_i]
                xp_i += 1                                  # (H+2, Wp, cin) bf16
                src = x_ref[...] if ci == 0 else x
                # Zero only the 1-px border that the 3x3 windows actually read.
                xp[0:1, :, :] = jnp.zeros((1, Wp, cin), xp.dtype)
                xp[H + 1:H + 2, :, :] = jnp.zeros((1, Wp, cin), xp.dtype)
                xp[:, OFF - 1:OFF, :] = jnp.zeros((H + 2, 1, cin), xp.dtype)
                xp[:, OFF + W:OFF + W + 1, :] = jnp.zeros((H + 2, 1, cin), xp.dtype)
                # Sublane-aligned interior write (unmasked stores).
                xp[1:H + 1, OFF:OFF + W, :] = src.astype(xp.dtype)

                if kind == "im2col":
                    # Single MXU matmul, K = 9*cin (only chosen when cin % 128 == 0 and
                    # the resident patch is small).
                    patch = jnp.concatenate(
                        [xp[dy:dy + H, OFF - 1 + dx:OFF - 1 + dx + W, :]
                         for dy in range(3) for dx in range(3)],
                        axis=-1).reshape(H * W, 9 * cin)
                    acc = jnp.dot(patch, w_ref[...],
                                  preferred_element_type=jnp.float32)
                else:  # "tap": 9 accumulated matmuls, K = cin (no 9x resident patch)
                    acc = jnp.zeros((H * W, cout), jnp.float32)
                    for k in range(9):
                        dy, dx = divmod(k, 3)
                        p = xp[dy:dy + H, OFF - 1 + dx:OFF - 1 + dx + W, :]
                        acc = acc + jnp.dot(p.reshape(H * W, cin), w_ref[k],
                                            preferred_element_type=jnp.float32)

            # bias + ReLU fused into the epilogue; bf16 between convs (the next conv's
            # scratch is bf16 anyway), f32 only for the final conv feeding the pool.
            y = jnp.maximum(acc + b_ref[...], 0.0).reshape(H, W, cout)
            x = y if last else y.astype(jnp.bfloat16)

        # Fused 2x2 / stride-2 max pool with PyTorch-style flat indices (h*W + w),
        # strict '>' so ties keep the first position in (0,0),(0,1),(1,0),(1,1) order.
        xs_ref[...] = x
        v00 = xs_ref[pl.ds(0, Ho, 2), pl.ds(0, Wo, 2), :]
        v01 = xs_ref[pl.ds(0, Ho, 2), pl.ds(1, Wo, 2), :]
        v10 = xs_ref[pl.ds(1, Ho, 2), pl.ds(0, Wo, 2), :]
        v11 = xs_ref[pl.ds(1, Ho, 2), pl.ds(1, Wo, 2), :]

        ii = jax.lax.broadcasted_iota(jnp.int32, (Ho, Wo, c_last), 0)
        jj = jax.lax.broadcasted_iota(jnp.int32, (Ho, Wo, c_last), 1)
        base = (2 * ii) * W + (2 * jj)

        m, idx = v00, base
        for v, off in ((v01, 1), (v10, W), (v11, W + 1)):
            take = v > m                   # strict '>' : first-occurrence ties, like torch
            idx = jnp.where(take, base + off, idx)
            m = jnp.where(take, v, m)

        o_ref[...] = m
        i_ref[...] = idx

    return kernel


# ---------------------------------------------------------------------------
# Wrapper helpers
# ---------------------------------------------------------------------------
def _round_up(x, m):
    return -(-x // m) * m


def _vmem_bytes(shape, dtype):
    """VMEM footprint of one buffer with TPU (sublane, lane) padding."""
    itemsize = jnp.dtype(dtype).itemsize
    dims = [int(d) for d in shape if d is not None]
    if not dims:
        return 4
    dims[-1] = _round_up(dims[-1], 128)
    if len(dims) >= 2:
        dims[-2] = _round_up(dims[-2], 8 * max(1, 4 // itemsize))
    n = 1
    for d in dims:
        n *= d
    return n * itemsize


def _vmem_capacity_bytes():
    try:
        return int(pltpu.get_tpu_info().vmem_capacity_bytes)
    except Exception:
        return 64 * 1024 * 1024            # conservative across generations (v7x = 64 MiB)


def _bcast_spec(shape):
    nd = len(shape)
    return pl.BlockSpec(tuple(int(d) for d in shape), lambda n: (0,) * nd)


def vgg_block_forward(x_in, block_params):
    """One fused VGG block: [conv3x3+ReLU]*n -> maxpool2x2(stride 2, return_indices).

    x_in: (N,H,W,Cin_eff) -- bf16 pre-im2col patches (first block) or f32 NHWC.
    block_params: list of prepared conv dicts (see prepare_params).
    Returns (pooled (N,H/2,W/2,CoutL) f32, indices (N,H/2,W/2,CoutL) int32), NHWC.
    """
    N, H, W, cin_eff = (int(d) for d in x_in.shape)
    conv_meta = tuple((c["kind"], c["cin"], c["cout"]) for c in block_params)
    c_last = conv_meta[-1][2]
    Ho, Wo = H // 2, W // 2
    Wp = W + 2 * OFF

    args = [x_in]
    in_specs = [pl.BlockSpec((None, H, W, cin_eff), lambda n: (n, 0, 0, 0))]
    est = 2 * _vmem_bytes((H, W, cin_eff), x_in.dtype)          # double-buffered input

    scratch_shapes = []
    for c in block_params:
        args += [c["w"], c["b"]]
        in_specs += [_bcast_spec(c["w"].shape), _bcast_spec(c["b"].shape)]
        est += 2 * _vmem_bytes(c["w"].shape, c["w"].dtype)
        est += 2 * _vmem_bytes(c["b"].shape, c["b"].dtype)
        if c["kind"] != "patch":
            scratch_shapes.append(pltpu.VMEM((H + 2, Wp, c["cin"]), jnp.bfloat16))
            est += _vmem_bytes((H + 2, Wp, c["cin"]), jnp.bfloat16)
    scratch_shapes.append(pltpu.VMEM((H, W, c_last), jnp.float32))   # pool staging
    est += _vmem_bytes((H, W, c_last), jnp.float32)
    est += 2 * (_vmem_bytes((Ho, Wo, c_last), jnp.float32) +
                _vmem_bytes((Ho, Wo, c_last), jnp.int32))            # double-buffered outputs

    # vmem limit from the actual block sizes (+headroom for values/spills), clamped
    # to the device's physical VMEM capacity.
    vmem_limit = int(min(max(32 << 20, est * 3 // 2 + (8 << 20)),
                         int(_vmem_capacity_bytes() * 0.9)))

    return pl.pallas_call(
        _make_block_kernel(H, W, conv_meta),
        out_shape=(
            jax.ShapeDtypeStruct((N, Ho, Wo, c_last), jnp.float32),
            jax.ShapeDtypeStruct((N, Ho, Wo, c_last), jnp.int32),
        ),
        grid=(N,),
        in_specs=in_specs,
        out_specs=(
            pl.BlockSpec((None, Ho, Wo, c_last), lambda n: (n, 0, 0, 0)),
            pl.BlockSpec((None, Ho, Wo, c_last), lambda n: (n, 0, 0, 0)),
        ),
        scratch_shapes=scratch_shapes,
        compiler_params=pltpu.CompilerParams(
            dimension_semantics=("parallel",),
            vmem_limit_bytes=vmem_limit,
        ),
    )(*args)


# ---------------------------------------------------------------------------
# Encoder module (bn=False, att_block=3): VGG16 conv blocks 1..3
# ---------------------------------------------------------------------------
VGG_CFG = [
    [(3, 64), (64, 64)],                    # features[0:4]
    [(64, 128), (128, 128)],                # features[5:9]
    [(128, 256), (256, 256), (256, 256)],   # features[10:16]
]


def init_params(key):
    """Deterministic synthetic weights with VGG16 shapes (PyTorch (Cout,Cin,3,3) layout)."""
    params = []
    for block in VGG_CFG:
        bp = []
        for cin, cout in block:
            key, kw, kb = jax.random.split(key, 3)
            w = jax.random.normal(kw, (cout, cin, 3, 3), jnp.float32) / np.sqrt(cin * 9.0)
            b = jax.random.normal(kb, (cout,), jnp.float32) * 0.01
            bp.append((w, b))
        params.append(bp)
    return params


def _choose_kind(block_idx, conv_idx, cin, H, W):
    if block_idx == 0 and conv_idx == 0:
        return "patch"      # RGB conv: wrapper-side im2col, one K=32 bf16 matmul
    if cin % 128 == 0 and 9 * cin * H * W * 2 <= PATCH_BUDGET_BYTES:
        return "im2col"     # lane-axis concat is cheap vreg placement for 128-mult cin
    return "tap"            # 9 accumulated K=cin matmuls (cin=64, or large planes)


def prepare_params(raw_params, image_hw):
    """One-time weight repacking (hoisted out of the per-forward-call path):
    (Cout,Cin,3,3) f32 -> (ky,kx,Cin,Cout) bf16, reshaped per matmul strategy."""
    H, W = image_hw
    prepped = []
    for bi, block in enumerate(raw_params):
        bp = []
        for ci, (w, b) in enumerate(block):
            cout, cin = int(w.shape[0]), int(w.shape[1])
            kind = _choose_kind(bi, ci, cin, H, W)
            w9 = jnp.transpose(w, (2, 3, 1, 0)).astype(jnp.bfloat16)   # (ky,kx,cin,cout)
            if kind == "patch":
                wk = jnp.pad(w9.reshape(9 * cin, cout),
                             ((0, KP_RGB - 9 * cin), (0, 0)))          # K padded 27 -> 32
            elif kind == "im2col":
                wk = w9.reshape(9 * cin, cout)
            else:
                wk = w9.reshape(9, cin, cout)
            bp.append(dict(kind=kind, cin=cin, cout=cout, w=wk,
                           b=b.reshape(1, cout).astype(jnp.float32)))
        prepped.append(bp)
        H, W = H // 2, W // 2
    return prepped


def encoder_forward(x_nchw, prepped_params, att_block=3):
    """Mirrors Encoder.forward: returns [x, dim_list, ind_list, skip_list] (NCHW)."""
    dim_list, ind_list, skip_list = [], [], []
    x = jnp.transpose(x_nchw, (0, 2, 3, 1))                  # -> NHWC for the kernels
    for k in range(att_block):
        N, H, W, C = x.shape
        dim_list.append((N, C, H, W))                        # x.size() in NCHW convention
        if prepped_params[k][0]["kind"] == "patch":
            # Fold the 3-channel conv's zero padding + 3x3 neighborhood into the channel
            # dim once (bf16): avoids the lane-padded 3-channel VMEM block and turns
            # 9 tiny f32 matmuls into one K=32 bf16 matmul inside the kernel.
            xpad = jnp.pad(x, ((0, 0), (1, 1), (1, 1), (0, 0)))
            patches = jnp.concatenate(
                [xpad[:, dy:dy + H, dx:dx + W, :] for dy in range(3) for dx in range(3)],
                axis=-1)
            x_in = jnp.pad(patches,
                           ((0, 0), (0, 0), (0, 0),
                            (0, KP_RGB - patches.shape[-1]))).astype(jnp.bfloat16)
        else:
            x_in = x
        x, ind = vgg_block_forward(x_in, prepped_params[k])  # fused conv-stack + pool
        ind_list.append(jnp.transpose(ind, (0, 3, 1, 2)))    # NCHW indices
        skip_list.append(jnp.transpose(x, (0, 3, 1, 2)))     # NCHW pooled activations
    x_out = jnp.transpose(x, (0, 3, 1, 2))
    return [x_out, dim_list, ind_list, skip_list]


if __name__ == "__main__":
    key = jax.random.PRNGKey(0)
    kx, kp = jax.random.split(key)
    # small input consistent with the module: NCHW, 3 input channels (VGG)
    x = jax.random.normal(kx, (2, 3, 16, 16), jnp.float32)
    raw_params = init_params(kp)
    params = prepare_params(raw_params, (16, 16))    # one-time weight repacking

    out_x, dim_list, ind_list, skip_list = encoder_forward(x, params)
    jax.block_until_ready((out_x, ind_list, skip_list))

    assert out_x.shape == (2, 256, 2, 2)
    assert [s.shape for s in skip_list] == [(2, 64, 8, 8), (2, 128, 4, 4), (2, 256, 2, 2)]
    assert [i.shape for i in ind_list] == [(2, 64, 8, 8), (2, 128, 4, 4), (2, 256, 2, 2)]
    assert dim_list == [(2, 3, 16, 16), (2, 64, 8, 8), (2, 128, 4, 4)]
    print("KERNEL_OK")
</pallas_src>

<mosaic_0001>
module attributes {stable_mosaic.version = 11 : i64} {
  func.func @kernel(%arg0: i32, %arg1: memref<1x16x16x32xbf16, #tpu.memory_space<vmem>>, %arg2: memref<32x64xbf16, #tpu.memory_space<vmem>>, %arg3: memref<1x64xf32, #tpu.memory_space<vmem>>, %arg4: memref<9x64x64xbf16, #tpu.memory_space<vmem>>, %arg5: memref<1x64xf32, #tpu.memory_space<vmem>>, %arg6: memref<1x8x8x64xf32, #tpu.memory_space<vmem>>, %arg7: memref<1x8x8x64xi32, #tpu.memory_space<vmem>>, %arg8: memref<18x32x64xbf16, #tpu.memory_space<vmem>>, %arg9: memref<16x16x64xf32, #tpu.memory_space<vmem>>) attributes {dimension_semantics = [#tpu.dimension_semantics<parallel>], iteration_bounds = array<i64: 2>, scalar_prefetch = 0 : i64, scratch_operands = 2 : i64, tpu.core_type = #tpu.core_type<tc>, window_params = [{transform_indices = @transform_0, window_bounds = array<i64: 1, 16, 16, 32>}, {pipeline_mode = #tpu.pipeline_mode<synchronous>, transform_indices = @transform_1, window_bounds = array<i64: 32, 64>}, {pipeline_mode = #tpu.pipeline_mode<synchronous>, transform_indices = @transform_2, window_bounds = array<i64: 1, 64>}, {pipeline_mode = #tpu.pipeline_mode<synchronous>, transform_indices = @transform_3, window_bounds = array<i64: 9, 64, 64>}, {pipeline_mode = #tpu.pipeline_mode<synchronous>, transform_indices = @transform_4, window_bounds = array<i64: 1, 64>}, {transform_indices = @transform_5, window_bounds = array<i64: 1, 8, 8, 64>}, {transform_indices = @transform_6, window_bounds = array<i64: 1, 8, 8, 64>}]} {
    %c0 = arith.constant 0 : index
    %c0_0 = arith.constant 0 : index
    %c0_1 = arith.constant 0 : index
    %c0_2 = arith.constant 0 : index
    %0 = vector.load %arg1[%c0, %c0_0, %c0_1, %c0_2] : memref<1x16x16x32xbf16, #tpu.memory_space<vmem>>, vector<1x16x16x32xbf16>
    %1 = vector.shape_cast %0 : vector<1x16x16x32xbf16> to vector<16x16x32xbf16>
    %2 = vector.shape_cast %1 : vector<16x16x32xbf16> to vector<256x32xbf16>
    %c0_3 = arith.constant 0 : index
    %c0_4 = arith.constant 0 : index
    %3 = vector.load %arg2[%c0_3, %c0_4] : memref<32x64xbf16, #tpu.memory_space<vmem>>, vector<32x64xbf16>
    %cst = arith.constant dense<0.000000e+00> : vector<256x64xf32>
    %4 = tpu.matmul %2, %3, %cst {dimension_numbers = #tpu.dot_dimension_numbers<[1], [0], [0], [1], [0, 0, 1, 1], [], []>} : vector<256x32xbf16>, vector<32x64xbf16>, vector<256x64xf32> -> vector<256x64xf32>
    %c0_5 = arith.constant 0 : index
    %c0_6 = arith.constant 0 : index
    %5 = vector.load %arg3[%c0_5, %c0_6] : memref<1x64xf32, #tpu.memory_space<vmem>>, vector<1x64xf32>
    %6 = vector.broadcast %5 : vector<1x64xf32> to vector<256x64xf32>
    %7 = arith.addf %4, %6 : vector<256x64xf32>
    %cst_7 = arith.constant 0.000000e+00 : f32
    %8 = vector.broadcast %cst_7 : f32 to vector<256x64xf32>
    %9 = arith.maximumf %7, %8 : vector<256x64xf32>
    %10 = vector.shape_cast %9 : vector<256x64xf32> to vector<16x16x64xf32>
    %11 = arith.truncf %10 : vector<16x16x64xf32> to vector<16x16x64xbf16>
    %cst_8 = arith.constant 0.000000e+00 : bf16
    %12 = vector.broadcast %cst_8 : bf16 to vector<1x32x64xbf16>
    %c0_9 = arith.constant 0 : index
    %c0_10 = arith.constant 0 : index
    %c0_11 = arith.constant 0 : index
    %13 = vector.load %arg8[%c0_9, %c0_10, %c0_11] : memref<18x32x64xbf16, #tpu.memory_space<vmem>>, vector<1x32x64xbf16>
    tpu.vector_store %arg8[%c0_9, %c0_10, %c0_11], %12 {strides = array<i32>} : memref<18x32x64xbf16, #tpu.memory_space<vmem>>, vector<1x32x64xbf16>,
    %cst_12 = arith.constant 0.000000e+00 : bf16
    %14 = vector.broadcast %cst_12 : bf16 to vector<1x32x64xbf16>
    %c17 = arith.constant 17 : index
    %c0_13 = arith.constant 0 : index
    %c0_14 = arith.constant 0 : index
    %15 = vector.load %arg8[%c17, %c0_13, %c0_14] : memref<18x32x64xbf16, #tpu.memory_space<vmem>>, vector<1x32x64xbf16>
    tpu.vector_store %arg8[%c17, %c0_13, %c0_14], %14 {strides = array<i32>} : memref<18x32x64xbf16, #tpu.memory_space<vmem>>, vector<1x32x64xbf16>,
    %cst_15 = arith.constant 0.000000e+00 : bf16
    %16 = vector.broadcast %cst_15 : bf16 to vector<18x1x64xbf16>
    %c0_16 = arith.constant 0 : index
    %c7 = arith.constant 7 : index
    %c0_17 = arith.constant 0 : index
    %17 = vector.load %arg8[%c0_16, %c7, %c0_17] : memref<18x32x64xbf16, #tpu.memory_space<vmem>>, vector<18x1x64xbf16>
    tpu.vector_store %arg8[%c0_16, %c7, %c0_17], %16 {strides = array<i32>} : memref<18x32x64xbf16, #tpu.memory_space<vmem>>, vector<18x1x64xbf16>,
    %cst_18 = arith.constant 0.000000e+00 : bf16
    %18 = vector.broadcast %cst_18 : bf16 to vector<18x1x64xbf16>
    %c0_19 = arith.constant 0 : index
    %c24 = arith.constant 24 : index
    %c0_20 = arith.constant 0 : index
    %19 = vector.load %arg8[%c0_19, %c24, %c0_20] : memref<18x32x64xbf16, #tpu.memory_space<vmem>>, vector<18x1x64xbf16>
    tpu.vector_store %arg8[%c0_19, %c24, %c0_20], %18 {strides = array<i32>} : memref<18x32x64xbf16, #tpu.memory_space<vmem>>, vector<18x1x64xbf16>,
    %c1 = arith.constant 1 : index
    %c8 = arith.constant 8 : index
    %c0_21 = arith.constant 0 : index
    %20 = vector.load %arg8[%c1, %c8, %c0_21] : memref<18x32x64xbf16, #tpu.memory_space<vmem>>, vector<16x16x64xbf16>
    tpu.vector_store %arg8[%c1, %c8, %c0_21], %11 {strides = array<i32>} : memref<18x32x64xbf16, #tpu.memory_space<vmem>>, vector<16x16x64xbf16>,
    %cst_22 = arith.constant 0.000000e+00 : f32
    %21 = vector.broadcast %cst_22 : f32 to vector<256x64xf32>
    %c0_23 = arith.constant 0 : index
    %c7_24 = arith.constant 7 : index
    %c0_25 = arith.constant 0 : index
    %22 = vector.load %arg8[%c0_23, %c7_24, %c0_25] : memref<18x32x64xbf16, #tpu.memory_space<vmem>>, vector<16x16x64xbf16>
    %23 = vector.shape_cast %22 : vector<16x16x64xbf16> to vector<256x64xbf16>
    %c0_26 = arith.constant 0 : index
    %c0_27 = arith.constant 0 : index
    %c0_28 = arith.constant 0 : index
    %24 = vector.load %arg4[%c0_26, %c0_27, %c0_28] : memref<9x64x64xbf16, #tpu.memory_space<vmem>>, vector<1x64x64xbf16>
    %25 = vector.shape_cast %24 : vector<1x64x64xbf16> to vector<64x64xbf16>
    %cst_29 = arith.constant dense<0.000000e+00> : vector<256x64xf32>
    %26 = tpu.matmul %23, %25, %cst_29 {dimension_numbers = #tpu.dot_dimension_numbers<[1], [0], [0], [1], [0, 0, 1, 1], [], []>} : vector<256x64xbf16>, vector<64x64xbf16>, vector<256x64xf32> -> vector<256x64xf32>
    %27 = arith.addf %21, %26 : vector<256x64xf32>
    %c0_30 = arith.constant 0 : index
    %c8_31 = arith.constant 8 : index
    %c0_32 = arith.constant 0 : index
    %28 = vector.load %arg8[%c0_30, %c8_31, %c0_32] : memref<18x32x64xbf16, #tpu.memory_space<vmem>>, vector<16x16x64xbf16>
    %29 = vector.shape_cast %28 : vector<16x16x64xbf16> to vector<256x64xbf16>
    %c1_33 = arith.constant 1 : index
    %c0_34 = arith.constant 0 : index
    %c0_35 = arith.constant 0 : index
    %30 = vector.load %arg4[%c1_33, %c0_34, %c0_35] : memref<9x64x64xbf16, #tpu.memory_space<vmem>>, vector<1x64x64xbf16>
    %31 = vector.shape_cast %30 : vector<1x64x64xbf16> to vector<64x64xbf16>
    %cst_36 = arith.constant dense<0.000000e+00> : vector<256x64xf32>
    %32 = tpu.matmul %29, %31, %cst_36 {dimension_numbers = #tpu.dot_dimension_numbers<[1], [0], [0], [1], [0, 0, 1, 1], [], []>} : vector<256x64xbf16>, vector<64x64xbf16>, vector<256x64xf32> -> vector<256x64xf32>
    %33 = arith.addf %27, %32 : vector<256x64xf32>
    %c0_37 = arith.constant 0 : index
    %c9 = arith.constant 9 : index
    %c0_38 = arith.constant 0 : index
    %34 = vector.load %arg8[%c0_37, %c9, %c0_38] : memref<18x32x64xbf16, #tpu.memory_space<vmem>>, vector<16x16x64xbf16>
    %35 = vector.shape_cast %34 : vector<16x16x64xbf16> to vector<256x64xbf16>
    %c2 = arith.constant 2 : index
    %c0_39 = arith.constant 0 : index
    %c0_40 = arith.constant 0 : index
    %36 = vector.load %arg4[%c2, %c0_39, %c0_40] : memref<9x64x64xbf16, #tpu.memory_space<vmem>>, vector<1x64x64xbf16>
    %37 = vector.shape_cast %36 : vector<1x64x64xbf16> to vector<64x64xbf16>
    %cst_41 = arith.constant dense<0.000000e+00> : vector<256x64xf32>
    %38 = tpu.matmul %35, %37, %cst_41 {dimension_numbers = #tpu.dot_dimension_numbers<[1], [0], [0], [1], [0, 0, 1, 1], [], []>} : vector<256x64xbf16>, vector<64x64xbf16>, vector<256x64xf32> -> vector<256x64xf32>
    %39 = arith.addf %33, %38 : vector<256x64xf32>
    %c1_42 = arith.constant 1 : index
    %c7_43 = arith.constant 7 : index
    %c0_44 = arith.constant 0 : index
    %40 = vector.load %arg8[%c1_42, %c7_43, %c0_44] : memref<18x32x64xbf16, #tpu.memory_space<vmem>>, vector<16x16x64xbf16>
    %41 = vector.shape_cast %40 : vector<16x16x64xbf16> to vector<256x64xbf16>
    %c3 = arith.constant 3 : index
    %c0_45 = arith.constant 0 : index
    %c0_46 = arith.constant 0 : index
    %42 = vector.load %arg4[%c3, %c0_45, %c0_46] : memref<9x64x64xbf16, #tpu.memory_space<vmem>>, vector<1x64x64xbf16>
    %43 = vector.shape_cast %42 : vector<1x64x64xbf16> to vector<64x64xbf16>
    %cst_47 = arith.constant dense<0.000000e+00> : vector<256x64xf32>
    %44 = tpu.matmul %41, %43, %cst_47 {dimension_numbers = #tpu.dot_dimension_numbers<[1], [0], [0], [1], [0, 0, 1, 1], [], []>} : vector<256x64xbf16>, vector<64x64xbf16>, vector<256x64xf32> -> vector<256x64xf32>
    %45 = arith.addf %39, %44 : vector<256x64xf32>
    %c1_48 = arith.constant 1 : index
    %c8_49 = arith.constant 8 : index
    %c0_50 = arith.constant 0 : index
    %46 = vector.load %arg8[%c1_48, %c8_49, %c0_50] : memref<18x32x64xbf16, #tpu.memory_space<vmem>>, vector<16x16x64xbf16>
    %47 = vector.shape_cast %46 : vector<16x16x64xbf16> to vector<256x64xbf16>
    %c4 = arith.constant 4 : index
    %c0_51 = arith.constant 0 : index
    %c0_52 = arith.constant 0 : index
    %48 = vector.load %arg4[%c4, %c0_51, %c0_52] : memref<9x64x64xbf16, #tpu.memory_space<vmem>>, vector<1x64x64xbf16>
    %49 = vector.shape_cast %48 : vector<1x64x64xbf16> to vector<64x64xbf16>
    %cst_53 = arith.constant dense<0.000000e+00> : vector<256x64xf32>
    %50 = tpu.matmul %47, %49, %cst_53 {dimension_numbers = #tpu.dot_dimension_numbers<[1], [0], [0], [1], [0, 0, 1, 1], [], []>} : vector<256x64xbf16>, vector<64x64xbf16>, vector<256x64xf32> -> vector<256x64xf32>
    %51 = arith.addf %45, %50 : vector<256x64xf32>
    %c1_54 = arith.constant 1 : index
    %c9_55 = arith.constant 9 : index
    %c0_56 = arith.constant 0 : index
    %52 = vector.load %arg8[%c1_54, %c9_55, %c0_56] : memref<18x32x64xbf16, #tpu.memory_space<vmem>>, vector<16x16x64xbf16>
    %53 = vector.shape_cast %52 : vector<16x16x64xbf16> to vector<256x64xbf16>
    %c5 = arith.constant 5 : index
    %c0_57 = arith.constant 0 : index
    %c0_58 = arith.constant 0 : index
    %54 = vector.load %arg4[%c5, %c0_57, %c0_58] : memref<9x64x64xbf16, #tpu.memory_space<vmem>>, vector<1x64x64xbf16>
    %55 = vector.shape_cast %54 : vector<1x64x64xbf16> to vector<64x64xbf16>
    %cst_59 = arith.constant dense<0.000000e+00> : vector<256x64xf32>
    %56 = tpu.matmul %53, %55, %cst_59 {dimension_numbers = #tpu.dot_dimension_numbers<[1], [0], [0], [1], [0, 0, 1, 1], [], []>} : vector<256x64xbf16>, vector<64x64xbf16>, vector<256x64xf32> -> vector<256x64xf32>
    %57 = arith.addf %51, %56 : vector<256x64xf32>
    %c2_60 = arith.constant 2 : index
    %c7_61 = arith.constant 7 : index
    %c0_62 = arith.constant 0 : index
    %58 = vector.load %arg8[%c2_60, %c7_61, %c0_62] : memref<18x32x64xbf16, #tpu.memory_space<vmem>>, vector<16x16x64xbf16>
    %59 = vector.shape_cast %58 : vector<16x16x64xbf16> to vector<256x64xbf16>
    %c6 = arith.constant 6 : index
    %c0_63 = arith.constant 0 : index
    %c0_64 = arith.constant 0 : index
    %60 = vector.load %arg4[%c6, %c0_63, %c0_64] : memref<9x64x64xbf16, #tpu.memory_space<vmem>>, vector<1x64x64xbf16>
    %61 = vector.shape_cast %60 : vector<1x64x64xbf16> to vector<64x64xbf16>
    %cst_65 = arith.constant dense<0.000000e+00> : vector<256x64xf32>
    %62 = tpu.matmul %59, %61, %cst_65 {dimension_numbers = #tpu.dot_dimension_numbers<[1], [0], [0], [1], [0, 0, 1, 1], [], []>} : vector<256x64xbf16>, vector<64x64xbf16>, vector<256x64xf32> -> vector<256x64xf32>
    %63 = arith.addf %57, %62 : vector<256x64xf32>
    %c2_66 = arith.constant 2 : index
    %c8_67 = arith.constant 8 : index
    %c0_68 = arith.constant 0 : index
    %64 = vector.load %arg8[%c2_66, %c8_67, %c0_68] : memref<18x32x64xbf16, #tpu.memory_space<vmem>>, vector<16x16x64xbf16>
    %65 = vector.shape_cast %64 : vector<16x16x64xbf16> to vector<256x64xbf16>
    %c7_69 = arith.constant 7 : index
    %c0_70 = arith.constant 0 : index
    %c0_71 = arith.constant 0 : index
    %66 = vector.load %arg4[%c7_69, %c0_70, %c0_71] : memref<9x64x64xbf16, #tpu.memory_space<vmem>>, vector<1x64x64xbf16>
    %67 = vector.shape_cast %66 : vector<1x64x64xbf16> to vector<64x64xbf16>
    %cst_72 = arith.constant dense<0.000000e+00> : vector<256x64xf32>
    %68 = tpu.matmul %65, %67, %cst_72 {dimension_numbers = #tpu.dot_dimension_numbers<[1], [0], [0], [1], [0, 0, 1, 1], [], []>} : vector<256x64xbf16>, vector<64x64xbf16>, vector<256x64xf32> -> vector<256x64xf32>
    %69 = arith.addf %63, %68 : vector<256x64xf32>
    %c2_73 = arith.constant 2 : index
    %c9_74 = arith.constant 9 : index
    %c0_75 = arith.constant 0 : index
    %70 = vector.load %arg8[%c2_73, %c9_74, %c0_75] : memref<18x32x64xbf16, #tpu.memory_space<vmem>>, vector<16x16x64xbf16>
    %71 = vector.shape_cast %70 : vector<16x16x64xbf16> to vector<256x64xbf16>
    %c8_76 = arith.constant 8 : index
    %c0_77 = arith.constant 0 : index
    %c0_78 = arith.constant 0 : index
    %72 = vector.load %arg4[%c8_76, %c0_77, %c0_78] : memref<9x64x64xbf16, #tpu.memory_space<vmem>>, vector<1x64x64xbf16>
    %73 = vector.shape_cast %72 : vector<1x64x64xbf16> to vector<64x64xbf16>
    %cst_79 = arith.constant dense<0.000000e+00> : vector<256x64xf32>
    %74 = tpu.matmul %71, %73, %cst_79 {dimension_numbers = #tpu.dot_dimension_numbers<[1], [0], [0], [1], [0, 0, 1, 1], [], []>} : vector<256x64xbf16>, vector<64x64xbf16>, vector<256x64xf32> -> vector<256x64xf32>
    %75 = arith.addf %69, %74 : vector<256x64xf32>
    %c0_80 = arith.constant 0 : index
    %c0_81 = arith.constant 0 : index
    %76 = vector.load %arg5[%c0_80, %c0_81] : memref<1x64xf32, #tpu.memory_space<vmem>>, vector<1x64xf32>
    %77 = vector.broadcast %76 : vector<1x64xf32> to vector<256x64xf32>
    %78 = arith.addf %75, %77 : vector<256x64xf32>
    %cst_82 = arith.constant 0.000000e+00 : f32
    %79 = vector.broadcast %cst_82 : f32 to vector<256x64xf32>
    %80 = arith.maximumf %78, %79 : vector<256x64xf32>
    %81 = vector.shape_cast %80 : vector<256x64xf32> to vector<16x16x64xf32>
    %c0_83 = arith.constant 0 : index
    %c0_84 = arith.constant 0 : index
    %c0_85 = arith.constant 0 : index
    %82 = vector.load %arg9[%c0_83, %c0_84, %c0_85] : memref<16x16x64xf32, #tpu.memory_space<vmem>>, vector<16x16x64xf32>
    tpu.vector_store %arg9[%c0_83, %c0_84, %c0_85], %81 {strides = array<i32>} : memref<16x16x64xf32, #tpu.memory_space<vmem>>, vector<16x16x64xf32>,
    %c0_86 = arith.constant 0 : index
    %c0_87 = arith.constant 0 : index
    %c0_88 = arith.constant 0 : index
    %83 = tpu.strided_load %arg9[%c0_86, %c0_87, %c0_88] {strides = array<i32: 2, 2, 1>} : memref<16x16x64xf32, #tpu.memory_space<vmem>>, vector<8x8x64xf32>
    %c0_89 = arith.constant 0 : index
    %c1_90 = arith.constant 1 : index
    %c0_91 = arith.constant 0 : index
    %84 = tpu.strided_load %arg9[%c0_89, %c1_90, %c0_91] {strides = array<i32: 2, 2, 1>} : memref<16x16x64xf32, #tpu.memory_space<vmem>>, vector<8x8x64xf32>
    %c1_92 = arith.constant 1 : index
    %c0_93 = arith.constant 0 : index
    %c0_94 = arith.constant 0 : index
    %85 = tpu.strided_load %arg9[%c1_92, %c0_93, %c0_94] {strides = array<i32: 2, 2, 1>} : memref<16x16x64xf32, #tpu.memory_space<vmem>>, vector<8x8x64xf32>
    %c1_95 = arith.constant 1 : index
    %c1_96 = arith.constant 1 : index
    %c0_97 = arith.constant 0 : index
    %86 = tpu.strided_load %arg9[%c1_95, %c1_96, %c0_97] {strides = array<i32: 2, 2, 1>} : memref<16x16x64xf32, #tpu.memory_space<vmem>>, vector<8x8x64xf32>
    %87 = tpu.iota {dimensions = array<i32: 0>} : vector<8x8x64xi32>
    %88 = tpu.iota {dimensions = array<i32: 1>} : vector<8x8x64xi32>
    %c2_i32 = arith.constant 2 : i32
    %89 = vector.broadcast %c2_i32 : i32 to vector<8x8x64xi32>
    %90 = arith.muli %89, %87 : vector<8x8x64xi32>
    %c16_i32 = arith.constant 16 : i32
    %91 = vector.broadcast %c16_i32 : i32 to vector<8x8x64xi32>
    %92 = arith.muli %90, %91 : vector<8x8x64xi32>
    %c2_i32_98 = arith.constant 2 : i32
    %93 = vector.broadcast %c2_i32_98 : i32 to vector<8x8x64xi32>
    %94 = arith.muli %93, %88 : vector<8x8x64xi32>
    %95 = arith.addi %92, %94 : vector<8x8x64xi32>
    %96 = arith.cmpf ogt, %84, %83 : vector<8x8x64xf32>
    %c1_i32 = arith.constant 1 : i32
    %97 = vector.broadcast %c1_i32 : i32 to vector<8x8x64xi32>
    %98 = arith.addi %95, %97 : vector<8x8x64xi32>
    %99 = arith.select %96, %98, %95 : vector<8x8x64xi1>, vector<8x8x64xi32>
    %100 = arith.select %96, %84, %83 : vector<8x8x64xi1>, vector<8x8x64xf32>
    %101 = arith.cmpf ogt, %85, %100 : vector<8x8x64xf32>
    %c16_i32_99 = arith.constant 16 : i32
    %102 = vector.broadcast %c16_i32_99 : i32 to vector<8x8x64xi32>
    %103 = arith.addi %95, %102 : vector<8x8x64xi32>
    %104 = arith.select %101, %103, %99 : vector<8x8x64xi1>, vector<8x8x64xi32>
    %105 = arith.select %101, %85, %100 : vector<8x8x64xi1>, vector<8x8x64xf32>
    %106 = arith.cmpf ogt, %86, %105 : vector<8x8x64xf32>
    %c17_i32 = arith.constant 17 : i32
    %107 = vector.broadcast %c17_i32 : i32 to vector<8x8x64xi32>
    %108 = arith.addi %95, %107 : vector<8x8x64xi32>
    %109 = arith.select %106, %108, %104 : vector<8x8x64xi1>, vector<8x8x64xi32>
    %110 = arith.select %106, %86, %105 : vector<8x8x64xi1>, vector<8x8x64xf32>
    %c0_100 = arith.constant 0 : index
    %c0_101 = arith.constant 0 : index
    %c0_102 = arith.constant 0 : index
    %c0_103 = arith.constant 0 : index
    %111 = vector.load %arg6[%c0_100, %c0_101, %c0_102, %c0_103] : memref<1x8x8x64xf32, #tpu.memory_space<vmem>>, vector<1x8x8x64xf32>
    %112 = vector.shape_cast %111 : vector<1x8x8x64xf32> to vector<8x8x64xf32>
    %113 = vector.shape_cast %110 : vector<8x8x64xf32> to vector<1x8x8x64xf32>
    tpu.vector_store %arg6[%c0_100, %c0_101, %c0_102, %c0_103], %113 {strides = array<i32>} : memref<1x8x8x64xf32, #tpu.memory_space<vmem>>, vector<1x8x8x64xf32>,
    %c0_104 = arith.constant 0 : index
    %c0_105 = arith.constant 0 : index
    %c0_106 = arith.constant 0 : index
    %c0_107 = arith.constant 0 : index
    %114 = vector.load %arg7[%c0_104, %c0_105, %c0_106, %c0_107] : memref<1x8x8x64xi32, #tpu.memory_space<vmem>>, vector<1x8x8x64xi32>
    %115 = vector.shape_cast %114 : vector<1x8x8x64xi32> to vector<8x8x64xi32>
    %116 = vector.shape_cast %109 : vector<8x8x64xi32> to vector<1x8x8x64xi32>
    tpu.vector_store %arg7[%c0_104, %c0_105, %c0_106, %c0_107], %116 {strides = array<i32>} : memref<1x8x8x64xi32, #tpu.memory_space<vmem>>, vector<1x8x8x64xi32>,
    return
  }
  func.func @transform_0(%arg0: i32) -> (i32, i32, i32, i32) {
    %c0_i32 = arith.constant 0 : i32
    %c0_i32_0 = arith.constant 0 : i32
    %c0_i32_1 = arith.constant 0 : i32
    %c0_i32_2 = arith.constant 0 : i32
    return %arg0, %c0_i32, %c0_i32_0, %c0_i32_1 : i32, i32, i32, i32
  }
  func.func @transform_1(%arg0: i32) -> (i32, i32) {
    %c0_i32 = arith.constant 0 : i32
    %c0_i32_0 = arith.constant 0 : i32
    %c0_i32_1 = arith.constant 0 : i32
    return %c0_i32, %c0_i32_0 : i32, i32
  }
  func.func @transform_2(%arg0: i32) -> (i32, i32) {
    %c0_i32 = arith.constant 0 : i32
    %c0_i32_0 = arith.constant 0 : i32
    %c0_i32_1 = arith.constant 0 : i32
    return %c0_i32, %c0_i32_0 : i32, i32
  }
  func.func @transform_3(%arg0: i32) -> (i32, i32, i32) {
    %c0_i32 = arith.constant 0 : i32
    %c0_i32_0 = arith.constant 0 : i32
    %c0_i32_1 = arith.constant 0 : i32
    %c0_i32_2 = arith.constant 0 : i32
    return %c0_i32, %c0_i32_0, %c0_i32_1 : i32, i32, i32
  }
  func.func @transform_4(%arg0: i32) -> (i32, i32) {
    %c0_i32 = arith.constant 0 : i32
    %c0_i32_0 = arith.constant 0 : i32
    %c0_i32_1 = arith.constant 0 : i32
    return %c0_i32, %c0_i32_0 : i32, i32
  }
  func.func @transform_5(%arg0: i32) -> (i32, i32, i32, i32) {
    %c0_i32 = arith.constant 0 : i32
    %c0_i32_0 = arith.constant 0 : i32
    %c0_i32_1 = arith.constant 0 : i32
    %c0_i32_2 = arith.constant 0 : i32
    return %arg0, %c0_i32, %c0_i32_0, %c0_i32_1 : i32, i32, i32, i32
  }
  func.func @transform_6(%arg0: i32) -> (i32, i32, i32, i32) {
    %c0_i32 = arith.constant 0 : i32
    %c0_i32_0 = arith.constant 0 : i32
    %c0_i32_1 = arith.constant 0 : i32
    %c0_i32_2 = arith.constant 0 : i32
    return %arg0, %c0_i32, %c0_i32_0, %c0_i32_1 : i32, i32, i32, i32
  }
}

</mosaic_0001>

<llo_original>
// kernel: tpu_custom_call.1
$region0: #{tpu_custom_call.1}
  #allocation0 [shape = 'u32[]', space=smem, size = 0x4, offset = 0x4, fixed_abs, tag = 'smem constant byte address 0x4 - core index']
  #allocation1 [shape = 'u32[144,128]{1,0:T(1,128)}', space=vmem, size = 0x12000, scoped, tag = 'internal scratch']
  #allocation2 [shape = 'bf16[18,32,64]{2,1,0:T(8,128)(2,1)}', space=vmem, size = 0x24000, scoped, tag = 'scratch operand']
  #allocation3 [shape = 'f32[16,16,64]{2,1,0:T(8,128)}', space=vmem, size = 0x20000, scoped, tag = 'scratch operand']
  %s0 = inlined_call_operand.hbm [shape: bf16[2,16,16,32], index: 0, kind: input, shape index: {}]
  %s1 = inlined_call_operand.hbm [shape: bf16[32,64], index: 1, kind: input, shape index: {}]
  %s2 = inlined_call_operand.vmem [shape: f32[1,64], index: 2, kind: input, shape index: {}]
  %s3 = inlined_call_operand.hbm [shape: bf16[9,64,64], index: 3, kind: input, shape index: {}]
  %s4 = inlined_call_operand.vmem [shape: f32[1,64], index: 4, kind: input, shape index: {}]
  %s5 = inlined_call_operand.hbm [shape: f32[2,8,8,64], index: 5, kind: output, shape index: {0}]
  %s6 = inlined_call_operand.hbm [shape: s32[2,8,8,64], index: 6, kind: output, shape index: {1}]
  %7 = xla_tuple %s5, %s6
  %s8 = sld [smem:[#allocation0]]
  $region73: #{tpu_custom_call.1} parent=0
    _
  %s10 = ssub.s32 1, %s8
  %s11 = scalar_select 0, %s10, %s8
  $region1: #{tpu_custom_call.1} parent=0
    #allocation4 [shape = 'u8[131072]{0}', space=vmem, size = 0x20000, scoped, tag = 'input window, operand 0']
    #allocation5 [shape = 's32[2]{0}', space=sflag, size = 0x8, scoped, tag = 'scoped memory for tpu_custom_call.1']
    #allocation6 [shape = 's32[2]{0}', space=sflag, size = 0x8, scoped, tag = 'scoped memory for tpu_custom_call.1']
    #allocation7 [shape = 'u8[8192]{0}', space=vmem, size = 0x2000, scoped, tag = 'input window, operand 1, single buffered']
    #allocation8 [shape = 's32[1]{0}', space=sflag, size = 0x4, scoped, tag = 'scoped memory for tpu_custom_call.1']
    #allocation9 [shape = 'u8[147456]{0}', space=vmem, size = 0x24000, scoped, tag = 'input window, operand 3, single buffered']
    #allocation10 [shape = 'u8[65536]{0}', space=vmem, size = 0x10000, scoped, tag = 'output window, operand 0']
    #allocation11 [shape = 'u8[65536]{0}', space=vmem, size = 0x10000, scoped, tag = 'output window, operand 1']
    #allocation12 [shape = 's32[2]{0}', space=sflag, size = 0x8, scoped, tag = 'scoped memory for tpu_custom_call.1']
    %12 = vsyncpa [#allocation5], 0
    %s13 = scalar_lea.sflag [#allocation5], 1
    %14 = vsyncpa %s13, 0
    %15 = vsyncpa [#allocation8], 0
    %16 = vsyncpa [#allocation6], 0
    %s17 = scalar_lea.sflag [#allocation6], 1
    %18 = vsyncpa %s17, 0
    %19 = vsyncpa [#allocation12], 0
    %s20 = scalar_lea.sflag [#allocation12], 1
    %21 = vsyncpa %s20, 0
    loop: start=0, step=1, limit=4
    $region2: #{tpu_custom_call.1} parent=1 // loop_pre_header
      _
    $region3: #{tpu_custom_call.1} parent=1 // loop_header
      %s23 = sphi 0, %s27
      %p24 = scmp.ge.s32.totalorder %s23, 4
      %s33 = sphi 0, %s35
      %s36 = sphi 0, %s33
      %s37 = sphi 0, %s36
      %s53 = sphi 0, %s37
      %s57 = sphi 0, %s57
      %s59 = sphi 0, %s57
      %s60 = sphi 0, %s59
      %s74 = sphi 0, %s60
      %s78 = sphi 0, %s78
      %s80 = sphi 0, %s78
      %s81 = sphi 0, %s80
      %s95 = sphi 0, %s81
      %s99 = sphi 0, %s99
      %s101 = sphi 0, %s99
      %s102 = sphi 0, %s101
      %s116 = sphi 0, %s102
      %s120 = sphi 0, %s120
      %s122 = sphi 0, %s120
      %s123 = sphi 0, %s122
      %s137 = sphi 0, %s123
      %s143 = sphi 0, %s145
      %s146 = sphi 0, %s143
      %s147 = sphi 0, %s146
      %s163 = sphi 0, %s147
      %s169 = sphi 0, %s171
      %s172 = sphi 0, %s169
      %s173 = sphi 0, %s172
      %s189 = sphi 0, %s173
    $region4: #{tpu_custom_call.1} parent=1 // loop_header_branch
      %26 = sbr.rel (%p24) target = $region8
    $region5: #{tpu_custom_call.1} parent=1 // loop_body
      %s28 = ssub.s32 %s23, 1
      %s29 = ssub.s32 %s23, 2
      %s30 = sadd.s32 %s23, 1
      %s31 = ssub.s32 %s23, %s30
      %p32 = scmp.eq.s32.totalorder %s31, 0
      %s34 = sadd.s32 %s33, 1
      %s35 = scalar_select %p32, %s33, %s34
      %p38 = pneg %p32
      %p39 = scmp.eq.s32.totalorder %s23, 1
      %p40 = por %p38, %p39
      %p41 = scmp.ne.s32.totalorder %s33, %s36
      %p42 = scmp.eq.s32.totalorder %s23, 0
      %p43 = por %p41, %p42
      %p44 = scmp.ne.s32.totalorder %s33, %s36
      %p45 = scmp.eq.s32.totalorder %s28, 1
      %p46 = por %p44, %p45
      %p47 = scmp.ne.s32.totalorder %s36, %s37
      %p48 = scmp.eq.s32.totalorder %s28, 0
      %p49 = por %p47, %p48
      %p50 = scmp.ne.s32.totalorder %s36, %s37
      %p51 = scmp.eq.s32.totalorder %s29, 1
      %p52 = por %p50, %p51
      %p54 = scmp.ne.s32.totalorder %s37, %s53
      %p55 = scmp.eq.s32.totalorder %s29, 0
      %p56 = por %p54, %p55
      %s58 = sadd.s32 %s57, 1
      %p61 = scmp.eq.s32.totalorder %s23, 1
      %p62 = scmp.ne.s32.totalorder %s57, %s59
      %p63 = scmp.eq.s32.totalorder %s23, 0
      %p64 = por %p62, %p63
      %p65 = scmp.ne.s32.totalorder %s57, %s59
      %p66 = scmp.eq.s32.totalorder %s28, 1
      %p67 = por %p65, %p66
      %p68 = scmp.ne.s32.totalorder %s59, %s60
      %p69 = scmp.eq.s32.totalorder %s28, 0
      %p70 = por %p68, %p69
      %p71 = scmp.ne.s32.totalorder %s59, %s60
      %p72 = scmp.eq.s32.totalorder %s29, 1
      %p73 = por %p71, %p72
      %p75 = scmp.ne.s32.totalorder %s60, %s74
      %p76 = scmp.eq.s32.totalorder %s29, 0
      %p77 = por %p75, %p76
      %s79 = sadd.s32 %s78, 1
      %p82 = scmp.eq.s32.totalorder %s23, 1
      %p83 = scmp.ne.s32.totalorder %s78, %s80
      %p84 = scmp.eq.s32.totalorder %s23, 0
      %p85 = por %p83, %p84
      %p86 = scmp.ne.s32.totalorder %s78, %s80
      %p87 = scmp.eq.s32.totalorder %s28, 1
      %p88 = por %p86, %p87
      %p89 = scmp.ne.s32.totalorder %s80, %s81
      %p90 = scmp.eq.s32.totalorder %s28, 0
      %p91 = por %p89, %p90
      %p92 = scmp.ne.s32.totalorder %s80, %s81
      %p93 = scmp.eq.s32.totalorder %s29, 1
      %p94 = por %p92, %p93
      %p96 = scmp.ne.s32.totalorder %s81, %s95
      %p97 = scmp.eq.s32.totalorder %s29, 0
      %p98 = por %p96, %p97
      %s100 = sadd.s32 %s99, 1
      %p103 = scmp.eq.s32.totalorder %s23, 1
      %p104 = scmp.ne.s32.totalorder %s99, %s101
      %p105 = scmp.eq.s32.totalorder %s23, 0
      %p106 = por %p104, %p105
      %p107 = scmp.ne.s32.totalorder %s99, %s101
      %p108 = scmp.eq.s32.totalorder %s28, 1
      %p109 = por %p107, %p108
      %p110 = scmp.ne.s32.totalorder %s101, %s102
      %p111 = scmp.eq.s32.totalorder %s28, 0
      %p112 = por %p110, %p111
      %p113 = scmp.ne.s32.totalorder %s101, %s102
      %p114 = scmp.eq.s32.totalorder %s29, 1
      %p115 = por %p113, %p114
      %p117 = scmp.ne.s32.totalorder %s102, %s116
      %p118 = scmp.eq.s32.totalorder %s29, 0
      %p119 = por %p117, %p118
      %s121 = sadd.s32 %s120, 1
      %p124 = scmp.eq.s32.totalorder %s23, 1
      %p125 = scmp.ne.s32.totalorder %s120, %s122
      %p126 = scmp.eq.s32.totalorder %s23, 0
      %p127 = por %p125, %p126
      %p128 = scmp.ne.s32.totalorder %s120, %s122
      %p129 = scmp.eq.s32.totalorder %s28, 1
      %p130 = por %p128, %p129
      %p131 = scmp.ne.s32.totalorder %s122, %s123
      %p132 = scmp.eq.s32.totalorder %s28, 0
      %p133 = por %p131, %p132
      %p134 = scmp.ne.s32.totalorder %s122, %s123
      %p135 = scmp.eq.s32.totalorder %s29, 1
      %p136 = por %p134, %p135
      %p138 = scmp.ne.s32.totalorder %s123, %s137
      %p139 = scmp.eq.s32.totalorder %s29, 0
      %p140 = por %p138, %p139
      %s141 = ssub.s32 %s23, %s30
      %p142 = scmp.eq.s32.totalorder %s141, 0
      %s144 = sadd.s32 %s143, 1
      %s145 = scalar_select %p142, %s143, %s144
      %p148 = pneg %p142
      %p149 = scmp.eq.s32.totalorder %s23, 1
      %p150 = por %p148, %p149
      %p151 = scmp.ne.s32.totalorder %s143, %s146
      %p152 = scmp.eq.s32.totalorder %s23, 0
      %p153 = por %p151, %p152
      %p154 = scmp.ne.s32.totalorder %s143, %s146
      %p155 = scmp.eq.s32.totalorder %s28, 1
      %p156 = por %p154, %p155
      %p157 = scmp.ne.s32.totalorder %s146, %s147
      %p158 = scmp.eq.s32.totalorder %s28, 0
      %p159 = por %p157, %p158
      %p160 = scmp.ne.s32.totalorder %s146, %s147
      %p161 = scmp.eq.s32.totalorder %s29, 1
      %p162 = por %p160, %p161
      %p164 = scmp.ne.s32.totalorder %s147, %s163
      %p165 = scmp.eq.s32.totalorder %s29, 0
      %p166 = por %p164, %p165
      %s167 = ssub.s32 %s23, %s30
      %p168 = scmp.eq.s32.totalorder %s167, 0
      %s170 = sadd.s32 %s169, 1
      %s171 = scalar_select %p168, %s169, %s170
      %p174 = pneg %p168
      %p175 = scmp.eq.s32.totalorder %s23, 1
      %p176 = por %p174, %p175
      %p177 = scmp.ne.s32.totalorder %s169, %s172
      %p178 = scmp.eq.s32.totalorder %s23, 0
      %p179 = por %p177, %p178
      %p180 = scmp.ne.s32.totalorder %s169, %s172
      %p181 = scmp.eq.s32.totalorder %s28, 1
      %p182 = por %p180, %p181
      %p183 = scmp.ne.s32.totalorder %s172, %s173
      %p184 = scmp.eq.s32.totalorder %s28, 0
      %p185 = por %p183, %p184
      %p186 = scmp.ne.s32.totalorder %s172, %s173
      %p187 = scmp.eq.s32.totalorder %s29, 1
      %p188 = por %p186, %p187
      %p190 = scmp.ne.s32.totalorder %s173, %s189
      %p191 = scmp.eq.s32.totalorder %s29, 0
      %p192 = por %p190, %p191
      %p193 = scmp.le.s32.totalorder 1, %s23
      %p194 = scmp.lt.s32.totalorder %s23, 3
      %p195 = pnand %p193, %p194
      %p196 = pneg %p195
      // Predicated region
      $region9: #{tpu_custom_call.1} parent=5 // pred_check
        _
      $region10: #{tpu_custom_call.1} parent=5 // pred_check_branch
        %198 = sbr.rel (%p195) target = $region12
      $region11: #{tpu_custom_call.1} parent=5 // pred_region
        %s199 = ssub.s32 %s23, 1
        // Predicated region
        $region13: #{tpu_custom_call.1} parent=11 // pred_check
          %p200 = pneg %p70
        $region14: #{tpu_custom_call.1} parent=11 // pred_check_branch
          %202 = sbr.rel (%p200) target = $region16
        $region15: #{tpu_custom_call.1} parent=11 // pred_region
          %s204 = ssub.s32 256, 256
          %205 = vsyncadd [#allocation8], %s204
          %s206 = sshll.u32 [#allocation7], 4
          %s207 = int_to_ptr.vmem [resolvable:$true] %s206
          %212 = dma.hbm_to_vmem [thread:$0]  %s1, 256, %s207, [#allocation8], 64, 64, 4
        $region16: #{tpu_custom_call.1} parent=11 // pred_fallthru
          _
        // Predicated region
        $region17: #{tpu_custom_call.1} parent=11 // pred_check
          %p213 = pneg %p91
        $region18: #{tpu_custom_call.1} parent=11 // pred_check_branch
          %215 = sbr.rel (%p213) target = $region20
        $region19: #{tpu_custom_call.1} parent=11 // pred_region
          _
        $region20: #{tpu_custom_call.1} parent=11 // pred_fallthru
          _
        // Predicated region
        $region21: #{tpu_custom_call.1} parent=11 // pred_check
          %p216 = pneg %p112
        $region22: #{tpu_custom_call.1} parent=11 // pred_check_branch
          %218 = sbr.rel (%p216) target = $region24
        $region23: #{tpu_custom_call.1} parent=11 // pred_region
          %s220 = ssub.s32 4608, 4608
          %221 = vsyncadd [#allocation8], %s220
          %s222 = sshll.u32 [#allocation9], 4
          %s223 = int_to_ptr.vmem [resolvable:$true] %s222
          %228 = dma.hbm_to_vmem [thread:$0]  %s3, 4608, %s223, [#allocation8], 64, 64, 4
        $region24: #{tpu_custom_call.1} parent=11 // pred_fallthru
          _
        // Predicated region
        $region25: #{tpu_custom_call.1} parent=11 // pred_check
          %p229 = pneg %p133
        $region26: #{tpu_custom_call.1} parent=11 // pred_check_branch
          %231 = sbr.rel (%p229) target = $region28
        $region27: #{tpu_custom_call.1} parent=11 // pred_region
          _
        $region28: #{tpu_custom_call.1} parent=11 // pred_fallthru
          _
      $region12: #{tpu_custom_call.1} parent=5 // pred_fallthru
        _
      %p232 = scmp.lt.s32.totalorder %s23, 2
      // Predicated region
      $region29: #{tpu_custom_call.1} parent=5 // pred_check
        %p233 = pneg %p232
      $region30: #{tpu_custom_call.1} parent=5 // pred_check_branch
        %235 = sbr.rel (%p233) target = $region32
      $region31: #{tpu_custom_call.1} parent=5 // pred_region
        // Predicated region
        $region33: #{tpu_custom_call.1} parent=31 // pred_check
          %p236 = pneg %p43
        $region34: #{tpu_custom_call.1} parent=31 // pred_check_branch
          %238 = sbr.rel (%p236) target = $region36
        $region35: #{tpu_custom_call.1} parent=31 // pred_region
          %s239 = sand.u32 %s33, 1
          %s240 = scalar_lea.sflag [#allocation5], %s239
          %s241 = sand.u32 %s33, 1
          %s242 = smul.addr %s241, 128
          %s243 = scalar_lea.vmem [#allocation4], %s242
          %s245 = ssub.s32 2048, 2048
          %246 = vsyncadd %s240, %s245
          %s247 = smul.addr %s23, 32
          %s248 = smul.addr %s247, 64
          %s249 = scalar_lea.hbm %s0, %s248
          %s250 = sshll.u32 %s243, 4
          %s251 = int_to_ptr.vmem [resolvable:$true] %s250
          %256 = dma.hbm_to_vmem [thread:$0]  %s249, 2048, %s251, %s240, 64, 64, 4
        $region36: #{tpu_custom_call.1} parent=31 // pred_fallthru
          _
      $region32: #{tpu_custom_call.1} parent=5 // pred_fallthru
        _
      %p257 = scmp.le.s32.totalorder 1, %s23
      %p258 = scmp.lt.s32.totalorder %s23, 3
      %p259 = pnand %p257, %p258
      %p260 = pneg %p259
      // Predicated region
      $region37: #{tpu_custom_call.1} parent=5 // pred_check
        _
      $region38: #{tpu_custom_call.1} parent=5 // pred_check_branch
        %262 = sbr.rel (%p259) target = $region40
      $region39: #{tpu_custom_call.1} parent=5 // pred_region
        %s263 = ssub.s32 %s23, 1
        %s264 = sand.u32 %s36, 1
        %s265 = scalar_lea.sflag [#allocation5], %s264
        %s266 = sand.u32 %s36, 1
        %s267 = smul.addr %s266, 128
        %s268 = scalar_lea.vmem [#allocation4], %s267
        // Predicated region
        $region41: #{tpu_custom_call.1} parent=39 // pred_check
          %p269 = pneg %p49
        $region42: #{tpu_custom_call.1} parent=39 // pred_check_branch
          %271 = sbr.rel (%p269) target = $region44
        $region43: #{tpu_custom_call.1} parent=39 // pred_region
          %272 = dma.done %s265, 2048
        $region44: #{tpu_custom_call.1} parent=39 // pred_fallthru
          _
        // Predicated region
        $region45: #{tpu_custom_call.1} parent=39 // pred_check
          %p273 = pneg %p70
        $region46: #{tpu_custom_call.1} parent=39 // pred_check_branch
          %275 = sbr.rel (%p273) target = $region48
        $region47: #{tpu_custom_call.1} parent=39 // pred_region
          %276 = dma.done [#allocation8], 256
        $region48: #{tpu_custom_call.1} parent=39 // pred_fallthru
          _
        // Predicated region
        $region49: #{tpu_custom_call.1} parent=39 // pred_check
          %p277 = pneg %p112
        $region50: #{tpu_custom_call.1} parent=39 // pred_check_branch
          %279 = sbr.rel (%p277) target = $region52
        $region51: #{tpu_custom_call.1} parent=39 // pred_region
          %280 = dma.done [#allocation8], 4608
        $region52: #{tpu_custom_call.1} parent=39 // pred_fallthru
          _
        %s281 = sand.u32 %s36, 1
        %s282 = scalar_lea.sflag [#allocation5], %s281
        %s283 = sand.u32 %s36, 1
        %s284 = smul.addr %s283, 128
        %s285 = scalar_lea.vmem [#allocation4], %s284
        %p286 = pneg %p49
        %p287 = pneg %p46
        %p288 = pneg %p70
        %p289 = pneg %p67
        %p290 = pneg %p91
        %p291 = pneg %p88
        %p292 = pneg %p112
        %p293 = pneg %p109
        %p294 = pneg %p133
        %p295 = pneg %p130
        %p296 = pneg %p159
        %p297 = pneg %p156
        %s298 = sand.u32 %s146, 1
        %s299 = scalar_lea.sflag [#allocation6], %s298
        %s300 = sand.u32 %s146, 1
        %s301 = smul.addr %s300, 64
        %s302 = scalar_lea.vmem [#allocation10], %s301
        %p303 = pneg %p185
        %p304 = pneg %p182
        %s305 = sand.u32 %s172, 1
        %s306 = scalar_lea.sflag [#allocation12], %s305
        %s307 = sand.u32 %s172, 1
        %s308 = smul.addr %s307, 64
        %s309 = scalar_lea.vmem [#allocation11], %s308
        %v311 = vld [vmem:[%s268] sm:$0xf]
        %v312 = vld [vmem:[%s268 + $0x4] sm:$0xf]
        %v313 = vld [vmem:[%s268 + $0x8] sm:$0xf]
        %v314 = vld [vmem:[%s268 + $0xc] sm:$0xf]
        %v315 = vld [vmem:[%s268 + $0x10] sm:$0xf]
        %v316 = vld [vmem:[%s268 + $0x14] sm:$0xf]
        %v317 = vld [vmem:[%s268 + $0x18] sm:$0xf]
        %v318 = vld [vmem:[%s268 + $0x1c] sm:$0xf]
        %v319 = vld [vmem:[%s268 + $0x20] sm:$0xf]
        %v320 = vld [vmem:[%s268 + $0x24] sm:$0xf]
        %v321 = vld [vmem:[%s268 + $0x28] sm:$0xf]
        %v322 = vld [vmem:[%s268 + $0x2c] sm:$0xf]
        %v323 = vld [vmem:[%s268 + $0x30] sm:$0xf]
        %v324 = vld [vmem:[%s268 + $0x34] sm:$0xf]
        %v325 = vld [vmem:[%s268 + $0x38] sm:$0xf]
        %v326 = vld [vmem:[%s268 + $0x3c] sm:$0xf]
        %v327 = vld [vmem:[%s268 + $0x40] sm:$0xf]
        %v328 = vld [vmem:[%s268 + $0x44] sm:$0xf]
        %v329 = vld [vmem:[%s268 + $0x48] sm:$0xf]
        %v330 = vld [vmem:[%s268 + $0x4c] sm:$0xf]
        %v331 = vld [vmem:[%s268 + $0x50] sm:$0xf]
        %v332 = vld [vmem:[%s268 + $0x54] sm:$0xf]
        %v333 = vld [vmem:[%s268 + $0x58] sm:$0xf]
        %v334 = vld [vmem:[%s268 + $0x5c] sm:$0xf]
        %v335 = vld [vmem:[%s268 + $0x60] sm:$0xf]
        %v336 = vld [vmem:[%s268 + $0x64] sm:$0xf]
        %v337 = vld [vmem:[%s268 + $0x68] sm:$0xf]
        %v338 = vld [vmem:[%s268 + $0x6c] sm:$0xf]
        %v339 = vld [vmem:[%s268 + $0x70] sm:$0xf]
        %v340 = vld [vmem:[%s268 + $0x74] sm:$0xf]
        %v341 = vld [vmem:[%s268 + $0x78] sm:$0xf]
        %v342 = vld [vmem:[%s268 + $0x7c] sm:$0xf]
        %v343 = vld [vmem:[#allocation7] sm:$0xf]
        %v344 = vld [vmem:[#allocation7 + $0x4] sm:$0xf]
        %v345 = vld [vmem:[#allocation7 + $0x8] sm:$0xf]
        %v346 = vld [vmem:[#allocation7 + $0xc] sm:$0xf]
        %v347 = vld [vmem:[%s2] sm:$0x1]
        %v349 = vlaneseq
        %v350 = vshrl.u32 %v349, 7
        %v351 = vsub.s32 0, %v350
        %v352 = vrot.slane %v347, %v351
        %v386 = vunpack.c.l.b16 %v311
        %v387 = vunpack.c.l.b16 %v312
        %v388 = vunpack.c.l.b16 %v313
        %v389 = vunpack.c.l.b16 %v314
        %v390 = vunpack.c.l.b16 %v315
        %v391 = vunpack.c.l.b16 %v316
        %v392 = vunpack.c.l.b16 %v317
        %v393 = vunpack.c.l.b16 %v318
        %v394 = vunpack.c.l.b16 %v319
        %v395 = vunpack.c.l.b16 %v320
        %v396 = vunpack.c.l.b16 %v321
        %v397 = vunpack.c.l.b16 %v322
        %v398 = vunpack.c.l.b16 %v323
        %v399 = vunpack.c.l.b16 %v324
        %v400 = vunpack.c.l.b16 %v325
        %v401 = vunpack.c.l.b16 %v326
        %v402 = vunpack.c.l.b16 %v327
        %v403 = vunpack.c.l.b16 %v328
        %v404 = vunpack.c.l.b16 %v329
        %v405 = vunpack.c.l.b16 %v330
        %v406 = vunpack.c.l.b16 %v331
        %v407 = vunpack.c.l.b16 %v332
        %v408 = vunpack.c.l.b16 %v333
        %v409 = vunpack.c.l.b16 %v334
        %v410 = vunpack.c.l.b16 %v335
        %v411 = vunpack.c.l.b16 %v336
        %v412 = vunpack.c.l.b16 %v337
        %v413 = vunpack.c.l.b16 %v338
        %v414 = vunpack.c.l.b16 %v339
        %v415 = vunpack.c.l.b16 %v340
        %v416 = vunpack.c.l.b16 %v341
        %v417 = vunpack.c.l.b16 %v342
        %v418 = vpack.c.b16 %v387, %v386
        %v419 = vpack.c.b16 %v389, %v388
        %v420 = vpack.c.b16 %v391, %v390
        %v421 = vpack.c.b16 %v393, %v392
        %v422 = vpack.c.b16 %v395, %v394
        %v423 = vpack.c.b16 %v397, %v396
        %v424 = vpack.c.b16 %v399, %v398
        %v425 = vpack.c.b16 %v401, %v400
        %v426 = vpack.c.b16 %v403, %v402
        %v427 = vpack.c.b16 %v405, %v404
        %v428 = vpack.c.b16 %v407, %v406
        %v429 = vpack.c.b16 %v409, %v408
        %v430 = vpack.c.b16 %v411, %v410
        %v431 = vpack.c.b16 %v413, %v412
        %v432 = vpack.c.b16 %v415, %v414
        %v433 = vpack.c.b16 %v417, %v416
        %v438 = vunpack.c.l.b16 %v343
        %v439 = vunpack.c.l.b16 %v344
        %v440 = vunpack.c.l.b16 %v345
        %v441 = vunpack.c.l.b16 %v346
        %v442 = vpack.c.b16 %v439, %v438
        %v443 = vpack.c.b16 %v441, %v440
        %vm446 = vcmask 261120
        %v448 = vsel %vm446, %v418, 0
        %v451 = vsel %vm446, %v419, 0
        %v454 = vsel %vm446, %v420, 0
        %v457 = vsel %vm446, %v421, 0
        %v460 = vsel %vm446, %v422, 0
        %v463 = vsel %vm446, %v423, 0
        %v466 = vsel %vm446, %v424, 0
        %v469 = vsel %vm446, %v425, 0
        %v472 = vsel %vm446, %v426, 0
        %v475 = vsel %vm446, %v427, 0
        %v478 = vsel %vm446, %v428, 0
        %v481 = vsel %vm446, %v429, 0
        %v484 = vsel %vm446, %v430, 0
        %v487 = vsel %vm446, %v431, 0
        %v490 = vsel %vm446, %v432, 0
        %v493 = vsel %vm446, %v433, 0
        %495 = vmatprep.subr.bf16.mxu0 0
        %496 = vmatpush1.bf16.msra.mxu0 0
        %497 = vmatprep.subr.bf16.mxu0 0
        %498 = vmatpush1.bf16.msra.mxu0 0
        %499 = vmatprep.subr.bf16.mxu0 0
        %500 = vmatpush1.bf16.msra.mxu0 0
        %501 = vmatprep.subr.bf16.mxu0 0
        %502 = vmatpush1.bf16.msra.mxu0 0
        %503 = vmatprep.subr.bf16.mxu0 0
        %504 = vmatpush1.bf16.msra.mxu0 0
        %505 = vmatprep.subr.bf16.mxu0 0
        %506 = vmatpush1.bf16.msra.mxu0 0
        %507 = vmatprep.subr.bf16.mxu0 0
        %508 = vmatpush1.bf16.msra.mxu0 %v443
        %509 = vmatprep.subr.bf16.mxu0 0
        %510 = vmatpush1.bf16.msra.mxu0 %v442
        %511 = vmatprep.subr.bf16.mxu0 0
        %512 = vmatpush2.bf16.msra.mxu0 0
        %513 = vmatprep.subr.bf16.mxu0 0
        %514 = vmatpush2.bf16.msra.mxu0 0
        %515 = vmatprep.subr.bf16.mxu0 0
        %516 = vmatpush2.bf16.msra.mxu0 0
        %517 = vmatprep.subr.bf16.mxu0 0
        %518 = vmatpush2.bf16.msra.mxu0 0
        %519 = vmatprep.subr.bf16.mxu0 0
        %520 = vmatpush2.bf16.msra.mxu0 0
        %521 = vmatprep.subr.bf16.mxu0 0
        %522 = vmatpush2.bf16.msra.mxu0 0
        %523 = vmatprep.subr.bf16.mxu0 0
        %524 = vmatpush2.bf16.msra.mxu0 0
        %525 = vmatprep.subr.bf16.mxu0 0
        %526 = vmatpush2.bf16.msra.mxu0 0
        %527 = vmatprep.mubr.bf16.mxu0 0
        %528 = vmatmul.mubr.bf16.gmra.mxu0 %v448
        %v529 = vpop.f32.mrf.mxu0
        %v530 = vadd.f32 %v352, %v529
        %v531 = vpop.f32.mrf.mxu0
        %v532 = vpop.f32.mrf.mxu0
        %v533 = vadd.f32 %v352, %v532
        %v534 = vpop.f32.mrf.mxu0
        %535 = vmatprep.mubr.bf16.mxu0 0
        %536 = vmatmul.mubr.bf16.gmra.mxu0 %v451
        %v537 = vpop.f32.mrf.mxu0
        %v538 = vadd.f32 %v352, %v537
        %v539 = vpop.f32.mrf.mxu0
        %v540 = vpop.f32.mrf.mxu0
        %v541 = vadd.f32 %v352, %v540
        %v542 = vpop.f32.mrf.mxu0
        %543 = vmatprep.mubr.bf16.mxu0 0
        %544 = vmatmul.mubr.bf16.gmra.mxu0 %v454
        %v545 = vpop.f32.mrf.mxu0
        %v546 = vadd.f32 %v352, %v545
        %v547 = vpop.f32.mrf.mxu0
        %v548 = vpop.f32.mrf.mxu0
        %v549 = vadd.f32 %v352, %v548
        %v550 = vpop.f32.mrf.mxu0
        %551 = vmatprep.mubr.bf16.mxu0 0
        %552 = vmatmul.mubr.bf16.gmra.mxu0 %v457
        %v553 = vpop.f32.mrf.mxu0
        %v554 = vadd.f32 %v352, %v553
        %v555 = vpop.f32.mrf.mxu0
        %v556 = vpop.f32.mrf.mxu0
        %v557 = vadd.f32 %v352, %v556
        %v558 = vpop.f32.mrf.mxu0
        %559 = vmatprep.mubr.bf16.mxu0 0
        %560 = vmatmul.mubr.bf16.gmra.mxu0 %v460
        %v561 = vpop.f32.mrf.mxu0
        %v562 = vadd.f32 %v352, %v561
        %v563 = vpop.f32.mrf.mxu0
        %v564 = vpop.f32.mrf.mxu0
        %v565 = vadd.f32 %v352, %v564
        %v566 = vpop.f32.mrf.mxu0
        %567 = vmatprep.mubr.bf16.mxu0 0
        %568 = vmatmul.mubr.bf16.gmra.mxu0 %v463
        %v569 = vpop.f32.mrf.mxu0
        %v570 = vadd.f32 %v352, %v569
        %v571 = vpop.f32.mrf.mxu0
        %v572 = vpop.f32.mrf.mxu0
        %v573 = vadd.f32 %v352, %v572
        %v574 = vpop.f32.mrf.mxu0
        %575 = vmatprep.mubr.bf16.mxu0 0
        %576 = vmatmul.mubr.bf16.gmra.mxu0 %v466
        %v577 = vpop.f32.mrf.mxu0
        %v578 = vadd.f32 %v352, %v577
        %v579 = vpop.f32.mrf.mxu0
        %v580 = vpop.f32.mrf.mxu0
        %v581 = vadd.f32 %v352, %v580
        %v582 = vpop.f32.mrf.mxu0
        %583 = vmatprep.mubr.bf16.mxu0 0
        %584 = vmatmul.mubr.bf16.gmra.mxu0 %v469
        %v585 = vpop.f32.mrf.mxu0
        %v586 = vadd.f32 %v352, %v585
        %v587 = vpop.f32.mrf.mxu0
        %v588 = vpop.f32.mrf.mxu0
        %v589 = vadd.f32 %v352, %v588
        %v590 = vpop.f32.mrf.mxu0
        %591 = vmatprep.mubr.bf16.mxu0 0
        %592 = vmatmul.mubr.bf16.gmra.mxu0 %v472
        %v593 = vpop.f32.mrf.mxu0
        %v594 = vadd.f32 %v352, %v593
        %v595 = vpop.f32.mrf.mxu0
        %v596 = vpop.f32.mrf.mxu0
        %v597 = vadd.f32 %v352, %v596
        %v598 = vpop.f32.mrf.mxu0
        %599 = vmatprep.mubr.bf16.mxu0 0
        %600 = vmatmul.mubr.bf16.gmra.mxu0 %v475
        %v601 = vpop.f32.mrf.mxu0
        %v602 = vadd.f32 %v352, %v601
        %v603 = vpop.f32.mrf.mxu0
        %v604 = vpop.f32.mrf.mxu0
        %v605 = vadd.f32 %v352, %v604
        %v606 = vpop.f32.mrf.mxu0
        %607 = vmatprep.mubr.bf16.mxu0 0
        %608 = vmatmul.mubr.bf16.gmra.mxu0 %v478
        %v609 = vpop.f32.mrf.mxu0
        %v610 = vadd.f32 %v352, %v609
        %v611 = vpop.f32.mrf.mxu0
        %v612 = vpop.f32.mrf.mxu0
        %v613 = vadd.f32 %v352, %v612
        %v614 = vpop.f32.mrf.mxu0
        %615 = vmatprep.mubr.bf16.mxu0 0
        %616 = vmatmul.mubr.bf16.gmra.mxu0 %v481
        %v617 = vpop.f32.mrf.mxu0
        %v618 = vadd.f32 %v352, %v617
        %v619 = vpop.f32.mrf.mxu0
        %v620 = vpop.f32.mrf.mxu0
        %v621 = vadd.f32 %v352, %v620
        %v622 = vpop.f32.mrf.mxu0
        %623 = vmatprep.mubr.bf16.mxu0 0
        %624 = vmatmul.mubr.bf16.gmra.mxu0 %v484
        %v625 = vpop.f32.mrf.mxu0
        %v626 = vadd.f32 %v352, %v625
        %v627 = vpop.f32.mrf.mxu0
        %v628 = vpop.f32.mrf.mxu0
        %v629 = vadd.f32 %v352, %v628
        %v630 = vpop.f32.mrf.mxu0
        %631 = vmatprep.mubr.bf16.mxu0 0
        %632 = vmatmul.mubr.bf16.gmra.mxu0 %v487
        %v633 = vpop.f32.mrf.mxu0
        %v634 = vadd.f32 %v352, %v633
        %v635 = vpop.f32.mrf.mxu0
        %v636 = vpop.f32.mrf.mxu0
        %v637 = vadd.f32 %v352, %v636
        %v638 = vpop.f32.mrf.mxu0
        %639 = vmatprep.mubr.bf16.mxu0 0
        %640 = vmatmul.mubr.bf16.gmra.mxu0 %v490
        %v641 = vpop.f32.mrf.mxu0
        %v642 = vadd.f32 %v352, %v641
        %v643 = vpop.f32.mrf.mxu0
        %v644 = vpop.f32.mrf.mxu0
        %v645 = vadd.f32 %v352, %v644
        %v646 = vpop.f32.mrf.mxu0
        %647 = vmatprep.mubr.bf16.mxu0 0
        %648 = vmatmul.mubr.bf16.gmra.mxu0 %v493
        %v649 = vpop.f32.mrf.mxu0
        %v650 = vadd.f32 %v352, %v649
        %v651 = vpop.f32.mrf.mxu0
        %v652 = vpop.f32.mrf.mxu0
        %v653 = vadd.f32 %v352, %v652
        %v654 = vpop.f32.mrf.mxu0
        %655 = vdwg.mxu0
        %v656 = vmax.f32 %v530, 0.0
        %v657 = vmax.f32 %v533, 0.0
        %v658 = vmax.f32 %v538, 0.0
        %v659 = vmax.f32 %v541, 0.0
        %v660 = vmax.f32 %v546, 0.0
        %v661 = vmax.f32 %v549, 0.0
        %v662 = vmax.f32 %v554, 0.0
        %v663 = vmax.f32 %v557, 0.0
        %v664 = vmax.f32 %v562, 0.0
        %v665 = vmax.f32 %v565, 0.0
        %v666 = vmax.f32 %v570, 0.0
        %v667 = vmax.f32 %v573, 0.0
        %v668 = vmax.f32 %v578, 0.0
        %v669 = vmax.f32 %v581, 0.0
        %v670 = vmax.f32 %v586, 0.0
        %v671 = vmax.f32 %v589, 0.0
        %v672 = vmax.f32 %v594, 0.0
        %v673 = vmax.f32 %v597, 0.0
        %v674 = vmax.f32 %v602, 0.0
        %v675 = vmax.f32 %v605, 0.0
        %v676 = vmax.f32 %v610, 0.0
        %v677 = vmax.f32 %v613, 0.0
        %v678 = vmax.f32 %v618, 0.0
        %v679 = vmax.f32 %v621, 0.0
        %v680 = vmax.f32 %v626, 0.0
        %v681 = vmax.f32 %v629, 0.0
        %v682 = vmax.f32 %v634, 0.0
        %v683 = vmax.f32 %v637, 0.0
        %v684 = vmax.f32 %v642, 0.0
        %v685 = vmax.f32 %v645, 0.0
        %v686 = vmax.f32 %v650, 0.0
        %v687 = vmax.f32 %v653, 0.0
        %v688 = vpack.c.bf16 %v657, %v656
        %v689 = vpack.c.bf16 %v659, %v658
        %v690 = vpack.c.bf16 %v661, %v660
        %v691 = vpack.c.bf16 %v663, %v662
        %v692 = vpack.c.bf16 %v665, %v664
        %v693 = vpack.c.bf16 %v667, %v666
        %v694 = vpack.c.bf16 %v669, %v668
        %v695 = vpack.c.bf16 %v671, %v670
        %v696 = vpack.c.bf16 %v673, %v672
        %v697 = vpack.c.bf16 %v675, %v674
        %v698 = vpack.c.bf16 %v677, %v676
        %v699 = vpack.c.bf16 %v679, %v678
        %v700 = vpack.c.bf16 %v681, %v680
        %v701 = vpack.c.bf16 %v683, %v682
        %v702 = vpack.c.bf16 %v685, %v684
        %v703 = vpack.c.bf16 %v687, %v686
        %vm704 = vcmask 519168
        %705 = vst.msk [vmem:[#allocation2] sm:$0xf] %vm704, 0
        %706 = vst.msk [vmem:[#allocation2 + $0x4] sm:$0xf] %vm704, 0
        %707 = vst.msk [vmem:[#allocation2 + $0x8] sm:$0xf] %vm704, 0
        %708 = vst.msk [vmem:[#allocation2 + $0xc] sm:$0xf] %vm704, 0
        %s709 = scalar_lea.vmem [#allocation2], 272
        %710 = vst.msk [vmem:[%s709] sm:$0xf] %vm704, 0
        %711 = vst.msk [vmem:[%s709 + $0x4] sm:$0xf] %vm704, 0
        %712 = vst.msk [vmem:[%s709 + $0x8] sm:$0xf] %vm704, 0
        %713 = vst.msk [vmem:[%s709 + $0xc] sm:$0xf] %vm704, 0
        %vm714 = vcmask 519171
        %vm715 = vsmask.f32 7950
        %vm716 = vmand %vm714, %vm715
        %v717 = vld [vmem:[#allocation2] sm:$0x8]
        %v718 = vsel %vm716, 0, %v717
        %719 = vst [vmem:[#allocation2] sm:$0x8] %v718
        %v720 = vld [vmem:[#allocation2 + $0x10] sm:$0x8]
        %v721 = vsel %vm716, 0, %v720
        %722 = vst [vmem:[#allocation2 + $0x10] sm:$0x8] %v721
        %v723 = vld [vmem:[#allocation2 + $0x20] sm:$0x8]
        %v724 = vsel %vm716, 0, %v723
        %725 = vst [vmem:[#allocation2 + $0x20] sm:$0x8] %v724
        %v726 = vld [vmem:[#allocation2 + $0x30] sm:$0x8]
        %v727 = vsel %vm716, 0, %v726
        %728 = vst [vmem:[#allocation2 + $0x30] sm:$0x8] %v727
        %v729 = vld [vmem:[#allocation2 + $0x40] sm:$0x8]
        %v730 = vsel %vm716, 0, %v729
        %731 = vst [vmem:[#allocation2 + $0x40] sm:$0x8] %v730
        %v732 = vld [vmem:[#allocation2 + $0x50] sm:$0x8]
        %v733 = vsel %vm716, 0, %v732
        %734 = vst [vmem:[#allocation2 + $0x50] sm:$0x8] %v733
        %v735 = vld [vmem:[#allocation2 + $0x60] sm:$0x8]
        %v736 = vsel %vm716, 0, %v735
        %737 = vst [vmem:[#allocation2 + $0x60] sm:$0x8] %v736
        %v738 = vld [vmem:[#allocation2 + $0x70] sm:$0x8]
        %v739 = vsel %vm716, 0, %v738
        %740 = vst [vmem:[#allocation2 + $0x70] sm:$0x8] %v739
        %v741 = vld [vmem:[#allocation2 + $0x80] sm:$0x8]
        %v742 = vsel %vm716, 0, %v741
        %743 = vst [vmem:[#allocation2 + $0x80] sm:$0x8] %v742
        %v744 = vld [vmem:[#allocation2 + $0x90] sm:$0x8]
        %v745 = vsel %vm716, 0, %v744
        %746 = vst [vmem:[#allocation2 + $0x90] sm:$0x8] %v745
        %v747 = vld [vmem:[#allocation2 + $0xa0] sm:$0x8]
        %v748 = vsel %vm716, 0, %v747
        %749 = vst [vmem:[#allocation2 + $0xa0] sm:$0x8] %v748
        %v750 = vld [vmem:[#allocation2 + $0xb0] sm:$0x8]
        %v751 = vsel %vm716, 0, %v750
        %752 = vst [vmem:[#allocation2 + $0xb0] sm:$0x8] %v751
        %v753 = vld [vmem:[#allocation2 + $0xc0] sm:$0x8]
        %v754 = vsel %vm716, 0, %v753
        %755 = vst [vmem:[#allocation2 + $0xc0] sm:$0x8] %v754
        %v756 = vld [vmem:[#allocation2 + $0xd0] sm:$0x8]
        %v757 = vsel %vm716, 0, %v756
        %758 = vst [vmem:[#allocation2 + $0xd0] sm:$0x8] %v757
        %v759 = vld [vmem:[#allocation2 + $0xe0] sm:$0x8]
        %v760 = vsel %vm716, 0, %v759
        %761 = vst [vmem:[#allocation2 + $0xe0] sm:$0x8] %v760
        %v762 = vld [vmem:[#allocation2 + $0xf0] sm:$0x8]
        %v763 = vsel %vm716, 0, %v762
        %764 = vst [vmem:[#allocation2 + $0xf0] sm:$0x8] %v763
        %v765 = vld [vmem:[#allocation2 + $0x100] sm:$0x8]
        %v766 = vsel %vm716, 0, %v765
        %767 = vst [vmem:[#allocation2 + $0x100] sm:$0x8] %v766
        %v768 = vld [vmem:[#allocation2 + $0x110] sm:$0x8]
        %v769 = vsel %vm716, 0, %v768
        %770 = vst [vmem:[#allocation2 + $0x110] sm:$0x8] %v769
        %vm771 = vcmask 516096
        %vm772 = vsmask.f32 256
        %vm773 = vmand %vm771, %vm772
        %v774 = vld [vmem:[#allocation2 + $0xc] sm:$0x1]
        %v775 = vsel %vm773, 0, %v774
        %776 = vst [vmem:[#allocation2 + $0xc] sm:$0x1] %v775
        %v777 = vld [vmem:[#allocation2 + $0x1c] sm:$0x1]
        %v778 = vsel %vm773, 0, %v777
        %779 = vst [vmem:[#allocation2 + $0x1c] sm:$0x1] %v778
        %v780 = vld [vmem:[#allocation2 + $0x2c] sm:$0x1]
        %v781 = vsel %vm773, 0, %v780
        %782 = vst [vmem:[#allocation2 + $0x2c] sm:$0x1] %v781
        %v783 = vld [vmem:[#allocation2 + $0x3c] sm:$0x1]
        %v784 = vsel %vm773, 0, %v783
        %785 = vst [vmem:[#allocation2 + $0x3c] sm:$0x1] %v784
        %v786 = vld [vmem:[#allocation2 + $0x4c] sm:$0x1]
        %v787 = vsel %vm773, 0, %v786
        %788 = vst [vmem:[#allocation2 + $0x4c] sm:$0x1] %v787
        %v789 = vld [vmem:[#allocation2 + $0x5c] sm:$0x1]
        %v790 = vsel %vm773, 0, %v789
        %791 = vst [vmem:[#allocation2 + $0x5c] sm:$0x1] %v790
        %v792 = vld [vmem:[#allocation2 + $0x6c] sm:$0x1]
        %v793 = vsel %vm773, 0, %v792
        %794 = vst [vmem:[#allocation2 + $0x6c] sm:$0x1] %v793
        %v795 = vld [vmem:[#allocation2 + $0x7c] sm:$0x1]
        %v796 = vsel %vm773, 0, %v795
        %797 = vst [vmem:[#allocation2 + $0x7c] sm:$0x1] %v796
        %v798 = vld [vmem:[#allocation2 + $0x8c] sm:$0x1]
        %v799 = vsel %vm773, 0, %v798
        %800 = vst [vmem:[#allocation2 + $0x8c] sm:$0x1] %v799
        %v801 = vld [vmem:[#allocation2 + $0x9c] sm:$0x1]
        %v802 = vsel %vm773, 0, %v801
        %803 = vst [vmem:[#allocation2 + $0x9c] sm:$0x1] %v802
        %v804 = vld [vmem:[#allocation2 + $0xac] sm:$0x1]
        %v805 = vsel %vm773, 0, %v804
        %806 = vst [vmem:[#allocation2 + $0xac] sm:$0x1] %v805
        %v807 = vld [vmem:[#allocation2 + $0xbc] sm:$0x1]
        %v808 = vsel %vm773, 0, %v807
        %809 = vst [vmem:[#allocation2 + $0xbc] sm:$0x1] %v808
        %v810 = vld [vmem:[#allocation2 + $0xcc] sm:$0x1]
        %v811 = vsel %vm773, 0, %v810
        %812 = vst [vmem:[#allocation2 + $0xcc] sm:$0x1] %v811
        %v813 = vld [vmem:[#allocation2 + $0xdc] sm:$0x1]
        %v814 = vsel %vm773, 0, %v813
        %815 = vst [vmem:[#allocation2 + $0xdc] sm:$0x1] %v814
        %v816 = vld [vmem:[#allocation2 + $0xec] sm:$0x1]
        %v817 = vsel %vm773, 0, %v816
        %818 = vst [vmem:[#allocation2 + $0xec] sm:$0x1] %v817
        %v819 = vld [vmem:[#allocation2 + $0xfc] sm:$0x1]
        %v820 = vsel %vm773, 0, %v819
        %821 = vst [vmem:[#allocation2 + $0xfc] sm:$0x1] %v820
        %v822 = vld [vmem:[#allocation2 + $0x10c] sm:$0x1]
        %v823 = vsel %vm773, 0, %v822
        %824 = vst [vmem:[#allocation2 + $0x10c] sm:$0x1] %v823
        %v825 = vld [vmem:[#allocation2 + $0x11c] sm:$0x1]
        %v826 = vsel %vm773, 0, %v825
        %827 = vst [vmem:[#allocation2 + $0x11c] sm:$0x1] %v826
        %v844 = vunpack.c.l.b16 %v688
        %v845 = vunpack.c.h.b16 %v688
        %v846 = vunpack.c.l.b16 %v689
        %v847 = vunpack.c.h.b16 %v689
        %v848 = vunpack.c.l.b16 %v690
        %v849 = vunpack.c.h.b16 %v690
        %v850 = vunpack.c.l.b16 %v691
        %v851 = vunpack.c.h.b16 %v691
        %v852 = vunpack.c.l.b16 %v692
        %v853 = vunpack.c.h.b16 %v692
        %v854 = vunpack.c.l.b16 %v693
        %v855 = vunpack.c.h.b16 %v693
        %v856 = vunpack.c.l.b16 %v694
        %v857 = vunpack.c.h.b16 %v694
        %v858 = vunpack.c.l.b16 %v695
        %v859 = vunpack.c.h.b16 %v695
        %v860 = vunpack.c.l.b16 %v696
        %v861 = vunpack.c.h.b16 %v696
        %v862 = vunpack.c.l.b16 %v697
        %v863 = vunpack.c.h.b16 %v697
        %v864 = vunpack.c.l.b16 %v698
        %v865 = vunpack.c.h.b16 %v698
        %v866 = vunpack.c.l.b16 %v699
        %v867 = vunpack.c.h.b16 %v699
        %v868 = vunpack.c.l.b16 %v700
        %v869 = vunpack.c.h.b16 %v700
        %v870 = vunpack.c.l.b16 %v701
        %v871 = vunpack.c.h.b16 %v701
        %v872 = vunpack.c.l.b16 %v702
        %v873 = vunpack.c.h.b16 %v702
        %v874 = vunpack.c.l.b16 %v703
        %v875 = vunpack.c.h.b16 %v703
        %v876 = vpack.c.b16 %v844, %v844
        %v877 = vpack.c.b16 %v845, %v845
        %v878 = vpack.c.b16 %v846, %v846
        %v879 = vpack.c.b16 %v847, %v847
        %v880 = vpack.c.b16 %v848, %v848
        %v881 = vpack.c.b16 %v849, %v849
        %v882 = vpack.c.b16 %v850, %v850
        %v883 = vpack.c.b16 %v851, %v851
        %v884 = vpack.c.b16 %v852, %v852
        %v885 = vpack.c.b16 %v853, %v853
        %v886 = vpack.c.b16 %v854, %v854
        %v887 = vpack.c.b16 %v855, %v855
        %v888 = vpack.c.b16 %v856, %v856
        %v889 = vpack.c.b16 %v857, %v857
        %v890 = vpack.c.b16 %v858, %v858
        %v891 = vpack.c.b16 %v859, %v859
        %v892 = vpack.c.b16 %v860, %v860
        %v893 = vpack.c.b16 %v861, %v861
        %v894 = vpack.c.b16 %v862, %v862
        %v895 = vpack.c.b16 %v863, %v863
        %v896 = vpack.c.b16 %v864, %v864
        %v897 = vpack.c.b16 %v865, %v865
        %v898 = vpack.c.b16 %v866, %v866
        %v899 = vpack.c.b16 %v867, %v867
        %v900 = vpack.c.b16 %v868, %v868
        %v901 = vpack.c.b16 %v869, %v869
        %v902 = vpack.c.b16 %v870, %v870
        %v903 = vpack.c.b16 %v871, %v871
        %v904 = vpack.c.b16 %v872, %v872
        %v905 = vpack.c.b16 %v873, %v873
        %v906 = vpack.c.b16 %v874, %v874
        %v907 = vpack.c.b16 %v875, %v875
        %s940 = scalar_lea.vmem [#allocation2], 16
        %941 = vst.msk [vmem:[%s940 + $0x4] sm:$0xf] %vm704, %v876
        %942 = vst.msk [vmem:[%s940 + $0x8] sm:$0xf] %vm704, %v877
        %943 = vst.msk [vmem:[%s940 + $0x14] sm:$0xf] %vm704, %v878
        %944 = vst.msk [vmem:[%s940 + $0x18] sm:$0xf] %vm704, %v879
        %945 = vst.msk [vmem:[%s940 + $0x24] sm:$0xf] %vm704, %v880
        %946 = vst.msk [vmem:[%s940 + $0x28] sm:$0xf] %vm704, %v881
        %947 = vst.msk [vmem:[%s940 + $0x34] sm:$0xf] %vm704, %v882
        %948 = vst.msk [vmem:[%s940 + $0x38] sm:$0xf] %vm704, %v883
        %949 = vst.msk [vmem:[%s940 + $0x44] sm:$0xf] %vm704, %v884
        %950 = vst.msk [vmem:[%s940 + $0x48] sm:$0xf] %vm704, %v885
        %951 = vst.msk [vmem:[%s940 + $0x54] sm:$0xf] %vm704, %v886
        %952 = vst.msk [vmem:[%s940 + $0x58] sm:$0xf] %vm704, %v887
        %953 = vst.msk [vmem:[%s940 + $0x64] sm:$0xf] %vm704, %v888
        %954 = vst.msk [vmem:[%s940 + $0x68] sm:$0xf] %vm704, %v889
        %955 = vst.msk [vmem:[%s940 + $0x74] sm:$0xf] %vm704, %v890
        %956 = vst.msk [vmem:[%s940 + $0x78] sm:$0xf] %vm704, %v891
        %957 = vst.msk [vmem:[%s940 + $0x84] sm:$0xf] %vm704, %v892
        %958 = vst.msk [vmem:[%s940 + $0x88] sm:$0xf] %vm704, %v893
        %959 = vst.msk [vmem:[%s940 + $0x94] sm:$0xf] %vm704, %v894
        %960 = vst.msk [vmem:[%s940 + $0x98] sm:$0xf] %vm704, %v895
        %961 = vst.msk [vmem:[%s940 + $0xa4] sm:$0xf] %vm704, %v896
        %962 = vst.msk [vmem:[%s940 + $0xa8] sm:$0xf] %vm704, %v897
        %963 = vst.msk [vmem:[%s940 + $0xb4] sm:$0xf] %vm704, %v898
        %964 = vst.msk [vmem:[%s940 + $0xb8] sm:$0xf] %vm704, %v899
        %965 = vst.msk [vmem:[%s940 + $0xc4] sm:$0xf] %vm704, %v900
        %966 = vst.msk [vmem:[%s940 + $0xc8] sm:$0xf] %vm704, %v901
        %967 = vst.msk [vmem:[%s940 + $0xd4] sm:$0xf] %vm704, %v902
        %968 = vst.msk [vmem:[%s940 + $0xd8] sm:$0xf] %vm704, %v903
        %969 = vst.msk [vmem:[%s940 + $0xe4] sm:$0xf] %vm704, %v904
        %970 = vst.msk [vmem:[%s940 + $0xe8] sm:$0xf] %vm704, %v905
        %971 = vst.msk [vmem:[%s940 + $0xf4] sm:$0xf] %vm704, %v906
        %972 = vst.msk [vmem:[%s940 + $0xf8] sm:$0xf] %vm704, %v907
        %v973 = vld [vmem:[#allocation2] sm:$0x8]
        %v974 = vld [vmem:[#allocation2 + $0x4] sm:$0xf]
        %v975 = vld [vmem:[#allocation2 + $0x8] sm:$0xf]
        %v976 = vld [vmem:[#allocation2 + $0x10] sm:$0x8]
        %v977 = vld [vmem:[#allocation2 + $0x14] sm:$0xf]
        %v978 = vld [vmem:[#allocation2 + $0x18] sm:$0xf]
        %v979 = vld [vmem:[#allocation2 + $0x20] sm:$0x8]
        %v980 = vld [vmem:[#allocation2 + $0x24] sm:$0xf]
        %v981 = vld [vmem:[#allocation2 + $0x28] sm:$0xf]
        %v982 = vld [vmem:[#allocation2 + $0x30] sm:$0x8]
        %v983 = vld [vmem:[#allocation2 + $0x34] sm:$0xf]
        %v984 = vld [vmem:[#allocation2 + $0x38] sm:$0xf]
        %v985 = vld [vmem:[#allocation2 + $0x40] sm:$0x8]
        %v986 = vld [vmem:[#allocation2 + $0x44] sm:$0xf]
        %v987 = vld [vmem:[#allocation2 + $0x48] sm:$0xf]
        %v988 = vld [vmem:[#allocation2 + $0x50] sm:$0x8]
        %v989 = vld [vmem:[#allocation2 + $0x54] sm:$0xf]
        %v990 = vld [vmem:[#allocation2 + $0x58] sm:$0xf]
        %v991 = vld [vmem:[#allocation2 + $0x60] sm:$0x8]
        %v992 = vld [vmem:[#allocation2 + $0x64] sm:$0xf]
        %v993 = vld [vmem:[#allocation2 + $0x68] sm:$0xf]
        %v994 = vld [vmem:[#allocation2 + $0x70] sm:$0x8]
        %v995 = vld [vmem:[#allocation2 + $0x74] sm:$0xf]
        %v996 = vld [vmem:[#allocation2 + $0x78] sm:$0xf]
        %v997 = vld [vmem:[#allocation2 + $0x80] sm:$0x8]
        %v998 = vld [vmem:[#allocation2 + $0x84] sm:$0xf]
        %v999 = vld [vmem:[#allocation2 + $0x88] sm:$0xf]
        %v1000 = vld [vmem:[#allocation2 + $0x90] sm:$0x8]
        %v1001 = vld [vmem:[#allocation2 + $0x94] sm:$0xf]
        %v1002 = vld [vmem:[#allocation2 + $0x98] sm:$0xf]
        %v1003 = vld [vmem:[#allocation2 + $0xa0] sm:$0x8]
        %v1004 = vld [vmem:[#allocation2 + $0xa4] sm:$0xf]
        %v1005 = vld [vmem:[#allocation2 + $0xa8] sm:$0xf]
        %v1006 = vld [vmem:[#allocation2 + $0xb0] sm:$0x8]
        %v1007 = vld [vmem:[#allocation2 + $0xb4] sm:$0xf]
        %v1008 = vld [vmem:[#allocation2 + $0xb8] sm:$0xf]
        %v1009 = vld [vmem:[#allocation2 + $0xc0] sm:$0x8]
        %v1010 = vld [vmem:[#allocation2 + $0xc4] sm:$0xf]
        %v1011 = vld [vmem:[#allocation2 + $0xc8] sm:$0xf]
        %v1012 = vld [vmem:[#allocation2 + $0xd0] sm:$0x8]
        %v1013 = vld [vmem:[#allocation2 + $0xd4] sm:$0xf]
        %v1014 = vld [vmem:[#allocation2 + $0xd8] sm:$0xf]
        %v1015 = vld [vmem:[#allocation2 + $0xe0] sm:$0x8]
        %v1016 = vld [vmem:[#allocation2 + $0xe4] sm:$0xf]
        %v1017 = vld [vmem:[#allocation2 + $0xe8] sm:$0xf]
        %v1018 = vld [vmem:[#allocation2 + $0xf0] sm:$0x8]
        %v1019 = vld [vmem:[#allocation2 + $0xf4] sm:$0xf]
        %v1020 = vld [vmem:[#allocation2 + $0xf8] sm:$0xf]
        %vm1021 = vsmask.f32 4368
        %vm1022 = vmor %vm772, %vm1021
        %v1024 = vshrl.u32 %v973, 16
        %v1026 = vrot.slane %v1024, 7
        %v1027 = vrot.slane %v1026, 4
        %v1029 = vshrl.u32 %v974, 16
        %v1031 = vrot.slane %v1029, 7
        %v1032 = vshll.u32 %v974, 16
        %v1034 = vor.u32 %v1031, %v1032
        %v1035 = vsel %vm1022, %v1027, %v1034
        %v1036 = vrot.slane %v1031, 4
        %v1038 = vshrl.u32 %v975, 16
        %v1040 = vrot.slane %v1038, 7
        %v1041 = vshll.u32 %v975, 16
        %v1043 = vor.u32 %v1040, %v1041
        %v1044 = vsel %vm1022, %v1036, %v1043
        %v1046 = vshrl.u32 %v976, 16
        %v1048 = vrot.slane %v1046, 7
        %v1049 = vrot.slane %v1048, 4
        %v1051 = vshrl.u32 %v977, 16
        %v1053 = vrot.slane %v1051, 7
        %v1054 = vshll.u32 %v977, 16
        %v1056 = vor.u32 %v1053, %v1054
        %v1057 = vsel %vm1022, %v1049, %v1056
        %v1058 = vrot.slane %v1053, 4
        %v1060 = vshrl.u32 %v978, 16
        %v1062 = vrot.slane %v1060, 7
        %v1063 = vshll.u32 %v978, 16
        %v1065 = vor.u32 %v1062, %v1063
        %v1066 = vsel %vm1022, %v1058, %v1065
        %v1068 = vshrl.u32 %v979, 16
        %v1070 = vrot.slane %v1068, 7
        %v1071 = vrot.slane %v1070, 4
        %v1073 = vshrl.u32 %v980, 16
        %v1075 = vrot.slane %v1073, 7
        %v1076 = vshll.u32 %v980, 16
        %v1078 = vor.u32 %v1075, %v1076
        %v1079 = vsel %vm1022, %v1071, %v1078
        %v1080 = vrot.slane %v1075, 4
        %v1082 = vshrl.u32 %v981, 16
        %v1084 = vrot.slane %v1082, 7
        %v1085 = vshll.u32 %v981, 16
        %v1087 = vor.u32 %v1084, %v1085
        %v1088 = vsel %vm1022, %v1080, %v1087
        %v1090 = vshrl.u32 %v982, 16
        %v1092 = vrot.slane %v1090, 7
        %v1093 = vrot.slane %v1092, 4
        %v1095 = vshrl.u32 %v983, 16
        %v1097 = vrot.slane %v1095, 7
        %v1098 = vshll.u32 %v983, 16
        %v1100 = vor.u32 %v1097, %v1098
        %v1101 = vsel %vm1022, %v1093, %v1100
        %v1102 = vrot.slane %v1097, 4
        %v1104 = vshrl.u32 %v984, 16
        %v1106 = vrot.slane %v1104, 7
        %v1107 = vshll.u32 %v984, 16
        %v1109 = vor.u32 %v1106, %v1107
        %v1110 = vsel %vm1022, %v1102, %v1109
        %v1112 = vshrl.u32 %v985, 16
        %v1114 = vrot.slane %v1112, 7
        %v1115 = vrot.slane %v1114, 4
        %v1117 = vshrl.u32 %v986, 16
        %v1119 = vrot.slane %v1117, 7
        %v1120 = vshll.u32 %v986, 16
        %v1122 = vor.u32 %v1119, %v1120
        %v1123 = vsel %vm1022, %v1115, %v1122
        %v1124 = vrot.slane %v1119, 4
        %v1126 = vshrl.u32 %v987, 16
        %v1128 = vrot.slane %v1126, 7
        %v1129 = vshll.u32 %v987, 16
        %v1131 = vor.u32 %v1128, %v1129
        %v1132 = vsel %vm1022, %v1124, %v1131
        %v1134 = vshrl.u32 %v988, 16
        %v1136 = vrot.slane %v1134, 7
        %v1137 = vrot.slane %v1136, 4
        %v1139 = vshrl.u32 %v989, 16
        %v1141 = vrot.slane %v1139, 7
        %v1142 = vshll.u32 %v989, 16
        %v1144 = vor.u32 %v1141, %v1142
        %v1145 = vsel %vm1022, %v1137, %v1144
        %v1146 = vrot.slane %v1141, 4
        %v1148 = vshrl.u32 %v990, 16
        %v1150 = vrot.slane %v1148, 7
        %v1151 = vshll.u32 %v990, 16
        %v1153 = vor.u32 %v1150, %v1151
        %v1154 = vsel %vm1022, %v1146, %v1153
        %v1156 = vshrl.u32 %v991, 16
        %v1158 = vrot.slane %v1156, 7
        %v1159 = vrot.slane %v1158, 4
        %v1161 = vshrl.u32 %v992, 16
        %v1163 = vrot.slane %v1161, 7
        %v1164 = vshll.u32 %v992, 16
        %v1166 = vor.u32 %v1163, %v1164
        %v1167 = vsel %vm1022, %v1159, %v1166
        %v1168 = vrot.slane %v1163, 4
        %v1170 = vshrl.u32 %v993, 16
        %v1172 = vrot.slane %v1170, 7
        %v1173 = vshll.u32 %v993, 16
        %v1175 = vor.u32 %v1172, %v1173
        %v1176 = vsel %vm1022, %v1168, %v1175
        %v1178 = vshrl.u32 %v994, 16
        %v1180 = vrot.slane %v1178, 7
        %v1181 = vrot.slane %v1180, 4
        %v1183 = vshrl.u32 %v995, 16
        %v1185 = vrot.slane %v1183, 7
        %v1186 = vshll.u32 %v995, 16
        %v1188 = vor.u32 %v1185, %v1186
        %v1189 = vsel %vm1022, %v1181, %v1188
        %v1190 = vrot.slane %v1185, 4
        %v1192 = vshrl.u32 %v996, 16
        %v1194 = vrot.slane %v1192, 7
        %v1195 = vshll.u32 %v996, 16
        %v1197 = vor.u32 %v1194, %v1195
        %v1198 = vsel %vm1022, %v1190, %v1197
        %v1200 = vshrl.u32 %v997, 16
        %v1202 = vrot.slane %v1200, 7
        %v1203 = vrot.slane %v1202, 4
        %v1205 = vshrl.u32 %v998, 16
        %v1207 = vrot.slane %v1205, 7
        %v1208 = vshll.u32 %v998, 16
        %v1210 = vor.u32 %v1207, %v1208
        %v1211 = vsel %vm1022, %v1203, %v1210
        %v1212 = vrot.slane %v1207, 4
        %v1214 = vshrl.u32 %v999, 16
        %v1216 = vrot.slane %v1214, 7
        %v1217 = vshll.u32 %v999, 16
        %v1219 = vor.u32 %v1216, %v1217
        %v1220 = vsel %vm1022, %v1212, %v1219
        %v1222 = vshrl.u32 %v1000, 16
        %v1224 = vrot.slane %v1222, 7
        %v1225 = vrot.slane %v1224, 4
        %v1227 = vshrl.u32 %v1001, 16
        %v1229 = vrot.slane %v1227, 7
        %v1230 = vshll.u32 %v1001, 16
        %v1232 = vor.u32 %v1229, %v1230
        %v1233 = vsel %vm1022, %v1225, %v1232
        %v1234 = vrot.slane %v1229, 4
        %v1236 = vshrl.u32 %v1002, 16
        %v1238 = vrot.slane %v1236, 7
        %v1239 = vshll.u32 %v1002, 16
        %v1241 = vor.u32 %v1238, %v1239
        %v1242 = vsel %vm1022, %v1234, %v1241
        %v1244 = vshrl.u32 %v1003, 16
        %v1246 = vrot.slane %v1244, 7
        %v1247 = vrot.slane %v1246, 4
        %v1249 = vshrl.u32 %v1004, 16
        %v1251 = vrot.slane %v1249, 7
        %v1252 = vshll.u32 %v1004, 16
        %v1254 = vor.u32 %v1251, %v1252
        %v1255 = vsel %vm1022, %v1247, %v1254
        %v1256 = vrot.slane %v1251, 4
        %v1258 = vshrl.u32 %v1005, 16
        %v1260 = vrot.slane %v1258, 7
        %v1261 = vshll.u32 %v1005, 16
        %v1263 = vor.u32 %v1260, %v1261
        %v1264 = vsel %vm1022, %v1256, %v1263
        %v1266 = vshrl.u32 %v1006, 16
        %v1268 = vrot.slane %v1266, 7
        %v1269 = vrot.slane %v1268, 4
        %v1271 = vshrl.u32 %v1007, 16
        %v1273 = vrot.slane %v1271, 7
        %v1274 = vshll.u32 %v1007, 16
        %v1276 = vor.u32 %v1273, %v1274
        %v1277 = vsel %vm1022, %v1269, %v1276
        %v1278 = vrot.slane %v1273, 4
        %v1280 = vshrl.u32 %v1008, 16
        %v1282 = vrot.slane %v1280, 7
        %v1283 = vshll.u32 %v1008, 16
        %v1285 = vor.u32 %v1282, %v1283
        %v1286 = vsel %vm1022, %v1278, %v1285
        %v1288 = vshrl.u32 %v1009, 16
        %v1290 = vrot.slane %v1288, 7
        %v1291 = vrot.slane %v1290, 4
        %v1293 = vshrl.u32 %v1010, 16
        %v1295 = vrot.slane %v1293, 7
        %v1296 = vshll.u32 %v1010, 16
        %v1298 = vor.u32 %v1295, %v1296
        %v1299 = vsel %vm1022, %v1291, %v1298
        %v1300 = vrot.slane %v1295, 4
        %v1302 = vshrl.u32 %v1011, 16
        %v1304 = vrot.slane %v1302, 7
        %v1305 = vshll.u32 %v1011, 16
        %v1307 = vor.u32 %v1304, %v1305
        %v1308 = vsel %vm1022, %v1300, %v1307
        %v1310 = vshrl.u32 %v1012, 16
        %v1312 = vrot.slane %v1310, 7
        %v1313 = vrot.slane %v1312, 4
        %v1315 = vshrl.u32 %v1013, 16
        %v1317 = vrot.slane %v1315, 7
        %v1318 = vshll.u32 %v1013, 16
        %v1320 = vor.u32 %v1317, %v1318
        %v1321 = vsel %vm1022, %v1313, %v1320
        %v1322 = vrot.slane %v1317, 4
        %v1324 = vshrl.u32 %v1014, 16
        %v1326 = vrot.slane %v1324, 7
        %v1327 = vshll.u32 %v1014, 16
        %v1329 = vor.u32 %v1326, %v1327
        %v1330 = vsel %vm1022, %v1322, %v1329
        %v1332 = vshrl.u32 %v1015, 16
        %v1334 = vrot.slane %v1332, 7
        %v1335 = vrot.slane %v1334, 4
        %v1337 = vshrl.u32 %v1016, 16
        %v1339 = vrot.slane %v1337, 7
        %v1340 = vshll.u32 %v1016, 16
        %v1342 = vor.u32 %v1339, %v1340
        %v1343 = vsel %vm1022, %v1335, %v1342
        %v1344 = vrot.slane %v1339, 4
        %v1346 = vshrl.u32 %v1017, 16
        %v1348 = vrot.slane %v1346, 7
        %v1349 = vshll.u32 %v1017, 16
        %v1351 = vor.u32 %v1348, %v1349
        %v1352 = vsel %vm1022, %v1344, %v1351
        %v1354 = vshrl.u32 %v1018, 16
        %v1356 = vrot.slane %v1354, 7
        %v1357 = vrot.slane %v1356, 4
        %v1359 = vshrl.u32 %v1019, 16
        %v1361 = vrot.slane %v1359, 7
        %v1362 = vshll.u32 %v1019, 16
        %v1364 = vor.u32 %v1361, %v1362
        %v1365 = vsel %vm1022, %v1357, %v1364
        %v1366 = vrot.slane %v1361, 4
        %v1368 = vshrl.u32 %v1020, 16
        %v1370 = vrot.slane %v1368, 7
        %v1371 = vshll.u32 %v1020, 16
        %v1373 = vor.u32 %v1370, %v1371
        %v1374 = vsel %vm1022, %v1366, %v1373
        %v1375 = vld [vmem:[#allocation9] sm:$0xf]
        %v1376 = vld [vmem:[#allocation9 + $0x4] sm:$0xf]
        %v1377 = vld [vmem:[#allocation9 + $0x8] sm:$0xf]
        %v1378 = vld [vmem:[#allocation9 + $0xc] sm:$0xf]
        %v1379 = vld [vmem:[#allocation9 + $0x10] sm:$0xf]
        %v1380 = vld [vmem:[#allocation9 + $0x14] sm:$0xf]
        %v1381 = vld [vmem:[#allocation9 + $0x18] sm:$0xf]
        %v1382 = vld [vmem:[#allocation9 + $0x1c] sm:$0xf]
        %s1383 = scalar_lea.vmem [#allocation9], 32
        %v1384 = vld [vmem:[%s1383] sm:$0xf]
        %v1385 = vld [vmem:[%s1383 + $0x4] sm:$0xf]
        %v1386 = vld [vmem:[%s1383 + $0x8] sm:$0xf]
        %v1387 = vld [vmem:[%s1383 + $0xc] sm:$0xf]
        %v1388 = vld [vmem:[%s1383 + $0x10] sm:$0xf]
        %v1389 = vld [vmem:[%s1383 + $0x14] sm:$0xf]
        %v1390 = vld [vmem:[%s1383 + $0x18] sm:$0xf]
        %v1391 = vld [vmem:[%s1383 + $0x1c] sm:$0xf]
        %v1424 = vunpack.c.l.b16 %v974
        %v1425 = vunpack.c.l.b16 %v975
        %v1426 = vunpack.c.l.b16 %v977
        %v1427 = vunpack.c.l.b16 %v978
        %v1428 = vunpack.c.l.b16 %v980
        %v1429 = vunpack.c.l.b16 %v981
        %v1430 = vunpack.c.l.b16 %v983
        %v1431 = vunpack.c.l.b16 %v984
        %v1432 = vunpack.c.l.b16 %v986
        %v1433 = vunpack.c.l.b16 %v987
        %v1434 = vunpack.c.l.b16 %v989
        %v1435 = vunpack.c.l.b16 %v990
        %v1436 = vunpack.c.l.b16 %v992
        %v1437 = vunpack.c.l.b16 %v993
        %v1438 = vunpack.c.l.b16 %v995
        %v1439 = vunpack.c.l.b16 %v996
        %v1440 = vunpack.c.l.b16 %v998
        %v1441 = vunpack.c.l.b16 %v999
        %v1442 = vunpack.c.l.b16 %v1001
        %v1443 = vunpack.c.l.b16 %v1002
        %v1444 = vunpack.c.l.b16 %v1004
        %v1445 = vunpack.c.l.b16 %v1005
        %v1446 = vunpack.c.l.b16 %v1007
        %v1447 = vunpack.c.l.b16 %v1008
        %v1448 = vunpack.c.l.b16 %v1010
        %v1449 = vunpack.c.l.b16 %v1011
        %v1450 = vunpack.c.l.b16 %v1013
        %v1451 = vunpack.c.l.b16 %v1014
        %v1452 = vunpack.c.l.b16 %v1016
        %v1453 = vunpack.c.l.b16 %v1017
        %v1454 = vunpack.c.l.b16 %v1019
        %v1455 = vunpack.c.l.b16 %v1020
        %v1456 = vpack.c.b16 %v1425, %v1424
        %v1457 = vpack.c.b16 %v1427, %v1426
        %v1458 = vpack.c.b16 %v1429, %v1428
        %v1459 = vpack.c.b16 %v1431, %v1430
        %v1460 = vpack.c.b16 %v1433, %v1432
        %v1461 = vpack.c.b16 %v1435, %v1434
        %v1462 = vpack.c.b16 %v1437, %v1436
        %v1463 = vpack.c.b16 %v1439, %v1438
        %v1464 = vpack.c.b16 %v1441, %v1440
        %v1465 = vpack.c.b16 %v1443, %v1442
        %v1466 = vpack.c.b16 %v1445, %v1444
        %v1467 = vpack.c.b16 %v1447, %v1446
        %v1468 = vpack.c.b16 %v1449, %v1448
        %v1469 = vpack.c.b16 %v1451, %v1450
        %v1470 = vpack.c.b16 %v1453, %v1452
        %v1471 = vpack.c.b16 %v1455, %v1454
        %v1480 = vunpack.c.l.b16 %v1384
        %v1481 = vunpack.c.l.b16 %v1385
        %v1482 = vunpack.c.l.b16 %v1386
        %v1483 = vunpack.c.l.b16 %v1387
        %v1484 = vunpack.c.l.b16 %v1388
        %v1485 = vunpack.c.l.b16 %v1389
        %v1486 = vunpack.c.l.b16 %v1390
        %v1487 = vunpack.c.l.b16 %v1391
        %v1488 = vpack.c.b16 %v1481, %v1480
        %v1489 = vpack.c.b16 %v1483, %v1482
        %v1490 = vpack.c.b16 %v1485, %v1484
        %v1491 = vpack.c.b16 %v1487, %v1486
        %vm1496 = vcmask 523264
        %v1498 = vsel %vm1496, %v1456, 0
        %v1501 = vsel %vm1496, %v1457, 0
        %v1504 = vsel %vm1496, %v1458, 0
        %v1507 = vsel %vm1496, %v1459, 0
        %v1510 = vsel %vm1496, %v1460, 0
        %v1513 = vsel %vm1496, %v1461, 0
        %v1516 = vsel %vm1496, %v1462, 0
        %v1519 = vsel %vm1496, %v1463, 0
        %v1522 = vsel %vm1496, %v1464, 0
        %v1525 = vsel %vm1496, %v1465, 0
        %v1528 = vsel %vm1496, %v1466, 0
        %v1531 = vsel %vm1496, %v1467, 0
        %v1534 = vsel %vm1496, %v1468, 0
        %v1537 = vsel %vm1496, %v1469, 0
        %v1540 = vsel %vm1496, %v1470, 0
        %v1543 = vsel %vm1496, %v1471, 0
        %1545 = vmatprep.subr.bf16.mxu0 0
        %1546 = vmatpush1.bf16.msra.mxu0 0
        %1547 = vmatprep.subr.bf16.mxu0 0
        %1548 = vmatpush1.bf16.msra.mxu0 0
        %1549 = vmatprep.subr.bf16.mxu0 0
        %1550 = vmatpush1.bf16.msra.mxu0 0
        %1551 = vmatprep.subr.bf16.mxu0 0
        %1552 = vmatpush1.bf16.msra.mxu0 0
        %1553 = vmatprep.subr.bf16.mxu0 0
        %1554 = vmatpush1.bf16.msra.mxu0 %v1491
        %1555 = vmatprep.subr.bf16.mxu0 0
        %1556 = vmatpush1.bf16.msra.mxu0 %v1490
        %1557 = vmatprep.subr.bf16.mxu0 0
        %1558 = vmatpush1.bf16.msra.mxu0 %v1489
        %1559 = vmatprep.subr.bf16.mxu0 0
        %1560 = vmatpush1.bf16.msra.mxu0 %v1488
        %1561 = vmatprep.subr.bf16.mxu0 0
        %1562 = vmatpush2.bf16.msra.mxu0 0
        %1563 = vmatprep.subr.bf16.mxu0 0
        %1564 = vmatpush2.bf16.msra.mxu0 0
        %1565 = vmatprep.subr.bf16.mxu0 0
        %1566 = vmatpush2.bf16.msra.mxu0 0
        %1567 = vmatprep.subr.bf16.mxu0 0
        %1568 = vmatpush2.bf16.msra.mxu0 0
        %1569 = vmatprep.subr.bf16.mxu0 0
        %1570 = vmatpush2.bf16.msra.mxu0 0
        %1571 = vmatprep.subr.bf16.mxu0 0
        %1572 = vmatpush2.bf16.msra.mxu0 0
        %1573 = vmatprep.subr.bf16.mxu0 0
        %1574 = vmatpush2.bf16.msra.mxu0 0
        %1575 = vmatprep.subr.bf16.mxu0 0
        %1576 = vmatpush2.bf16.msra.mxu0 0
        %1577 = vmatprep.mubr.bf16.mxu0 0
        %1578 = vmatmul.mubr.bf16.gmra.mxu0 %v1498
        %v1579 = vpop.f32.mrf.mxu0
        %v1580 = vadd.f32 0.0, %v1579
        %v1581 = vpop.f32.mrf.mxu0
        %v1582 = vpop.f32.mrf.mxu0
        %v1583 = vadd.f32 0.0, %v1582
        %v1584 = vpop.f32.mrf.mxu0
        %1585 = vmatprep.mubr.bf16.mxu0 0
        %1586 = vmatmul.mubr.bf16.gmra.mxu0 %v1501
        %v1587 = vpop.f32.mrf.mxu0
        %v1588 = vadd.f32 0.0, %v1587
        %v1589 = vpop.f32.mrf.mxu0
        %v1590 = vpop.f32.mrf.mxu0
        %v1591 = vadd.f32 0.0, %v1590
        %v1592 = vpop.f32.mrf.mxu0
        %1593 = vmatprep.mubr.bf16.mxu0 0
        %1594 = vmatmul.mubr.bf16.gmra.mxu0 %v1504
        %v1595 = vpop.f32.mrf.mxu0
        %v1596 = vadd.f32 0.0, %v1595
        %v1597 = vpop.f32.mrf.mxu0
        %v1598 = vpop.f32.mrf.mxu0
        %v1599 = vadd.f32 0.0, %v1598
        %v1600 = vpop.f32.mrf.mxu0
        %1601 = vmatprep.mubr.bf16.mxu0 0
        %1602 = vmatmul.mubr.bf16.gmra.mxu0 %v1507
        %v1603 = vpop.f32.mrf.mxu0
        %v1604 = vadd.f32 0.0, %v1603
        %v1605 = vpop.f32.mrf.mxu0
        %v1606 = vpop.f32.mrf.mxu0
        %v1607 = vadd.f32 0.0, %v1606
        %v1608 = vpop.f32.mrf.mxu0
        %1609 = vmatprep.mubr.bf16.mxu0 0
        %1610 = vmatmul.mubr.bf16.gmra.mxu0 %v1510
        %v1611 = vpop.f32.mrf.mxu0
        %v1612 = vadd.f32 0.0, %v1611
        %v1613 = vpop.f32.mrf.mxu0
        %v1614 = vpop.f32.mrf.mxu0
        %v1615 = vadd.f32 0.0, %v1614
        %v1616 = vpop.f32.mrf.mxu0
        %1617 = vmatprep.mubr.bf16.mxu0 0
        %1618 = vmatmul.mubr.bf16.gmra.mxu0 %v1513
        %v1619 = vpop.f32.mrf.mxu0
        %v1620 = vadd.f32 0.0, %v1619
        %v1621 = vpop.f32.mrf.mxu0
        %v1622 = vpop.f32.mrf.mxu0
        %v1623 = vadd.f32 0.0, %v1622
        %v1624 = vpop.f32.mrf.mxu0
        %1625 = vmatprep.mubr.bf16.mxu0 0
        %1626 = vmatmul.mubr.bf16.gmra.mxu0 %v1516
        %v1627 = vpop.f32.mrf.mxu0
        %v1628 = vadd.f32 0.0, %v1627
        %v1629 = vpop.f32.mrf.mxu0
        %v1630 = vpop.f32.mrf.mxu0
        %v1631 = vadd.f32 0.0, %v1630
        %v1632 = vpop.f32.mrf.mxu0
        %1633 = vmatprep.mubr.bf16.mxu0 0
        %1634 = vmatmul.mubr.bf16.gmra.mxu0 %v1519
        %v1635 = vpop.f32.mrf.mxu0
        %v1636 = vadd.f32 0.0, %v1635
        %v1637 = vpop.f32.mrf.mxu0
        %v1638 = vpop.f32.mrf.mxu0
        %v1639 = vadd.f32 0.0, %v1638
        %v1640 = vpop.f32.mrf.mxu0
        %1641 = vmatprep.mubr.bf16.mxu0 0
        %1642 = vmatmul.mubr.bf16.gmra.mxu0 %v1522
        %v1643 = vpop.f32.mrf.mxu0
        %v1644 = vadd.f32 0.0, %v1643
        %v1645 = vpop.f32.mrf.mxu0
        %v1646 = vpop.f32.mrf.mxu0
        %v1647 = vadd.f32 0.0, %v1646
        %v1648 = vpop.f32.mrf.mxu0
        %1649 = vmatprep.mubr.bf16.mxu0 0
        %1650 = vmatmul.mubr.bf16.gmra.mxu0 %v1525
        %v1651 = vpop.f32.mrf.mxu0
        %v1652 = vadd.f32 0.0, %v1651
        %v1653 = vpop.f32.mrf.mxu0
        %v1654 = vpop.f32.mrf.mxu0
        %v1655 = vadd.f32 0.0, %v1654
        %v1656 = vpop.f32.mrf.mxu0
        %1657 = vmatprep.mubr.bf16.mxu0 0
        %1658 = vmatmul.mubr.bf16.gmra.mxu0 %v1528
        %v1659 = vpop.f32.mrf.mxu0
        %v1660 = vadd.f32 0.0, %v1659
        %v1661 = vpop.f32.mrf.mxu0
        %v1662 = vpop.f32.mrf.mxu0
        %v1663 = vadd.f32 0.0, %v1662
        %v1664 = vpop.f32.mrf.mxu0
        %1665 = vmatprep.mubr.bf16.mxu0 0
        %1666 = vmatmul.mubr.bf16.gmra.mxu0 %v1531
        %v1667 = vpop.f32.mrf.mxu0
        %v1668 = vadd.f32 0.0, %v1667
        %v1669 = vpop.f32.mrf.mxu0
        %v1670 = vpop.f32.mrf.mxu0
        %v1671 = vadd.f32 0.0, %v1670
        %v1672 = vpop.f32.mrf.mxu0
        %1673 = vmatprep.mubr.bf16.mxu0 0
        %1674 = vmatmul.mubr.bf16.gmra.mxu0 %v1534
        %v1675 = vpop.f32.mrf.mxu0
        %v1676 = vadd.f32 0.0, %v1675
        %v1677 = vpop.f32.mrf.mxu0
        %v1678 = vpop.f32.mrf.mxu0
        %v1679 = vadd.f32 0.0, %v1678
        %v1680 = vpop.f32.mrf.mxu0
        %1681 = vmatprep.mubr.bf16.mxu0 0
        %1682 = vmatmul.mubr.bf16.gmra.mxu0 %v1537
        %v1683 = vpop.f32.mrf.mxu0
        %v1684 = vadd.f32 0.0, %v1683
        %v1685 = vpop.f32.mrf.mxu0
        %v1686 = vpop.f32.mrf.mxu0
        %v1687 = vadd.f32 0.0, %v1686
        %v1688 = vpop.f32.mrf.mxu0
        %1689 = vmatprep.mubr.bf16.mxu0 0
        %1690 = vmatmul.mubr.bf16.gmra.mxu0 %v1540
        %v1691 = vpop.f32.mrf.mxu0
        %v1692 = vadd.f32 0.0, %v1691
        %v1693 = vpop.f32.mrf.mxu0
        %v1694 = vpop.f32.mrf.mxu0
        %v1695 = vadd.f32 0.0, %v1694
        %v1696 = vpop.f32.mrf.mxu0
        %1697 = vmatprep.mubr.bf16.mxu0 0
        %1698 = vmatmul.mubr.bf16.gmra.mxu0 %v1543
        %v1699 = vpop.f32.mrf.mxu0
        %v1700 = vadd.f32 0.0, %v1699
        %v1701 = vpop.f32.mrf.mxu0
        %v1702 = vpop.f32.mrf.mxu0
        %v1703 = vadd.f32 0.0, %v1702
        %v1704 = vpop.f32.mrf.mxu0
        %1705 = vdwg.mxu0
        %v1706 = vunpack.c.l.b16 %v1035
        %v1707 = vunpack.c.l.b16 %v1044
        %v1708 = vunpack.c.l.b16 %v1057
        %v1709 = vunpack.c.l.b16 %v1066
        %v1710 = vunpack.c.l.b16 %v1079
        %v1711 = vunpack.c.l.b16 %v1088
        %v1712 = vunpack.c.l.b16 %v1101
        %v1713 = vunpack.c.l.b16 %v1110
        %v1714 = vunpack.c.l.b16 %v1123
        %v1715 = vunpack.c.l.b16 %v1132
        %v1716 = vunpack.c.l.b16 %v1145
        %v1717 = vunpack.c.l.b16 %v1154
        %v1718 = vunpack.c.l.b16 %v1167
        %v1719 = vunpack.c.l.b16 %v1176
        %v1720 = vunpack.c.l.b16 %v1189
        %v1721 = vunpack.c.l.b16 %v1198
        %v1722 = vunpack.c.l.b16 %v1211
        %v1723 = vunpack.c.l.b16 %v1220
        %v1724 = vunpack.c.l.b16 %v1233
        %v1725 = vunpack.c.l.b16 %v1242
        %v1726 = vunpack.c.l.b16 %v1255
        %v1727 = vunpack.c.l.b16 %v1264
        %v1728 = vunpack.c.l.b16 %v1277
        %v1729 = vunpack.c.l.b16 %v1286
        %v1730 = vunpack.c.l.b16 %v1299
        %v1731 = vunpack.c.l.b16 %v1308
        %v1732 = vunpack.c.l.b16 %v1321
        %v1733 = vunpack.c.l.b16 %v1330
        %v1734 = vunpack.c.l.b16 %v1343
        %v1735 = vunpack.c.l.b16 %v1352
        %v1736 = vunpack.c.l.b16 %v1365
        %v1737 = vunpack.c.l.b16 %v1374
        %v1738 = vpack.c.b16 %v1707, %v1706
        %v1739 = vpack.c.b16 %v1709, %v1708
        %v1740 = vpack.c.b16 %v1711, %v1710
        %v1741 = vpack.c.b16 %v1713, %v1712
        %v1742 = vpack.c.b16 %v1715, %v1714
        %v1743 = vpack.c.b16 %v1717, %v1716
        %v1744 = vpack.c.b16 %v1719, %v1718
        %v1745 = vpack.c.b16 %v1721, %v1720
        %v1746 = vpack.c.b16 %v1723, %v1722
        %v1747 = vpack.c.b16 %v1725, %v1724
        %v1748 = vpack.c.b16 %v1727, %v1726
        %v1749 = vpack.c.b16 %v1729, %v1728
        %v1750 = vpack.c.b16 %v1731, %v1730
        %v1751 = vpack.c.b16 %v1733, %v1732
        %v1752 = vpack.c.b16 %v1735, %v1734
        %v1753 = vpack.c.b16 %v1737, %v1736
        %v1762 = vunpack.c.l.b16 %v1375
        %v1763 = vunpack.c.l.b16 %v1376
        %v1764 = vunpack.c.l.b16 %v1377
        %v1765 = vunpack.c.l.b16 %v1378
        %v1766 = vunpack.c.l.b16 %v1379
        %v1767 = vunpack.c.l.b16 %v1380
        %v1768 = vunpack.c.l.b16 %v1381
        %v1769 = vunpack.c.l.b16 %v1382
        %v1770 = vpack.c.b16 %v1763, %v1762
        %v1771 = vpack.c.b16 %v1765, %v1764
        %v1772 = vpack.c.b16 %v1767, %v1766
        %v1773 = vpack.c.b16 %v1769, %v1768
        %v1779 = vsel %vm1496, %v1738, 0
        %v1782 = vsel %vm1496, %v1739, 0
        %v1785 = vsel %vm1496, %v1740, 0
        %v1788 = vsel %vm1496, %v1741, 0
        %v1791 = vsel %vm1496, %v1742, 0
        %v1794 = vsel %vm1496, %v1743, 0
        %v1797 = vsel %vm1496, %v1744, 0
        %v1800 = vsel %vm1496, %v1745, 0
        %v1803 = vsel %vm1496, %v1746, 0
        %v1806 = vsel %vm1496, %v1747, 0
        %v1809 = vsel %vm1496, %v1748, 0
        %v1812 = vsel %vm1496, %v1749, 0
        %v1815 = vsel %vm1496, %v1750, 0
        %v1818 = vsel %vm1496, %v1751, 0
        %v1821 = vsel %vm1496, %v1752, 0
        %v1824 = vsel %vm1496, %v1753, 0
        %1826 = vmatprep.subr.bf16.mxu0 0
        %1827 = vmatpush1.bf16.msra.mxu0 0
        %1828 = vmatprep.subr.bf16.mxu0 0
        %1829 = vmatpush1.bf16.msra.mxu0 0
        %1830 = vmatprep.subr.bf16.mxu0 0
        %1831 = vmatpush1.bf16.msra.mxu0 0
        %1832 = vmatprep.subr.bf16.mxu0 0
        %1833 = vmatpush1.bf16.msra.mxu0 0
        %1834 = vmatprep.subr.bf16.mxu0 0
        %1835 = vmatpush1.bf16.msra.mxu0 %v1773
        %1836 = vmatprep.subr.bf16.mxu0 0
        %1837 = vmatpush1.bf16.msra.mxu0 %v1772
        %1838 = vmatprep.subr.bf16.mxu0 0
        %1839 = vmatpush1.bf16.msra.mxu0 %v1771
        %1840 = vmatprep.subr.bf16.mxu0 0
        %1841 = vmatpush1.bf16.msra.mxu0 %v1770
        %1842 = vmatprep.subr.bf16.mxu0 0
        %1843 = vmatpush2.bf16.msra.mxu0 0
        %1844 = vmatprep.subr.bf16.mxu0 0
        %1845 = vmatpush2.bf16.msra.mxu0 0
        %1846 = vmatprep.subr.bf16.mxu0 0
        %1847 = vmatpush2.bf16.msra.mxu0 0
        %1848 = vmatprep.subr.bf16.mxu0 0
        %1849 = vmatpush2.bf16.msra.mxu0 0
        %1850 = vmatprep.subr.bf16.mxu0 0
        %1851 = vmatpush2.bf16.msra.mxu0 0
        %1852 = vmatprep.subr.bf16.mxu0 0
        %1853 = vmatpush2.bf16.msra.mxu0 0
        %1854 = vmatprep.subr.bf16.mxu0 0
        %1855 = vmatpush2.bf16.msra.mxu0 0
        %1856 = vmatprep.subr.bf16.mxu0 0
        %1857 = vmatpush2.bf16.msra.mxu0 0
        %1858 = vmatprep.mubr.bf16.mxu0 0
        %1859 = vmatmul.mubr.bf16.gmra.mxu0 %v1779
        %v1860 = vpop.f32.mrf.mxu0
        %v1861 = vadd.f32 %v1580, %v1860
        %v1862 = vpop.f32.mrf.mxu0
        %v1863 = vpop.f32.mrf.mxu0
        %v1864 = vadd.f32 %v1583, %v1863
        %v1865 = vpop.f32.mrf.mxu0
        %1866 = vmatprep.mubr.bf16.mxu0 0
        %1867 = vmatmul.mubr.bf16.gmra.mxu0 %v1782
        %v1868 = vpop.f32.mrf.mxu0
        %v1869 = vadd.f32 %v1588, %v1868
        %v1870 = vpop.f32.mrf.mxu0
        %v1871 = vpop.f32.mrf.mxu0
        %v1872 = vadd.f32 %v1591, %v1871
        %v1873 = vpop.f32.mrf.mxu0
        %1874 = vmatprep.mubr.bf16.mxu0 0
        %1875 = vmatmul.mubr.bf16.gmra.mxu0 %v1785
        %v1876 = vpop.f32.mrf.mxu0
        %v1877 = vadd.f32 %v1596, %v1876
        %v1878 = vpop.f32.mrf.mxu0
        %v1879 = vpop.f32.mrf.mxu0
        %v1880 = vadd.f32 %v1599, %v1879
        %v1881 = vpop.f32.mrf.mxu0
        %1882 = vmatprep.mubr.bf16.mxu0 0
        %1883 = vmatmul.mubr.bf16.gmra.mxu0 %v1788
        %v1884 = vpop.f32.mrf.mxu0
        %v1885 = vadd.f32 %v1604, %v1884
        %v1886 = vpop.f32.mrf.mxu0
        %v1887 = vpop.f32.mrf.mxu0
        %v1888 = vadd.f32 %v1607, %v1887
        %v1889 = vpop.f32.mrf.mxu0
        %1890 = vmatprep.mubr.bf16.mxu0 0
        %1891 = vmatmul.mubr.bf16.gmra.mxu0 %v1791
        %v1892 = vpop.f32.mrf.mxu0
        %v1893 = vadd.f32 %v1612, %v1892
        %v1894 = vpop.f32.mrf.mxu0
        %v1895 = vpop.f32.mrf.mxu0
        %v1896 = vadd.f32 %v1615, %v1895
        %v1897 = vpop.f32.mrf.mxu0
        %1898 = vmatprep.mubr.bf16.mxu0 0
        %1899 = vmatmul.mubr.bf16.gmra.mxu0 %v1794
        %v1900 = vpop.f32.mrf.mxu0
        %v1901 = vadd.f32 %v1620, %v1900
        %v1902 = vpop.f32.mrf.mxu0
        %v1903 = vpop.f32.mrf.mxu0
        %v1904 = vadd.f32 %v1623, %v1903
        %v1905 = vpop.f32.mrf.mxu0
        %1906 = vmatprep.mubr.bf16.mxu0 0
        %1907 = vmatmul.mubr.bf16.gmra.mxu0 %v1797
        %v1908 = vpop.f32.mrf.mxu0
        %v1909 = vadd.f32 %v1628, %v1908
        %v1910 = vpop.f32.mrf.mxu0
        %v1911 = vpop.f32.mrf.mxu0
        %v1912 = vadd.f32 %v1631, %v1911
        %v1913 = vpop.f32.mrf.mxu0
        %1914 = vmatprep.mubr.bf16.mxu0 0
        %1915 = vmatmul.mubr.bf16.gmra.mxu0 %v1800
        %v1916 = vpop.f32.mrf.mxu0
        %v1917 = vadd.f32 %v1636, %v1916
        %v1918 = vpop.f32.mrf.mxu0
        %v1919 = vpop.f32.mrf.mxu0
        %v1920 = vadd.f32 %v1639, %v1919
        %v1921 = vpop.f32.mrf.mxu0
        %1922 = vmatprep.mubr.bf16.mxu0 0
        %1923 = vmatmul.mubr.bf16.gmra.mxu0 %v1803
        %v1924 = vpop.f32.mrf.mxu0
        %v1925 = vadd.f32 %v1644, %v1924
        %v1926 = vpop.f32.mrf.mxu0
        %v1927 = vpop.f32.mrf.mxu0
        %v1928 = vadd.f32 %v1647, %v1927
        %v1929 = vpop.f32.mrf.mxu0
        %1930 = vmatprep.mubr.bf16.mxu0 0
        %1931 = vmatmul.mubr.bf16.gmra.mxu0 %v1806
        %v1932 = vpop.f32.mrf.mxu0
        %v1933 = vadd.f32 %v1652, %v1932
        %v1934 = vpop.f32.mrf.mxu0
        %v1935 = vpop.f32.mrf.mxu0
        %v1936 = vadd.f32 %v1655, %v1935
        %v1937 = vpop.f32.mrf.mxu0
        %1938 = vmatprep.mubr.bf16.mxu0 0
        %1939 = vmatmul.mubr.bf16.gmra.mxu0 %v1809
        %v1940 = vpop.f32.mrf.mxu0
        %v1941 = vadd.f32 %v1660, %v1940
        %v1942 = vpop.f32.mrf.mxu0
        %v1943 = vpop.f32.mrf.mxu0
        %v1944 = vadd.f32 %v1663, %v1943
        %v1945 = vpop.f32.mrf.mxu0
        %1946 = vmatprep.mubr.bf16.mxu0 0
        %1947 = vmatmul.mubr.bf16.gmra.mxu0 %v1812
        %v1948 = vpop.f32.mrf.mxu0
        %v1949 = vadd.f32 %v1668, %v1948
        %v1950 = vpop.f32.mrf.mxu0
        %v1951 = vpop.f32.mrf.mxu0
        %v1952 = vadd.f32 %v1671, %v1951
        %v1953 = vpop.f32.mrf.mxu0
        %1954 = vmatprep.mubr.bf16.mxu0 0
        %1955 = vmatmul.mubr.bf16.gmra.mxu0 %v1815
        %v1956 = vpop.f32.mrf.mxu0
        %v1957 = vadd.f32 %v1676, %v1956
        %v1958 = vpop.f32.mrf.mxu0
        %v1959 = vpop.f32.mrf.mxu0
        %v1960 = vadd.f32 %v1679, %v1959
        %v1961 = vpop.f32.mrf.mxu0
        %1962 = vmatprep.mubr.bf16.mxu0 0
        %1963 = vmatmul.mubr.bf16.gmra.mxu0 %v1818
        %v1964 = vpop.f32.mrf.mxu0
        %v1965 = vadd.f32 %v1684, %v1964
        %v1966 = vpop.f32.mrf.mxu0
        %v1967 = vpop.f32.mrf.mxu0
        %v1968 = vadd.f32 %v1687, %v1967
        %v1969 = vpop.f32.mrf.mxu0
        %1970 = vmatprep.mubr.bf16.mxu0 0
        %1971 = vmatmul.mubr.bf16.gmra.mxu0 %v1821
        %v1972 = vpop.f32.mrf.mxu0
        %v1973 = vadd.f32 %v1692, %v1972
        %v1974 = vpop.f32.mrf.mxu0
        %v1975 = vpop.f32.mrf.mxu0
        %v1976 = vadd.f32 %v1695, %v1975
        %v1977 = vpop.f32.mrf.mxu0
        %1978 = vmatprep.mubr.bf16.mxu0 0
        %1979 = vmatmul.mubr.bf16.gmra.mxu0 %v1824
        %v1980 = vpop.f32.mrf.mxu0
        %v1981 = vadd.f32 %v1700, %v1980
        %v1982 = vpop.f32.mrf.mxu0
        %v1983 = vpop.f32.mrf.mxu0
        %v1984 = vadd.f32 %v1703, %v1983
        %v1985 = vpop.f32.mrf.mxu0
        %1986 = vdwg.mxu0
        %v1987 = vld [vmem:[#allocation2 + $0x4] sm:$0xf]
        %v1988 = vld [vmem:[#allocation2 + $0x8] sm:$0xf]
        %v1989 = vld [vmem:[#allocation2 + $0xc] sm:$0x1]
        %v1990 = vld [vmem:[#allocation2 + $0x14] sm:$0xf]
        %v1991 = vld [vmem:[#allocation2 + $0x18] sm:$0xf]
        %v1992 = vld [vmem:[#allocation2 + $0x1c] sm:$0x1]
        %v1993 = vld [vmem:[#allocation2 + $0x24] sm:$0xf]
        %v1994 = vld [vmem:[#allocation2 + $0x28] sm:$0xf]
        %v1995 = vld [vmem:[#allocation2 + $0x2c] sm:$0x1]
        %v1996 = vld [vmem:[#allocation2 + $0x34] sm:$0xf]
        %v1997 = vld [vmem:[#allocation2 + $0x38] sm:$0xf]
        %v1998 = vld [vmem:[#allocation2 + $0x3c] sm:$0x1]
        %v1999 = vld [vmem:[#allocation2 + $0x44] sm:$0xf]
        %v2000 = vld [vmem:[#allocation2 + $0x48] sm:$0xf]
        %v2001 = vld [vmem:[#allocation2 + $0x4c] sm:$0x1]
        %v2002 = vld [vmem:[#allocation2 + $0x54] sm:$0xf]
        %v2003 = vld [vmem:[#allocation2 + $0x58] sm:$0xf]
        %v2004 = vld [vmem:[#allocation2 + $0x5c] sm:$0x1]
        %v2005 = vld [vmem:[#allocation2 + $0x64] sm:$0xf]
        %v2006 = vld [vmem:[#allocation2 + $0x68] sm:$0xf]
        %v2007 = vld [vmem:[#allocation2 + $0x6c] sm:$0x1]
        %v2008 = vld [vmem:[#allocation2 + $0x74] sm:$0xf]
        %v2009 = vld [vmem:[#allocation2 + $0x78] sm:$0xf]
        %v2010 = vld [vmem:[#allocation2 + $0x7c] sm:$0x1]
        %v2011 = vld [vmem:[#allocation2 + $0x84] sm:$0xf]
        %v2012 = vld [vmem:[#allocation2 + $0x88] sm:$0xf]
        %v2013 = vld [vmem:[#allocation2 + $0x8c] sm:$0x1]
        %v2014 = vld [vmem:[#allocation2 + $0x94] sm:$0xf]
        %v2015 = vld [vmem:[#allocation2 + $0x98] sm:$0xf]
        %v2016 = vld [vmem:[#allocation2 + $0x9c] sm:$0x1]
        %v2017 = vld [vmem:[#allocation2 + $0xa4] sm:$0xf]
        %v2018 = vld [vmem:[#allocation2 + $0xa8] sm:$0xf]
        %v2019 = vld [vmem:[#allocation2 + $0xac] sm:$0x1]
        %v2020 = vld [vmem:[#allocation2 + $0xb4] sm:$0xf]
        %v2021 = vld [vmem:[#allocation2 + $0xb8] sm:$0xf]
        %v2022 = vld [vmem:[#allocation2 + $0xbc] sm:$0x1]
        %v2023 = vld [vmem:[#allocation2 + $0xc4] sm:$0xf]
        %v2024 = vld [vmem:[#allocation2 + $0xc8] sm:$0xf]
        %v2025 = vld [vmem:[#allocation2 + $0xcc] sm:$0x1]
        %v2026 = vld [vmem:[#allocation2 + $0xd4] sm:$0xf]
        %v2027 = vld [vmem:[#allocation2 + $0xd8] sm:$0xf]
        %v2028 = vld [vmem:[#allocation2 + $0xdc] sm:$0x1]
        %v2029 = vld [vmem:[#allocation2 + $0xe4] sm:$0xf]
        %v2030 = vld [vmem:[#allocation2 + $0xe8] sm:$0xf]
        %v2031 = vld [vmem:[#allocation2 + $0xec] sm:$0x1]
        %v2032 = vld [vmem:[#allocation2 + $0xf4] sm:$0xf]
        %v2033 = vld [vmem:[#allocation2 + $0xf8] sm:$0xf]
        %v2034 = vld [vmem:[#allocation2 + $0xfc] sm:$0x1]
        %vm2035 = vsmask.f32 3328
        %vm2036 = vsmask.f32 7440
        %vm2037 = vmor %vm2035, %vm2036
        %v2039 = vshrl.u32 %v1987, 16
        %v2041 = vrot.slane %v2039, 4
        %v2042 = vshll.u32 %v1987, 16
        %v2044 = vrot.slane %v2042, 5
        %v2045 = vor.u32 %v2041, %v2044
        %v2046 = vrot.slane %v2045, 4
        %v2048 = vshll.u32 %v1988, 16
        %v2050 = vrot.slane %v2048, 5
        %v2051 = vsel %vm2037, %v2046, %v2050
        %v2052 = vshrl.u32 %v1988, 16
        %v2054 = vrot.slane %v2052, 4
        %v2055 = vor.u32 %v2054, %v2050
        %v2056 = vrot.slane %v2055, 4
        %v2058 = vshll.u32 %v1989, 16
        %v2060 = vrot.slane %v2058, 5
        %v2061 = vsel %vm2037, %v2056, %v2060
        %v2063 = vshrl.u32 %v1990, 16
        %v2065 = vrot.slane %v2063, 4
        %v2066 = vshll.u32 %v1990, 16
        %v2068 = vrot.slane %v2066, 5
        %v2069 = vor.u32 %v2065, %v2068
        %v2070 = vrot.slane %v2069, 4
        %v2072 = vshll.u32 %v1991, 16
        %v2074 = vrot.slane %v2072, 5
        %v2075 = vsel %vm2037, %v2070, %v2074
        %v2076 = vshrl.u32 %v1991, 16
        %v2078 = vrot.slane %v2076, 4
        %v2079 = vor.u32 %v2078, %v2074
        %v2080 = vrot.slane %v2079, 4
        %v2082 = vshll.u32 %v1992, 16
        %v2084 = vrot.slane %v2082, 5
        %v2085 = vsel %vm2037, %v2080, %v2084
        %v2087 = vshrl.u32 %v1993, 16
        %v2089 = vrot.slane %v2087, 4
        %v2090 = vshll.u32 %v1993, 16
        %v2092 = vrot.slane %v2090, 5
        %v2093 = vor.u32 %v2089, %v2092
        %v2094 = vrot.slane %v2093, 4
        %v2096 = vshll.u32 %v1994, 16
        %v2098 = vrot.slane %v2096, 5
        %v2099 = vsel %vm2037, %v2094, %v2098
        %v2100 = vshrl.u32 %v1994, 16
        %v2102 = vrot.slane %v2100, 4
        %v2103 = vor.u32 %v2102, %v2098
        %v2104 = vrot.slane %v2103, 4
        %v2106 = vshll.u32 %v1995, 16
        %v2108 = vrot.slane %v2106, 5
        %v2109 = vsel %vm2037, %v2104, %v2108
        %v2111 = vshrl.u32 %v1996, 16
        %v2113 = vrot.slane %v2111, 4
        %v2114 = vshll.u32 %v1996, 16
        %v2116 = vrot.slane %v2114, 5
        %v2117 = vor.u32 %v2113, %v2116
        %v2118 = vrot.slane %v2117, 4
        %v2120 = vshll.u32 %v1997, 16
        %v2122 = vrot.slane %v2120, 5
        %v2123 = vsel %vm2037, %v2118, %v2122
        %v2124 = vshrl.u32 %v1997, 16
        %v2126 = vrot.slane %v2124, 4
        %v2127 = vor.u32 %v2126, %v2122
        %v2128 = vrot.slane %v2127, 4
        %v2130 = vshll.u32 %v1998, 16
        %v2132 = vrot.slane %v2130, 5
        %v2133 = vsel %vm2037, %v2128, %v2132
        %v2135 = vshrl.u32 %v1999, 16
        %v2137 = vrot.slane %v2135, 4
        %v2138 = vshll.u32 %v1999, 16
        %v2140 = vrot.slane %v2138, 5
        %v2141 = vor.u32 %v2137, %v2140
        %v2142 = vrot.slane %v2141, 4
        %v2144 = vshll.u32 %v2000, 16
        %v2146 = vrot.slane %v2144, 5
        %v2147 = vsel %vm2037, %v2142, %v2146
        %v2148 = vshrl.u32 %v2000, 16
        %v2150 = vrot.slane %v2148, 4
        %v2151 = vor.u32 %v2150, %v2146
        %v2152 = vrot.slane %v2151, 4
        %v2154 = vshll.u32 %v2001, 16
        %v2156 = vrot.slane %v2154, 5
        %v2157 = vsel %vm2037, %v2152, %v2156
        %v2159 = vshrl.u32 %v2002, 16
        %v2161 = vrot.slane %v2159, 4
        %v2162 = vshll.u32 %v2002, 16
        %v2164 = vrot.slane %v2162, 5
        %v2165 = vor.u32 %v2161, %v2164
        %v2166 = vrot.slane %v2165, 4
        %v2168 = vshll.u32 %v2003, 16
        %v2170 = vrot.slane %v2168, 5
        %v2171 = vsel %vm2037, %v2166, %v2170
        %v2172 = vshrl.u32 %v2003, 16
        %v2174 = vrot.slane %v2172, 4
        %v2175 = vor.u32 %v2174, %v2170
        %v2176 = vrot.slane %v2175, 4
        %v2178 = vshll.u32 %v2004, 16
        %v2180 = vrot.slane %v2178, 5
        %v2181 = vsel %vm2037, %v2176, %v2180
        %v2183 = vshrl.u32 %v2005, 16
        %v2185 = vrot.slane %v2183, 4
        %v2186 = vshll.u32 %v2005, 16
        %v2188 = vrot.slane %v2186, 5
        %v2189 = vor.u32 %v2185, %v2188
        %v2190 = vrot.slane %v2189, 4
        %v2192 = vshll.u32 %v2006, 16
        %v2194 = vrot.slane %v2192, 5
        %v2195 = vsel %vm2037, %v2190, %v2194
        %v2196 = vshrl.u32 %v2006, 16
        %v2198 = vrot.slane %v2196, 4
        %v2199 = vor.u32 %v2198, %v2194
        %v2200 = vrot.slane %v2199, 4
        %v2202 = vshll.u32 %v2007, 16
        %v2204 = vrot.slane %v2202, 5
        %v2205 = vsel %vm2037, %v2200, %v2204
        %v2207 = vshrl.u32 %v2008, 16
        %v2209 = vrot.slane %v2207, 4
        %v2210 = vshll.u32 %v2008, 16
        %v2212 = vrot.slane %v2210, 5
        %v2213 = vor.u32 %v2209, %v2212
        %v2214 = vrot.slane %v2213, 4
        %v2216 = vshll.u32 %v2009, 16
        %v2218 = vrot.slane %v2216, 5
        %v2219 = vsel %vm2037, %v2214, %v2218
        %v2220 = vshrl.u32 %v2009, 16
        %v2222 = vrot.slane %v2220, 4
        %v2223 = vor.u32 %v2222, %v2218
        %v2224 = vrot.slane %v2223, 4
        %v2226 = vshll.u32 %v2010, 16
        %v2228 = vrot.slane %v2226, 5
        %v2229 = vsel %vm2037, %v2224, %v2228
        %v2231 = vshrl.u32 %v2011, 16
        %v2233 = vrot.slane %v2231, 4
        %v2234 = vshll.u32 %v2011, 16
        %v2236 = vrot.slane %v2234, 5
        %v2237 = vor.u32 %v2233, %v2236
        %v2238 = vrot.slane %v2237, 4
        %v2240 = vshll.u32 %v2012, 16
        %v2242 = vrot.slane %v2240, 5
        %v2243 = vsel %vm2037, %v2238, %v2242
        %v2244 = vshrl.u32 %v2012, 16
        %v2246 = vrot.slane %v2244, 4
        %v2247 = vor.u32 %v2246, %v2242
        %v2248 = vrot.slane %v2247, 4
        %v2250 = vshll.u32 %v2013, 16
        %v2252 = vrot.slane %v2250, 5
        %v2253 = vsel %vm2037, %v2248, %v2252
        %v2255 = vshrl.u32 %v2014, 16
        %v2257 = vrot.slane %v2255, 4
        %v2258 = vshll.u32 %v2014, 16
        %v2260 = vrot.slane %v2258, 5
        %v2261 = vor.u32 %v2257, %v2260
        %v2262 = vrot.slane %v2261, 4
        %v2264 = vshll.u32 %v2015, 16
        %v2266 = vrot.slane %v2264, 5
        %v2267 = vsel %vm2037, %v2262, %v2266
        %v2268 = vshrl.u32 %v2015, 16
        %v2270 = vrot.slane %v2268, 4
        %v2271 = vor.u32 %v2270, %v2266
        %v2272 = vrot.slane %v2271, 4
        %v2274 = vshll.u32 %v2016, 16
        %v2276 = vrot.slane %v2274, 5
        %v2277 = vsel %vm2037, %v2272, %v2276
        %v2279 = vshrl.u32 %v2017, 16
        %v2281 = vrot.slane %v2279, 4
        %v2282 = vshll.u32 %v2017, 16
        %v2284 = vrot.slane %v2282, 5
        %v2285 = vor.u32 %v2281, %v2284
        %v2286 = vrot.slane %v2285, 4
        %v2288 = vshll.u32 %v2018, 16
        %v2290 = vrot.slane %v2288, 5
        %v2291 = vsel %vm2037, %v2286, %v2290
        %v2292 = vshrl.u32 %v2018, 16
        %v2294 = vrot.slane %v2292, 4
        %v2295 = vor.u32 %v2294, %v2290
        %v2296 = vrot.slane %v2295, 4
        %v2298 = vshll.u32 %v2019, 16
        %v2300 = vrot.slane %v2298, 5
        %v2301 = vsel %vm2037, %v2296, %v2300
        %v2303 = vshrl.u32 %v2020, 16
        %v2305 = vrot.slane %v2303, 4
        %v2306 = vshll.u32 %v2020, 16
        %v2308 = vrot.slane %v2306, 5
        %v2309 = vor.u32 %v2305, %v2308
        %v2310 = vrot.slane %v2309, 4
        %v2312 = vshll.u32 %v2021, 16
        %v2314 = vrot.slane %v2312, 5
        %v2315 = vsel %vm2037, %v2310, %v2314
        %v2316 = vshrl.u32 %v2021, 16
        %v2318 = vrot.slane %v2316, 4
        %v2319 = vor.u32 %v2318, %v2314
        %v2320 = vrot.slane %v2319, 4
        %v2322 = vshll.u32 %v2022, 16
        %v2324 = vrot.slane %v2322, 5
        %v2325 = vsel %vm2037, %v2320, %v2324
        %v2327 = vshrl.u32 %v2023, 16
        %v2329 = vrot.slane %v2327, 4
        %v2330 = vshll.u32 %v2023, 16
        %v2332 = vrot.slane %v2330, 5
        %v2333 = vor.u32 %v2329, %v2332
        %v2334 = vrot.slane %v2333, 4
        %v2336 = vshll.u32 %v2024, 16
        %v2338 = vrot.slane %v2336, 5
        %v2339 = vsel %vm2037, %v2334, %v2338
        %v2340 = vshrl.u32 %v2024, 16
        %v2342 = vrot.slane %v2340, 4
        %v2343 = vor.u32 %v2342, %v2338
        %v2344 = vrot.slane %v2343, 4
        %v2346 = vshll.u32 %v2025, 16
        %v2348 = vrot.slane %v2346, 5
        %v2349 = vsel %vm2037, %v2344, %v2348
        %v2351 = vshrl.u32 %v2026, 16
        %v2353 = vrot.slane %v2351, 4
        %v2354 = vshll.u32 %v2026, 16
        %v2356 = vrot.slane %v2354, 5
        %v2357 = vor.u32 %v2353, %v2356
        %v2358 = vrot.slane %v2357, 4
        %v2360 = vshll.u32 %v2027, 16
        %v2362 = vrot.slane %v2360, 5
        %v2363 = vsel %vm2037, %v2358, %v2362
        %v2364 = vshrl.u32 %v2027, 16
        %v2366 = vrot.slane %v2364, 4
        %v2367 = vor.u32 %v2366, %v2362
        %v2368 = vrot.slane %v2367, 4
        %v2370 = vshll.u32 %v2028, 16
        %v2372 = vrot.slane %v2370, 5
        %v2373 = vsel %vm2037, %v2368, %v2372
        %v2375 = vshrl.u32 %v2029, 16
        %v2377 = vrot.slane %v2375, 4
        %v2378 = vshll.u32 %v2029, 16
        %v2380 = vrot.slane %v2378, 5
        %v2381 = vor.u32 %v2377, %v2380
        %v2382 = vrot.slane %v2381, 4
        %v2384 = vshll.u32 %v2030, 16
        %v2386 = vrot.slane %v2384, 5
        %v2387 = vsel %vm2037, %v2382, %v2386
        %v2388 = vshrl.u32 %v2030, 16
        %v2390 = vrot.slane %v2388, 4
        %v2391 = vor.u32 %v2390, %v2386
        %v2392 = vrot.slane %v2391, 4
        %v2394 = vshll.u32 %v2031, 16
        %v2396 = vrot.slane %v2394, 5
        %v2397 = vsel %vm2037, %v2392, %v2396
        %v2399 = vshrl.u32 %v2032, 16
        %v2401 = vrot.slane %v2399, 4
        %v2402 = vshll.u32 %v2032, 16
        %v2404 = vrot.slane %v2402, 5
        %v2405 = vor.u32 %v2401, %v2404
        %v2406 = vrot.slane %v2405, 4
        %v2408 = vshll.u32 %v2033, 16
        %v2410 = vrot.slane %v2408, 5
        %v2411 = vsel %vm2037, %v2406, %v2410
        %v2412 = vshrl.u32 %v2033, 16
        %v2414 = vrot.slane %v2412, 4
        %v2415 = vor.u32 %v2414, %v2410
        %v2416 = vrot.slane %v2415, 4
        %v2418 = vshll.u32 %v2034, 16
        %v2420 = vrot.slane %v2418, 5
        %v2421 = vsel %vm2037, %v2416, %v2420
        %s2422 = scalar_lea.vmem [#allocation9], 64
        %v2423 = vld [vmem:[%s2422] sm:$0xf]
        %v2424 = vld [vmem:[%s2422 + $0x4] sm:$0xf]
        %v2425 = vld [vmem:[%s2422 + $0x8] sm:$0xf]
        %v2426 = vld [vmem:[%s2422 + $0xc] sm:$0xf]
        %v2427 = vld [vmem:[%s2422 + $0x10] sm:$0xf]
        %v2428 = vld [vmem:[%s2422 + $0x14] sm:$0xf]
        %v2429 = vld [vmem:[%s2422 + $0x18] sm:$0xf]
        %v2430 = vld [vmem:[%s2422 + $0x1c] sm:$0xf]
        %v2431 = vunpack.c.l.b16 %v2051
        %v2432 = vunpack.c.l.b16 %v2061
        %v2433 = vunpack.c.l.b16 %v2075
        %v2434 = vunpack.c.l.b16 %v2085
        %v2435 = vunpack.c.l.b16 %v2099
        %v2436 = vunpack.c.l.b16 %v2109
        %v2437 = vunpack.c.l.b16 %v2123
        %v2438 = vunpack.c.l.b16 %v2133
        %v2439 = vunpack.c.l.b16 %v2147
        %v2440 = vunpack.c.l.b16 %v2157
        %v2441 = vunpack.c.l.b16 %v2171
        %v2442 = vunpack.c.l.b16 %v2181
        %v2443 = vunpack.c.l.b16 %v2195
        %v2444 = vunpack.c.l.b16 %v2205
        %v2445 = vunpack.c.l.b16 %v2219
        %v2446 = vunpack.c.l.b16 %v2229
        %v2447 = vunpack.c.l.b16 %v2243
        %v2448 = vunpack.c.l.b16 %v2253
        %v2449 = vunpack.c.l.b16 %v2267
        %v2450 = vunpack.c.l.b16 %v2277
        %v2451 = vunpack.c.l.b16 %v2291
        %v2452 = vunpack.c.l.b16 %v2301
        %v2453 = vunpack.c.l.b16 %v2315
        %v2454 = vunpack.c.l.b16 %v2325
        %v2455 = vunpack.c.l.b16 %v2339
        %v2456 = vunpack.c.l.b16 %v2349
        %v2457 = vunpack.c.l.b16 %v2363
        %v2458 = vunpack.c.l.b16 %v2373
        %v2459 = vunpack.c.l.b16 %v2387
        %v2460 = vunpack.c.l.b16 %v2397
        %v2461 = vunpack.c.l.b16 %v2411
        %v2462 = vunpack.c.l.b16 %v2421
        %v2463 = vpack.c.b16 %v2432, %v2431
        %v2464 = vpack.c.b16 %v2434, %v2433
        %v2465 = vpack.c.b16 %v2436, %v2435
        %v2466 = vpack.c.b16 %v2438, %v2437
        %v2467 = vpack.c.b16 %v2440, %v2439
        %v2468 = vpack.c.b16 %v2442, %v2441
        %v2469 = vpack.c.b16 %v2444, %v2443
        %v2470 = vpack.c.b16 %v2446, %v2445
        %v2471 = vpack.c.b16 %v2448, %v2447
        %v2472 = vpack.c.b16 %v2450, %v2449
        %v2473 = vpack.c.b16 %v2452, %v2451
        %v2474 = vpack.c.b16 %v2454, %v2453
        %v2475 = vpack.c.b16 %v2456, %v2455
        %v2476 = vpack.c.b16 %v2458, %v2457
        %v2477 = vpack.c.b16 %v2460, %v2459
        %v2478 = vpack.c.b16 %v2462, %v2461
        %v2487 = vunpack.c.l.b16 %v2423
        %v2488 = vunpack.c.l.b16 %v2424
        %v2489 = vunpack.c.l.b16 %v2425
        %v2490 = vunpack.c.l.b16 %v2426
        %v2491 = vunpack.c.l.b16 %v2427
        %v2492 = vunpack.c.l.b16 %v2428
        %v2493 = vunpack.c.l.b16 %v2429
        %v2494 = vunpack.c.l.b16 %v2430
        %v2495 = vpack.c.b16 %v2488, %v2487
        %v2496 = vpack.c.b16 %v2490, %v2489
        %v2497 = vpack.c.b16 %v2492, %v2491
        %v2498 = vpack.c.b16 %v2494, %v2493
        %v2504 = vsel %vm1496, %v2463, 0
        %v2507 = vsel %vm1496, %v2464, 0
        %v2510 = vsel %vm1496, %v2465, 0
        %v2513 = vsel %vm1496, %v2466, 0
        %v2516 = vsel %vm1496, %v2467, 0
        %v2519 = vsel %vm1496, %v2468, 0
        %v2522 = vsel %vm1496, %v2469, 0
        %v2525 = vsel %vm1496, %v2470, 0
        %v2528 = vsel %vm1496, %v2471, 0
        %v2531 = vsel %vm1496, %v2472, 0
        %v2534 = vsel %vm1496, %v2473, 0
        %v2537 = vsel %vm1496, %v2474, 0
        %v2540 = vsel %vm1496, %v2475, 0
        %v2543 = vsel %vm1496, %v2476, 0
        %v2546 = vsel %vm1496, %v2477, 0
        %v2549 = vsel %vm1496, %v2478, 0
        %2551 = vmatprep.subr.bf16.mxu0 0
        %2552 = vmatpush1.bf16.msra.mxu0 0
        %2553 = vmatprep.subr.bf16.mxu0 0
        %2554 = vmatpush1.bf16.msra.mxu0 0
        %2555 = vmatprep.subr.bf16.mxu0 0
        %2556 = vmatpush1.bf16.msra.mxu0 0
        %2557 = vmatprep.subr.bf16.mxu0 0
        %2558 = vmatpush1.bf16.msra.mxu0 0
        %2559 = vmatprep.subr.bf16.mxu0 0
        %2560 = vmatpush1.bf16.msra.mxu0 %v2498
        %2561 = vmatprep.subr.bf16.mxu0 0
        %2562 = vmatpush1.bf16.msra.mxu0 %v2497
        %2563 = vmatprep.subr.bf16.mxu0 0
        %2564 = vmatpush1.bf16.msra.mxu0 %v2496
        %2565 = vmatprep.subr.bf16.mxu0 0
        %2566 = vmatpush1.bf16.msra.mxu0 %v2495
        %2567 = vmatprep.subr.bf16.mxu0 0
        %2568 = vmatpush2.bf16.msra.mxu0 0
        %2569 = vmatprep.subr.bf16.mxu0 0
        %2570 = vmatpush2.bf16.msra.mxu0 0
        %2571 = vmatprep.subr.bf16.mxu0 0
        %2572 = vmatpush2.bf16.msra.mxu0 0
        %2573 = vmatprep.subr.bf16.mxu0 0
        %2574 = vmatpush2.bf16.msra.mxu0 0
        %2575 = vmatprep.subr.bf16.mxu0 0
        %2576 = vmatpush2.bf16.msra.mxu0 0
        %2577 = vmatprep.subr.bf16.mxu0 0
        %2578 = vmatpush2.bf16.msra.mxu0 0
        %2579 = vmatprep.subr.bf16.mxu0 0
        %2580 = vmatpush2.bf16.msra.mxu0 0
        %2581 = vmatprep.subr.bf16.mxu0 0
        %2582 = vmatpush2.bf16.msra.mxu0 0
        %2583 = vmatprep.mubr.bf16.mxu0 0
        %2584 = vmatmul.mubr.bf16.gmra.mxu0 %v2504
        %v2585 = vpop.f32.mrf.mxu0
        %v2586 = vadd.f32 0.0, %v2585
        %v2587 = vpop.f32.mrf.mxu0
        %v2588 = vpop.f32.mrf.mxu0
        %v2589 = vadd.f32 0.0, %v2588
        %v2590 = vpop.f32.mrf.mxu0
        %2591 = vmatprep.mubr.bf16.mxu0 0
        %2592 = vmatmul.mubr.bf16.gmra.mxu0 %v2507
        %v2593 = vpop.f32.mrf.mxu0
        %v2594 = vadd.f32 0.0, %v2593
        %v2595 = vpop.f32.mrf.mxu0
        %v2596 = vpop.f32.mrf.mxu0
        %v2597 = vadd.f32 0.0, %v2596
        %v2598 = vpop.f32.mrf.mxu0
        %2599 = vmatprep.mubr.bf16.mxu0 0
        %2600 = vmatmul.mubr.bf16.gmra.mxu0 %v2510
        %v2601 = vpop.f32.mrf.mxu0
        %v2602 = vadd.f32 0.0, %v2601
        %v2603 = vpop.f32.mrf.mxu0
        %v2604 = vpop.f32.mrf.mxu0
        %v2605 = vadd.f32 0.0, %v2604
        %v2606 = vpop.f32.mrf.mxu0
        %2607 = vmatprep.mubr.bf16.mxu0 0
        %2608 = vmatmul.mubr.bf16.gmra.mxu0 %v2513
        %v2609 = vpop.f32.mrf.mxu0
        %v2610 = vadd.f32 0.0, %v2609
        %v2611 = vpop.f32.mrf.mxu0
        %v2612 = vpop.f32.mrf.mxu0
        %v2613 = vadd.f32 0.0, %v2612
        %v2614 = vpop.f32.mrf.mxu0
        %2615 = vmatprep.mubr.bf16.mxu0 0
        %2616 = vmatmul.mubr.bf16.gmra.mxu0 %v2516
        %v2617 = vpop.f32.mrf.mxu0
        %v2618 = vadd.f32 0.0, %v2617
        %v2619 = vpop.f32.mrf.mxu0
        %v2620 = vpop.f32.mrf.mxu0
        %v2621 = vadd.f32 0.0, %v2620
        %v2622 = vpop.f32.mrf.mxu0
        %2623 = vmatprep.mubr.bf16.mxu0 0
        %2624 = vmatmul.mubr.bf16.gmra.mxu0 %v2519
        %v2625 = vpop.f32.mrf.mxu0
        %v2626 = vadd.f32 0.0, %v2625
        %v2627 = vpop.f32.mrf.mxu0
        %v2628 = vpop.f32.mrf.mxu0
        %v2629 = vadd.f32 0.0, %v2628
        %v2630 = vpop.f32.mrf.mxu0
        %2631 = vmatprep.mubr.bf16.mxu0 0
        %2632 = vmatmul.mubr.bf16.gmra.mxu0 %v2522
        %v2633 = vpop.f32.mrf.mxu0
        %v2634 = vadd.f32 0.0, %v2633
        %v2635 = vpop.f32.mrf.mxu0
        %v2636 = vpop.f32.mrf.mxu0
        %v2637 = vadd.f32 0.0, %v2636
        %v2638 = vpop.f32.mrf.mxu0
        %2639 = vmatprep.mubr.bf16.mxu0 0
        %2640 = vmatmul.mubr.bf16.gmra.mxu0 %v2525
        %v2641 = vpop.f32.mrf.mxu0
        %v2642 = vadd.f32 0.0, %v2641
        %v2643 = vpop.f32.mrf.mxu0
        %v2644 = vpop.f32.mrf.mxu0
        %v2645 = vadd.f32 0.0, %v2644
        %v2646 = vpop.f32.mrf.mxu0
        %2647 = vmatprep.mubr.bf16.mxu0 0
        %2648 = vmatmul.mubr.bf16.gmra.mxu0 %v2528
        %v2649 = vpop.f32.mrf.mxu0
        %v2650 = vadd.f32 0.0, %v2649
        %v2651 = vpop.f32.mrf.mxu0
        %v2652 = vpop.f32.mrf.mxu0
        %v2653 = vadd.f32 0.0, %v2652
        %v2654 = vpop.f32.mrf.mxu0
        %2655 = vmatprep.mubr.bf16.mxu0 0
        %2656 = vmatmul.mubr.bf16.gmra.mxu0 %v2531
        %v2657 = vpop.f32.mrf.mxu0
        %v2658 = vadd.f32 0.0, %v2657
        %v2659 = vpop.f32.mrf.mxu0
        %v2660 = vpop.f32.mrf.mxu0
        %v2661 = vadd.f32 0.0, %v2660
        %v2662 = vpop.f32.mrf.mxu0
        %2663 = vmatprep.mubr.bf16.mxu0 0
        %2664 = vmatmul.mubr.bf16.gmra.mxu0 %v2534
        %v2665 = vpop.f32.mrf.mxu0
        %v2666 = vadd.f32 0.0, %v2665
        %v2667 = vpop.f32.mrf.mxu0
        %v2668 = vpop.f32.mrf.mxu0
        %v2669 = vadd.f32 0.0, %v2668
        %v2670 = vpop.f32.mrf.mxu0
        %2671 = vmatprep.mubr.bf16.mxu0 0
        %2672 = vmatmul.mubr.bf16.gmra.mxu0 %v2537
        %v2673 = vpop.f32.mrf.mxu0
        %v2674 = vadd.f32 0.0, %v2673
        %v2675 = vpop.f32.mrf.mxu0
        %v2676 = vpop.f32.mrf.mxu0
        %v2677 = vadd.f32 0.0, %v2676
        %v2678 = vpop.f32.mrf.mxu0
        %2679 = vmatprep.mubr.bf16.mxu0 0
        %2680 = vmatmul.mubr.bf16.gmra.mxu0 %v2540
        %v2681 = vpop.f32.mrf.mxu0
        %v2682 = vadd.f32 0.0, %v2681
        %v2683 = vpop.f32.mrf.mxu0
        %v2684 = vpop.f32.mrf.mxu0
        %v2685 = vadd.f32 0.0, %v2684
        %v2686 = vpop.f32.mrf.mxu0
        %2687 = vmatprep.mubr.bf16.mxu0 0
        %2688 = vmatmul.mubr.bf16.gmra.mxu0 %v2543
        %v2689 = vpop.f32.mrf.mxu0
        %v2690 = vadd.f32 0.0, %v2689
        %v2691 = vpop.f32.mrf.mxu0
        %v2692 = vpop.f32.mrf.mxu0
        %v2693 = vadd.f32 0.0, %v2692
        %v2694 = vpop.f32.mrf.mxu0
        %2695 = vmatprep.mubr.bf16.mxu0 0
        %2696 = vmatmul.mubr.bf16.gmra.mxu0 %v2546
        %v2697 = vpop.f32.mrf.mxu0
        %v2698 = vadd.f32 0.0, %v2697
        %v2699 = vpop.f32.mrf.mxu0
        %v2700 = vpop.f32.mrf.mxu0
        %v2701 = vadd.f32 0.0, %v2700
        %v2702 = vpop.f32.mrf.mxu0
        %2703 = vmatprep.mubr.bf16.mxu0 0
        %2704 = vmatmul.mubr.bf16.gmra.mxu0 %v2549
        %v2705 = vpop.f32.mrf.mxu0
        %v2706 = vadd.f32 0.0, %v2705
        %v2707 = vpop.f32.mrf.mxu0
        %v2708 = vpop.f32.mrf.mxu0
        %v2709 = vadd.f32 0.0, %v2708
        %v2710 = vpop.f32.mrf.mxu0
        %2711 = vdwg.mxu0
        %v2712 = vadd.f32 %v1861, %v2586
        %v2713 = vadd.f32 %v1864, %v2589
        %v2714 = vadd.f32 %v1869, %v2594
        %v2715 = vadd.f32 %v1872, %v2597
        %v2716 = vadd.f32 %v1877, %v2602
        %v2717 = vadd.f32 %v1880, %v2605
        %v2718 = vadd.f32 %v1885, %v2610
        %v2719 = vadd.f32 %v1888, %v2613
        %v2720 = vadd.f32 %v1893, %v2618
        %v2721 = vadd.f32 %v1896, %v2621
        %v2722 = vadd.f32 %v1901, %v2626
        %v2723 = vadd.f32 %v1904, %v2629
        %v2724 = vadd.f32 %v1909, %v2634
        %v2725 = vadd.f32 %v1912, %v2637
        %v2726 = vadd.f32 %v1917, %v2642
        %v2727 = vadd.f32 %v1920, %v2645
        %v2728 = vadd.f32 %v1925, %v2650
        %v2729 = vadd.f32 %v1928, %v2653
        %v2730 = vadd.f32 %v1933, %v2658
        %v2731 = vadd.f32 %v1936, %v2661
        %v2732 = vadd.f32 %v1941, %v2666
        %v2733 = vadd.f32 %v1944, %v2669
        %v2734 = vadd.f32 %v1949, %v2674
        %v2735 = vadd.f32 %v1952, %v2677
        %v2736 = vadd.f32 %v1957, %v2682
        %v2737 = vadd.f32 %v1960, %v2685
        %v2738 = vadd.f32 %v1965, %v2690
        %v2739 = vadd.f32 %v1968, %v2693
        %v2740 = vadd.f32 %v1973, %v2698
        %v2741 = vadd.f32 %v1976, %v2701
        %v2742 = vadd.f32 %v1981, %v2706
        %v2743 = vadd.f32 %v1984, %v2709
        %v2744 = vld [vmem:[%s940] sm:$0x8]
        %v2745 = vld [vmem:[%s940 + $0x4] sm:$0xf]
        %v2746 = vld [vmem:[%s940 + $0x8] sm:$0xf]
        %v2747 = vld [vmem:[%s940 + $0x10] sm:$0x8]
        %v2748 = vld [vmem:[%s940 + $0x14] sm:$0xf]
        %v2749 = vld [vmem:[%s940 + $0x18] sm:$0xf]
        %v2750 = vld [vmem:[%s940 + $0x20] sm:$0x8]
        %v2751 = vld [vmem:[%s940 + $0x24] sm:$0xf]
        %v2752 = vld [vmem:[%s940 + $0x28] sm:$0xf]
        %v2753 = vld [vmem:[%s940 + $0x30] sm:$0x8]
        %v2754 = vld [vmem:[%s940 + $0x34] sm:$0xf]
        %v2755 = vld [vmem:[%s940 + $0x38] sm:$0xf]
        %v2756 = vld [vmem:[%s940 + $0x40] sm:$0x8]
        %v2757 = vld [vmem:[%s940 + $0x44] sm:$0xf]
        %v2758 = vld [vmem:[%s940 + $0x48] sm:$0xf]
        %v2759 = vld [vmem:[%s940 + $0x50] sm:$0x8]
        %v2760 = vld [vmem:[%s940 + $0x54] sm:$0xf]
        %v2761 = vld [vmem:[%s940 + $0x58] sm:$0xf]
        %v2762 = vld [vmem:[%s940 + $0x60] sm:$0x8]
        %v2763 = vld [vmem:[%s940 + $0x64] sm:$0xf]
        %v2764 = vld [vmem:[%s940 + $0x68] sm:$0xf]
        %v2765 = vld [vmem:[%s940 + $0x70] sm:$0x8]
        %v2766 = vld [vmem:[%s940 + $0x74] sm:$0xf]
        %v2767 = vld [vmem:[%s940 + $0x78] sm:$0xf]
        %v2768 = vld [vmem:[%s940 + $0x80] sm:$0x8]
        %v2769 = vld [vmem:[%s940 + $0x84] sm:$0xf]
        %v2770 = vld [vmem:[%s940 + $0x88] sm:$0xf]
        %v2771 = vld [vmem:[%s940 + $0x90] sm:$0x8]
        %v2772 = vld [vmem:[%s940 + $0x94] sm:$0xf]
        %v2773 = vld [vmem:[%s940 + $0x98] sm:$0xf]
        %v2774 = vld [vmem:[%s940 + $0xa0] sm:$0x8]
        %v2775 = vld [vmem:[%s940 + $0xa4] sm:$0xf]
        %v2776 = vld [vmem:[%s940 + $0xa8] sm:$0xf]
        %v2777 = vld [vmem:[%s940 + $0xb0] sm:$0x8]
        %v2778 = vld [vmem:[%s940 + $0xb4] sm:$0xf]
        %v2779 = vld [vmem:[%s940 + $0xb8] sm:$0xf]
        %v2780 = vld [vmem:[%s940 + $0xc0] sm:$0x8]
        %v2781 = vld [vmem:[%s940 + $0xc4] sm:$0xf]
        %v2782 = vld [vmem:[%s940 + $0xc8] sm:$0xf]
        %v2783 = vld [vmem:[%s940 + $0xd0] sm:$0x8]
        %v2784 = vld [vmem:[%s940 + $0xd4] sm:$0xf]
        %v2785 = vld [vmem:[%s940 + $0xd8] sm:$0xf]
        %v2786 = vld [vmem:[%s940 + $0xe0] sm:$0x8]
        %v2787 = vld [vmem:[%s940 + $0xe4] sm:$0xf]
        %v2788 = vld [vmem:[%s940 + $0xe8] sm:$0xf]
        %v2789 = vld [vmem:[%s940 + $0xf0] sm:$0x8]
        %v2790 = vld [vmem:[%s940 + $0xf4] sm:$0xf]
        %v2791 = vld [vmem:[%s940 + $0xf8] sm:$0xf]
        %v2793 = vshrl.u32 %v2744, 16
        %v2795 = vrot.slane %v2793, 7
        %v2796 = vrot.slane %v2795, 4
        %v2798 = vshrl.u32 %v2745, 16
        %v2800 = vrot.slane %v2798, 7
        %v2801 = vshll.u32 %v2745, 16
        %v2803 = vor.u32 %v2800, %v2801
        %v2804 = vsel %vm1022, %v2796, %v2803
        %v2805 = vrot.slane %v2800, 4
        %v2807 = vshrl.u32 %v2746, 16
        %v2809 = vrot.slane %v2807, 7
        %v2810 = vshll.u32 %v2746, 16
        %v2812 = vor.u32 %v2809, %v2810
        %v2813 = vsel %vm1022, %v2805, %v2812
        %v2815 = vshrl.u32 %v2747, 16
        %v2817 = vrot.slane %v2815, 7
        %v2818 = vrot.slane %v2817, 4
        %v2820 = vshrl.u32 %v2748, 16
        %v2822 = vrot.slane %v2820, 7
        %v2823 = vshll.u32 %v2748, 16
        %v2825 = vor.u32 %v2822, %v2823
        %v2826 = vsel %vm1022, %v2818, %v2825
        %v2827 = vrot.slane %v2822, 4
        %v2829 = vshrl.u32 %v2749, 16
        %v2831 = vrot.slane %v2829, 7
        %v2832 = vshll.u32 %v2749, 16
        %v2834 = vor.u32 %v2831, %v2832
        %v2835 = vsel %vm1022, %v2827, %v2834
        %v2837 = vshrl.u32 %v2750, 16
        %v2839 = vrot.slane %v2837, 7
        %v2840 = vrot.slane %v2839, 4
        %v2842 = vshrl.u32 %v2751, 16
        %v2844 = vrot.slane %v2842, 7
        %v2845 = vshll.u32 %v2751, 16
        %v2847 = vor.u32 %v2844, %v2845
        %v2848 = vsel %vm1022, %v2840, %v2847
        %v2849 = vrot.slane %v2844, 4
        %v2851 = vshrl.u32 %v2752, 16
        %v2853 = vrot.slane %v2851, 7
        %v2854 = vshll.u32 %v2752, 16
        %v2856 = vor.u32 %v2853, %v2854
        %v2857 = vsel %vm1022, %v2849, %v2856
        %v2859 = vshrl.u32 %v2753, 16
        %v2861 = vrot.slane %v2859, 7
        %v2862 = vrot.slane %v2861, 4
        %v2864 = vshrl.u32 %v2754, 16
        %v2866 = vrot.slane %v2864, 7
        %v2867 = vshll.u32 %v2754, 16
        %v2869 = vor.u32 %v2866, %v2867
        %v2870 = vsel %vm1022, %v2862, %v2869
        %v2871 = vrot.slane %v2866, 4
        %v2873 = vshrl.u32 %v2755, 16
        %v2875 = vrot.slane %v2873, 7
        %v2876 = vshll.u32 %v2755, 16
        %v2878 = vor.u32 %v2875, %v2876
        %v2879 = vsel %vm1022, %v2871, %v2878
        %v2881 = vshrl.u32 %v2756, 16
        %v2883 = vrot.slane %v2881, 7
        %v2884 = vrot.slane %v2883, 4
        %v2886 = vshrl.u32 %v2757, 16
        %v2888 = vrot.slane %v2886, 7
        %v2889 = vshll.u32 %v2757, 16
        %v2891 = vor.u32 %v2888, %v2889
        %v2892 = vsel %vm1022, %v2884, %v2891
        %v2893 = vrot.slane %v2888, 4
        %v2895 = vshrl.u32 %v2758, 16
        %v2897 = vrot.slane %v2895, 7
        %v2898 = vshll.u32 %v2758, 16
        %v2900 = vor.u32 %v2897, %v2898
        %v2901 = vsel %vm1022, %v2893, %v2900
        %v2903 = vshrl.u32 %v2759, 16
        %v2905 = vrot.slane %v2903, 7
        %v2906 = vrot.slane %v2905, 4
        %v2908 = vshrl.u32 %v2760, 16
        %v2910 = vrot.slane %v2908, 7
        %v2911 = vshll.u32 %v2760, 16
        %v2913 = vor.u32 %v2910, %v2911
        %v2914 = vsel %vm1022, %v2906, %v2913
        %v2915 = vrot.slane %v2910, 4
        %v2917 = vshrl.u32 %v2761, 16
        %v2919 = vrot.slane %v2917, 7
        %v2920 = vshll.u32 %v2761, 16
        %v2922 = vor.u32 %v2919, %v2920
        %v2923 = vsel %vm1022, %v2915, %v2922
        %v2925 = vshrl.u32 %v2762, 16
        %v2927 = vrot.slane %v2925, 7
        %v2928 = vrot.slane %v2927, 4
        %v2930 = vshrl.u32 %v2763, 16
        %v2932 = vrot.slane %v2930, 7
        %v2933 = vshll.u32 %v2763, 16
        %v2935 = vor.u32 %v2932, %v2933
        %v2936 = vsel %vm1022, %v2928, %v2935
        %v2937 = vrot.slane %v2932, 4
        %v2939 = vshrl.u32 %v2764, 16
        %v2941 = vrot.slane %v2939, 7
        %v2942 = vshll.u32 %v2764, 16
        %v2944 = vor.u32 %v2941, %v2942
        %v2945 = vsel %vm1022, %v2937, %v2944
        %v2947 = vshrl.u32 %v2765, 16
        %v2949 = vrot.slane %v2947, 7
        %v2950 = vrot.slane %v2949, 4
        %v2952 = vshrl.u32 %v2766, 16
        %v2954 = vrot.slane %v2952, 7
        %v2955 = vshll.u32 %v2766, 16
        %v2957 = vor.u32 %v2954, %v2955
        %v2958 = vsel %vm1022, %v2950, %v2957
        %v2959 = vrot.slane %v2954, 4
        %v2961 = vshrl.u32 %v2767, 16
        %v2963 = vrot.slane %v2961, 7
        %v2964 = vshll.u32 %v2767, 16
        %v2966 = vor.u32 %v2963, %v2964
        %v2967 = vsel %vm1022, %v2959, %v2966
        %v2969 = vshrl.u32 %v2768, 16
        %v2971 = vrot.slane %v2969, 7
        %v2972 = vrot.slane %v2971, 4
        %v2974 = vshrl.u32 %v2769, 16
        %v2976 = vrot.slane %v2974, 7
        %v2977 = vshll.u32 %v2769, 16
        %v2979 = vor.u32 %v2976, %v2977
        %v2980 = vsel %vm1022, %v2972, %v2979
        %v2981 = vrot.slane %v2976, 4
        %v2983 = vshrl.u32 %v2770, 16
        %v2985 = vrot.slane %v2983, 7
        %v2986 = vshll.u32 %v2770, 16
        %v2988 = vor.u32 %v2985, %v2986
        %v2989 = vsel %vm1022, %v2981, %v2988
        %v2991 = vshrl.u32 %v2771, 16
        %v2993 = vrot.slane %v2991, 7
        %v2994 = vrot.slane %v2993, 4
        %v2996 = vshrl.u32 %v2772, 16
        %v2998 = vrot.slane %v2996, 7
        %v2999 = vshll.u32 %v2772, 16
        %v3001 = vor.u32 %v2998, %v2999
        %v3002 = vsel %vm1022, %v2994, %v3001
        %v3003 = vrot.slane %v2998, 4
        %v3005 = vshrl.u32 %v2773, 16
        %v3007 = vrot.slane %v3005, 7
        %v3008 = vshll.u32 %v2773, 16
        %v3010 = vor.u32 %v3007, %v3008
        %v3011 = vsel %vm1022, %v3003, %v3010
        %v3013 = vshrl.u32 %v2774, 16
        %v3015 = vrot.slane %v3013, 7
        %v3016 = vrot.slane %v3015, 4
        %v3018 = vshrl.u32 %v2775, 16
        %v3020 = vrot.slane %v3018, 7
        %v3021 = vshll.u32 %v2775, 16
        %v3023 = vor.u32 %v3020, %v3021
        %v3024 = vsel %vm1022, %v3016, %v3023
        %v3025 = vrot.slane %v3020, 4
        %v3027 = vshrl.u32 %v2776, 16
        %v3029 = vrot.slane %v3027, 7
        %v3030 = vshll.u32 %v2776, 16
        %v3032 = vor.u32 %v3029, %v3030
        %v3033 = vsel %vm1022, %v3025, %v3032
        %v3035 = vshrl.u32 %v2777, 16
        %v3037 = vrot.slane %v3035, 7
        %v3038 = vrot.slane %v3037, 4
        %v3040 = vshrl.u32 %v2778, 16
        %v3042 = vrot.slane %v3040, 7
        %v3043 = vshll.u32 %v2778, 16
        %v3045 = vor.u32 %v3042, %v3043
        %v3046 = vsel %vm1022, %v3038, %v3045
        %v3047 = vrot.slane %v3042, 4
        %v3049 = vshrl.u32 %v2779, 16
        %v3051 = vrot.slane %v3049, 7
        %v3052 = vshll.u32 %v2779, 16
        %v3054 = vor.u32 %v3051, %v3052
        %v3055 = vsel %vm1022, %v3047, %v3054
        %v3057 = vshrl.u32 %v2780, 16
        %v3059 = vrot.slane %v3057, 7
        %v3060 = vrot.slane %v3059, 4
        %v3062 = vshrl.u32 %v2781, 16
        %v3064 = vrot.slane %v3062, 7
        %v3065 = vshll.u32 %v2781, 16
        %v3067 = vor.u32 %v3064, %v3065
        %v3068 = vsel %vm1022, %v3060, %v3067
        %v3069 = vrot.slane %v3064, 4
        %v3071 = vshrl.u32 %v2782, 16
        %v3073 = vrot.slane %v3071, 7
        %v3074 = vshll.u32 %v2782, 16
        %v3076 = vor.u32 %v3073, %v3074
        %v3077 = vsel %vm1022, %v3069, %v3076
        %v3079 = vshrl.u32 %v2783, 16
        %v3081 = vrot.slane %v3079, 7
        %v3082 = vrot.slane %v3081, 4
        %v3084 = vshrl.u32 %v2784, 16
        %v3086 = vrot.slane %v3084, 7
        %v3087 = vshll.u32 %v2784, 16
        %v3089 = vor.u32 %v3086, %v3087
        %v3090 = vsel %vm1022, %v3082, %v3089
        %v3091 = vrot.slane %v3086, 4
        %v3093 = vshrl.u32 %v2785, 16
        %v3095 = vrot.slane %v3093, 7
        %v3096 = vshll.u32 %v2785, 16
        %v3098 = vor.u32 %v3095, %v3096
        %v3099 = vsel %vm1022, %v3091, %v3098
        %v3101 = vshrl.u32 %v2786, 16
        %v3103 = vrot.slane %v3101, 7
        %v3104 = vrot.slane %v3103, 4
        %v3106 = vshrl.u32 %v2787, 16
        %v3108 = vrot.slane %v3106, 7
        %v3109 = vshll.u32 %v2787, 16
        %v3111 = vor.u32 %v3108, %v3109
        %v3112 = vsel %vm1022, %v3104, %v3111
        %v3113 = vrot.slane %v3108, 4
        %v3115 = vshrl.u32 %v2788, 16
        %v3117 = vrot.slane %v3115, 7
        %v3118 = vshll.u32 %v2788, 16
        %v3120 = vor.u32 %v3117, %v3118
        %v3121 = vsel %vm1022, %v3113, %v3120
        %v3123 = vshrl.u32 %v2789, 16
        %v3125 = vrot.slane %v3123, 7
        %v3126 = vrot.slane %v3125, 4
        %v3128 = vshrl.u32 %v2790, 16
        %v3130 = vrot.slane %v3128, 7
        %v3131 = vshll.u32 %v2790, 16
        %v3133 = vor.u32 %v3130, %v3131
        %v3134 = vsel %vm1022, %v3126, %v3133
        %v3135 = vrot.slane %v3130, 4
        %v3137 = vshrl.u32 %v2791, 16
        %v3139 = vrot.slane %v3137, 7
        %v3140 = vshll.u32 %v2791, 16
        %v3142 = vor.u32 %v3139, %v3140
        %v3143 = vsel %vm1022, %v3135, %v3142
        %s3144 = scalar_lea.vmem [#allocation9], 96
        %v3145 = vld [vmem:[%s3144] sm:$0xf]
        %v3146 = vld [vmem:[%s3144 + $0x4] sm:$0xf]
        %v3147 = vld [vmem:[%s3144 + $0x8] sm:$0xf]
        %v3148 = vld [vmem:[%s3144 + $0xc] sm:$0xf]
        %v3149 = vld [vmem:[%s3144 + $0x10] sm:$0xf]
        %v3150 = vld [vmem:[%s3144 + $0x14] sm:$0xf]
        %v3151 = vld [vmem:[%s3144 + $0x18] sm:$0xf]
        %v3152 = vld [vmem:[%s3144 + $0x1c] sm:$0xf]
        %v3153 = vunpack.c.l.b16 %v2804
        %v3154 = vunpack.c.l.b16 %v2813
        %v3155 = vunpack.c.l.b16 %v2826
        %v3156 = vunpack.c.l.b16 %v2835
        %v3157 = vunpack.c.l.b16 %v2848
        %v3158 = vunpack.c.l.b16 %v2857
        %v3159 = vunpack.c.l.b16 %v2870
        %v3160 = vunpack.c.l.b16 %v2879
        %v3161 = vunpack.c.l.b16 %v2892
        %v3162 = vunpack.c.l.b16 %v2901
        %v3163 = vunpack.c.l.b16 %v2914
        %v3164 = vunpack.c.l.b16 %v2923
        %v3165 = vunpack.c.l.b16 %v2936
        %v3166 = vunpack.c.l.b16 %v2945
        %v3167 = vunpack.c.l.b16 %v2958
        %v3168 = vunpack.c.l.b16 %v2967
        %v3169 = vunpack.c.l.b16 %v2980
        %v3170 = vunpack.c.l.b16 %v2989
        %v3171 = vunpack.c.l.b16 %v3002
        %v3172 = vunpack.c.l.b16 %v3011
        %v3173 = vunpack.c.l.b16 %v3024
        %v3174 = vunpack.c.l.b16 %v3033
        %v3175 = vunpack.c.l.b16 %v3046
        %v3176 = vunpack.c.l.b16 %v3055
        %v3177 = vunpack.c.l.b16 %v3068
        %v3178 = vunpack.c.l.b16 %v3077
        %v3179 = vunpack.c.l.b16 %v3090
        %v3180 = vunpack.c.l.b16 %v3099
        %v3181 = vunpack.c.l.b16 %v3112
        %v3182 = vunpack.c.l.b16 %v3121
        %v3183 = vunpack.c.l.b16 %v3134
        %v3184 = vunpack.c.l.b16 %v3143
        %v3185 = vpack.c.b16 %v3154, %v3153
        %v3186 = vpack.c.b16 %v3156, %v3155
        %v3187 = vpack.c.b16 %v3158, %v3157
        %v3188 = vpack.c.b16 %v3160, %v3159
        %v3189 = vpack.c.b16 %v3162, %v3161
        %v3190 = vpack.c.b16 %v3164, %v3163
        %v3191 = vpack.c.b16 %v3166, %v3165
        %v3192 = vpack.c.b16 %v3168, %v3167
        %v3193 = vpack.c.b16 %v3170, %v3169
        %v3194 = vpack.c.b16 %v3172, %v3171
        %v3195 = vpack.c.b16 %v3174, %v3173
        %v3196 = vpack.c.b16 %v3176, %v3175
        %v3197 = vpack.c.b16 %v3178, %v3177
        %v3198 = vpack.c.b16 %v3180, %v3179
        %v3199 = vpack.c.b16 %v3182, %v3181
        %v3200 = vpack.c.b16 %v3184, %v3183
        %v3209 = vunpack.c.l.b16 %v3145
        %v3210 = vunpack.c.l.b16 %v3146
        %v3211 = vunpack.c.l.b16 %v3147
        %v3212 = vunpack.c.l.b16 %v3148
        %v3213 = vunpack.c.l.b16 %v3149
        %v3214 = vunpack.c.l.b16 %v3150
        %v3215 = vunpack.c.l.b16 %v3151
        %v3216 = vunpack.c.l.b16 %v3152
        %v3217 = vpack.c.b16 %v3210, %v3209
        %v3218 = vpack.c.b16 %v3212, %v3211
        %v3219 = vpack.c.b16 %v3214, %v3213
        %v3220 = vpack.c.b16 %v3216, %v3215
        %v3226 = vsel %vm1496, %v3185, 0
        %v3229 = vsel %vm1496, %v3186, 0
        %v3232 = vsel %vm1496, %v3187, 0
        %v3235 = vsel %vm1496, %v3188, 0
        %v3238 = vsel %vm1496, %v3189, 0
        %v3241 = vsel %vm1496, %v3190, 0
        %v3244 = vsel %vm1496, %v3191, 0
        %v3247 = vsel %vm1496, %v3192, 0
        %v3250 = vsel %vm1496, %v3193, 0
        %v3253 = vsel %vm1496, %v3194, 0
        %v3256 = vsel %vm1496, %v3195, 0
        %v3259 = vsel %vm1496, %v3196, 0
        %v3262 = vsel %vm1496, %v3197, 0
        %v3265 = vsel %vm1496, %v3198, 0
        %v3268 = vsel %vm1496, %v3199, 0
        %v3271 = vsel %vm1496, %v3200, 0
        %3273 = vmatprep.subr.bf16.mxu0 0
        %3274 = vmatpush1.bf16.msra.mxu0 0
        %3275 = vmatprep.subr.bf16.mxu0 0
        %3276 = vmatpush1.bf16.msra.mxu0 0
        %3277 = vmatprep.subr.bf16.mxu0 0
        %3278 = vmatpush1.bf16.msra.mxu0 0
        %3279 = vmatprep.subr.bf16.mxu0 0
        %3280 = vmatpush1.bf16.msra.mxu0 0
        %3281 = vmatprep.subr.bf16.mxu0 0
        %3282 = vmatpush1.bf16.msra.mxu0 %v3220
        %3283 = vmatprep.subr.bf16.mxu0 0
        %3284 = vmatpush1.bf16.msra.mxu0 %v3219
        %3285 = vmatprep.subr.bf16.mxu0 0
        %3286 = vmatpush1.bf16.msra.mxu0 %v3218
        %3287 = vmatprep.subr.bf16.mxu0 0
        %3288 = vmatpush1.bf16.msra.mxu0 %v3217
        %3289 = vmatprep.subr.bf16.mxu0 0
        %3290 = vmatpush2.bf16.msra.mxu0 0
        %3291 = vmatprep.subr.bf16.mxu0 0
        %3292 = vmatpush2.bf16.msra.mxu0 0
        %3293 = vmatprep.subr.bf16.mxu0 0
        %3294 = vmatpush2.bf16.msra.mxu0 0
        %3295 = vmatprep.subr.bf16.mxu0 0
        %3296 = vmatpush2.bf16.msra.mxu0 0
        %3297 = vmatprep.subr.bf16.mxu0 0
        %3298 = vmatpush2.bf16.msra.mxu0 0
        %3299 = vmatprep.subr.bf16.mxu0 0
        %3300 = vmatpush2.bf16.msra.mxu0 0
        %3301 = vmatprep.subr.bf16.mxu0 0
        %3302 = vmatpush2.bf16.msra.mxu0 0
        %3303 = vmatprep.subr.bf16.mxu0 0
        %3304 = vmatpush2.bf16.msra.mxu0 0
        %3305 = vmatprep.mubr.bf16.mxu0 0
        %3306 = vmatmul.mubr.bf16.gmra.mxu0 %v3226
        %v3307 = vpop.f32.mrf.mxu0
        %v3308 = vadd.f32 0.0, %v3307
        %v3309 = vpop.f32.mrf.mxu0
        %v3310 = vpop.f32.mrf.mxu0
        %v3311 = vadd.f32 0.0, %v3310
        %v3312 = vpop.f32.mrf.mxu0
        %3313 = vmatprep.mubr.bf16.mxu0 0
        %3314 = vmatmul.mubr.bf16.gmra.mxu0 %v3229
        %v3315 = vpop.f32.mrf.mxu0
        %v3316 = vadd.f32 0.0, %v3315
        %v3317 = vpop.f32.mrf.mxu0
        %v3318 = vpop.f32.mrf.mxu0
        %v3319 = vadd.f32 0.0, %v3318
        %v3320 = vpop.f32.mrf.mxu0
        %3321 = vmatprep.mubr.bf16.mxu0 0
        %3322 = vmatmul.mubr.bf16.gmra.mxu0 %v3232
        %v3323 = vpop.f32.mrf.mxu0
        %v3324 = vadd.f32 0.0, %v3323
        %v3325 = vpop.f32.mrf.mxu0
        %v3326 = vpop.f32.mrf.mxu0
        %v3327 = vadd.f32 0.0, %v3326
        %v3328 = vpop.f32.mrf.mxu0
        %3329 = vmatprep.mubr.bf16.mxu0 0
        %3330 = vmatmul.mubr.bf16.gmra.mxu0 %v3235
        %v3331 = vpop.f32.mrf.mxu0
        %v3332 = vadd.f32 0.0, %v3331
        %v3333 = vpop.f32.mrf.mxu0
        %v3334 = vpop.f32.mrf.mxu0
        %v3335 = vadd.f32 0.0, %v3334
        %v3336 = vpop.f32.mrf.mxu0
        %3337 = vmatprep.mubr.bf16.mxu0 0
        %3338 = vmatmul.mubr.bf16.gmra.mxu0 %v3238
        %v3339 = vpop.f32.mrf.mxu0
        %v3340 = vadd.f32 0.0, %v3339
        %v3341 = vpop.f32.mrf.mxu0
        %v3342 = vpop.f32.mrf.mxu0
        %v3343 = vadd.f32 0.0, %v3342
        %v3344 = vpop.f32.mrf.mxu0
        %3345 = vmatprep.mubr.bf16.mxu0 0
        %3346 = vmatmul.mubr.bf16.gmra.mxu0 %v3241
        %v3347 = vpop.f32.mrf.mxu0
        %v3348 = vadd.f32 0.0, %v3347
        %v3349 = vpop.f32.mrf.mxu0
        %v3350 = vpop.f32.mrf.mxu0
        %v3351 = vadd.f32 0.0, %v3350
        %v3352 = vpop.f32.mrf.mxu0
        %3353 = vmatprep.mubr.bf16.mxu0 0
        %3354 = vmatmul.mubr.bf16.gmra.mxu0 %v3244
        %v3355 = vpop.f32.mrf.mxu0
        %v3356 = vadd.f32 0.0, %v3355
        %v3357 = vpop.f32.mrf.mxu0
        %v3358 = vpop.f32.mrf.mxu0
        %v3359 = vadd.f32 0.0, %v3358
        %v3360 = vpop.f32.mrf.mxu0
        %3361 = vmatprep.mubr.bf16.mxu0 0
        %3362 = vmatmul.mubr.bf16.gmra.mxu0 %v3247
        %v3363 = vpop.f32.mrf.mxu0
        %v3364 = vadd.f32 0.0, %v3363
        %v3365 = vpop.f32.mrf.mxu0
        %v3366 = vpop.f32.mrf.mxu0
        %v3367 = vadd.f32 0.0, %v3366
        %v3368 = vpop.f32.mrf.mxu0
        %3369 = vmatprep.mubr.bf16.mxu0 0
        %3370 = vmatmul.mubr.bf16.gmra.mxu0 %v3250
        %v3371 = vpop.f32.mrf.mxu0
        %v3372 = vadd.f32 0.0, %v3371
        %v3373 = vpop.f32.mrf.mxu0
        %v3374 = vpop.f32.mrf.mxu0
        %v3375 = vadd.f32 0.0, %v3374
        %v3376 = vpop.f32.mrf.mxu0
        %3377 = vmatprep.mubr.bf16.mxu0 0
        %3378 = vmatmul.mubr.bf16.gmra.mxu0 %v3253
        %v3379 = vpop.f32.mrf.mxu0
        %v3380 = vadd.f32 0.0, %v3379
        %v3381 = vpop.f32.mrf.mxu0
        %v3382 = vpop.f32.mrf.mxu0
        %v3383 = vadd.f32 0.0, %v3382
        %v3384 = vpop.f32.mrf.mxu0
        %3385 = vmatprep.mubr.bf16.mxu0 0
        %3386 = vmatmul.mubr.bf16.gmra.mxu0 %v3256
        %v3387 = vpop.f32.mrf.mxu0
        %v3388 = vadd.f32 0.0, %v3387
        %v3389 = vpop.f32.mrf.mxu0
        %v3390 = vpop.f32.mrf.mxu0
        %v3391 = vadd.f32 0.0, %v3390
        %v3392 = vpop.f32.mrf.mxu0
        %3393 = vmatprep.mubr.bf16.mxu0 0
        %3394 = vmatmul.mubr.bf16.gmra.mxu0 %v3259
        %v3395 = vpop.f32.mrf.mxu0
        %v3396 = vadd.f32 0.0, %v3395
        %v3397 = vpop.f32.mrf.mxu0
        %v3398 = vpop.f32.mrf.mxu0
        %v3399 = vadd.f32 0.0, %v3398
        %v3400 = vpop.f32.mrf.mxu0
        %3401 = vmatprep.mubr.bf16.mxu0 0
        %3402 = vmatmul.mubr.bf16.gmra.mxu0 %v3262
        %v3403 = vpop.f32.mrf.mxu0
        %v3404 = vadd.f32 0.0, %v3403
        %v3405 = vpop.f32.mrf.mxu0
        %v3406 = vpop.f32.mrf.mxu0
        %v3407 = vadd.f32 0.0, %v3406
        %v3408 = vpop.f32.mrf.mxu0
        %3409 = vmatprep.mubr.bf16.mxu0 0
        %3410 = vmatmul.mubr.bf16.gmra.mxu0 %v3265
        %v3411 = vpop.f32.mrf.mxu0
        %v3412 = vadd.f32 0.0, %v3411
        %v3413 = vpop.f32.mrf.mxu0
        %v3414 = vpop.f32.mrf.mxu0
        %v3415 = vadd.f32 0.0, %v3414
        %v3416 = vpop.f32.mrf.mxu0
        %3417 = vmatprep.mubr.bf16.mxu0 0
        %3418 = vmatmul.mubr.bf16.gmra.mxu0 %v3268
        %v3419 = vpop.f32.mrf.mxu0
        %v3420 = vadd.f32 0.0, %v3419
        %v3421 = vpop.f32.mrf.mxu0
        %v3422 = vpop.f32.mrf.mxu0
        %v3423 = vadd.f32 0.0, %v3422
        %v3424 = vpop.f32.mrf.mxu0
        %3425 = vmatprep.mubr.bf16.mxu0 0
        %3426 = vmatmul.mubr.bf16.gmra.mxu0 %v3271
        %v3427 = vpop.f32.mrf.mxu0
        %v3428 = vadd.f32 0.0, %v3427
        %v3429 = vpop.f32.mrf.mxu0
        %v3430 = vpop.f32.mrf.mxu0
        %v3431 = vadd.f32 0.0, %v3430
        %v3432 = vpop.f32.mrf.mxu0
        %3433 = vdwg.mxu0
        %v3434 = vadd.f32 %v2712, %v3308
        %v3435 = vadd.f32 %v2713, %v3311
        %v3436 = vadd.f32 %v2714, %v3316
        %v3437 = vadd.f32 %v2715, %v3319
        %v3438 = vadd.f32 %v2716, %v3324
        %v3439 = vadd.f32 %v2717, %v3327
        %v3440 = vadd.f32 %v2718, %v3332
        %v3441 = vadd.f32 %v2719, %v3335
        %v3442 = vadd.f32 %v2720, %v3340
        %v3443 = vadd.f32 %v2721, %v3343
        %v3444 = vadd.f32 %v2722, %v3348
        %v3445 = vadd.f32 %v2723, %v3351
        %v3446 = vadd.f32 %v2724, %v3356
        %v3447 = vadd.f32 %v2725, %v3359
        %v3448 = vadd.f32 %v2726, %v3364
        %v3449 = vadd.f32 %v2727, %v3367
        %v3450 = vadd.f32 %v2728, %v3372
        %v3451 = vadd.f32 %v2729, %v3375
        %v3452 = vadd.f32 %v2730, %v3380
        %v3453 = vadd.f32 %v2731, %v3383
        %v3454 = vadd.f32 %v2732, %v3388
        %v3455 = vadd.f32 %v2733, %v3391
        %v3456 = vadd.f32 %v2734, %v3396
        %v3457 = vadd.f32 %v2735, %v3399
        %v3458 = vadd.f32 %v2736, %v3404
        %v3459 = vadd.f32 %v2737, %v3407
        %v3460 = vadd.f32 %v2738, %v3412
        %v3461 = vadd.f32 %v2739, %v3415
        %v3462 = vadd.f32 %v2740, %v3420
        %v3463 = vadd.f32 %v2741, %v3423
        %v3464 = vadd.f32 %v2742, %v3428
        %v3465 = vadd.f32 %v2743, %v3431
        %s3466 = scalar_lea.vmem [#allocation9], 128
        %v3467 = vld [vmem:[%s3466] sm:$0xf]
        %v3468 = vld [vmem:[%s3466 + $0x4] sm:$0xf]
        %v3469 = vld [vmem:[%s3466 + $0x8] sm:$0xf]
        %v3470 = vld [vmem:[%s3466 + $0xc] sm:$0xf]
        %v3471 = vld [vmem:[%s3466 + $0x10] sm:$0xf]
        %v3472 = vld [vmem:[%s3466 + $0x14] sm:$0xf]
        %v3473 = vld [vmem:[%s3466 + $0x18] sm:$0xf]
        %v3474 = vld [vmem:[%s3466 + $0x1c] sm:$0xf]
        %v3507 = vunpack.c.l.b16 %v2745
        %v3508 = vunpack.c.l.b16 %v2746
        %v3509 = vunpack.c.l.b16 %v2748
        %v3510 = vunpack.c.l.b16 %v2749
        %v3511 = vunpack.c.l.b16 %v2751
        %v3512 = vunpack.c.l.b16 %v2752
        %v3513 = vunpack.c.l.b16 %v2754
        %v3514 = vunpack.c.l.b16 %v2755
        %v3515 = vunpack.c.l.b16 %v2757
        %v3516 = vunpack.c.l.b16 %v2758
        %v3517 = vunpack.c.l.b16 %v2760
        %v3518 = vunpack.c.l.b16 %v2761
        %v3519 = vunpack.c.l.b16 %v2763
        %v3520 = vunpack.c.l.b16 %v2764
        %v3521 = vunpack.c.l.b16 %v2766
        %v3522 = vunpack.c.l.b16 %v2767
        %v3523 = vunpack.c.l.b16 %v2769
        %v3524 = vunpack.c.l.b16 %v2770
        %v3525 = vunpack.c.l.b16 %v2772
        %v3526 = vunpack.c.l.b16 %v2773
        %v3527 = vunpack.c.l.b16 %v2775
        %v3528 = vunpack.c.l.b16 %v2776
        %v3529 = vunpack.c.l.b16 %v2778
        %v3530 = vunpack.c.l.b16 %v2779
        %v3531 = vunpack.c.l.b16 %v2781
        %v3532 = vunpack.c.l.b16 %v2782
        %v3533 = vunpack.c.l.b16 %v2784
        %v3534 = vunpack.c.l.b16 %v2785
        %v3535 = vunpack.c.l.b16 %v2787
        %v3536 = vunpack.c.l.b16 %v2788
        %v3537 = vunpack.c.l.b16 %v2790
        %v3538 = vunpack.c.l.b16 %v2791
        %v3539 = vpack.c.b16 %v3508, %v3507
        %v3540 = vpack.c.b16 %v3510, %v3509
        %v3541 = vpack.c.b16 %v3512, %v3511
        %v3542 = vpack.c.b16 %v3514, %v3513
        %v3543 = vpack.c.b16 %v3516, %v3515
        %v3544 = vpack.c.b16 %v3518, %v3517
        %v3545 = vpack.c.b16 %v3520, %v3519
        %v3546 = vpack.c.b16 %v3522, %v3521
        %v3547 = vpack.c.b16 %v3524, %v3523
        %v3548 = vpack.c.b16 %v3526, %v3525
        %v3549 = vpack.c.b16 %v3528, %v3527
        %v3550 = vpack.c.b16 %v3530, %v3529
        %v3551 = vpack.c.b16 %v3532, %v3531
        %v3552 = vpack.c.b16 %v3534, %v3533
        %v3553 = vpack.c.b16 %v3536, %v3535
        %v3554 = vpack.c.b16 %v3538, %v3537
        %v3563 = vunpack.c.l.b16 %v3467
        %v3564 = vunpack.c.l.b16 %v3468
        %v3565 = vunpack.c.l.b16 %v3469
        %v3566 = vunpack.c.l.b16 %v3470
        %v3567 = vunpack.c.l.b16 %v3471
        %v3568 = vunpack.c.l.b16 %v3472
        %v3569 = vunpack.c.l.b16 %v3473
        %v3570 = vunpack.c.l.b16 %v3474
        %v3571 = vpack.c.b16 %v3564, %v3563
        %v3572 = vpack.c.b16 %v3566, %v3565
        %v3573 = vpack.c.b16 %v3568, %v3567
        %v3574 = vpack.c.b16 %v3570, %v3569
        %v3580 = vsel %vm1496, %v3539, 0
        %v3583 = vsel %vm1496, %v3540, 0
        %v3586 = vsel %vm1496, %v3541, 0
        %v3589 = vsel %vm1496, %v3542, 0
        %v3592 = vsel %vm1496, %v3543, 0
        %v3595 = vsel %vm1496, %v3544, 0
        %v3598 = vsel %vm1496, %v3545, 0
        %v3601 = vsel %vm1496, %v3546, 0
        %v3604 = vsel %vm1496, %v3547, 0
        %v3607 = vsel %vm1496, %v3548, 0
        %v3610 = vsel %vm1496, %v3549, 0
        %v3613 = vsel %vm1496, %v3550, 0
        %v3616 = vsel %vm1496, %v3551, 0
        %v3619 = vsel %vm1496, %v3552, 0
        %v3622 = vsel %vm1496, %v3553, 0
        %v3625 = vsel %vm1496, %v3554, 0
        %3627 = vmatprep.subr.bf16.mxu0 0
        %3628 = vmatpush1.bf16.msra.mxu0 0
        %3629 = vmatprep.subr.bf16.mxu0 0
        %3630 = vmatpush1.bf16.msra.mxu0 0
        %3631 = vmatprep.subr.bf16.mxu0 0
        %3632 = vmatpush1.bf16.msra.mxu0 0
        %3633 = vmatprep.subr.bf16.mxu0 0
        %3634 = vmatpush1.bf16.msra.mxu0 0
        %3635 = vmatprep.subr.bf16.mxu0 0
        %3636 = vmatpush1.bf16.msra.mxu0 %v3574
        %3637 = vmatprep.subr.bf16.mxu0 0
        %3638 = vmatpush1.bf16.msra.mxu0 %v3573
        %3639 = vmatprep.subr.bf16.mxu0 0
        %3640 = vmatpush1.bf16.msra.mxu0 %v3572
        %3641 = vmatprep.subr.bf16.mxu0 0
        %3642 = vmatpush1.bf16.msra.mxu0 %v3571
        %3643 = vmatprep.subr.bf16.mxu0 0
        %3644 = vmatpush2.bf16.msra.mxu0 0
        %3645 = vmatprep.subr.bf16.mxu0 0
        %3646 = vmatpush2.bf16.msra.mxu0 0
        %3647 = vmatprep.subr.bf16.mxu0 0
        %3648 = vmatpush2.bf16.msra.mxu0 0
        %3649 = vmatprep.subr.bf16.mxu0 0
        %3650 = vmatpush2.bf16.msra.mxu0 0
        %3651 = vmatprep.subr.bf16.mxu0 0
        %3652 = vmatpush2.bf16.msra.mxu0 0
        %3653 = vmatprep.subr.bf16.mxu0 0
        %3654 = vmatpush2.bf16.msra.mxu0 0
        %3655 = vmatprep.subr.bf16.mxu0 0
        %3656 = vmatpush2.bf16.msra.mxu0 0
        %3657 = vmatprep.subr.bf16.mxu0 0
        %3658 = vmatpush2.bf16.msra.mxu0 0
        %3659 = vmatprep.mubr.bf16.mxu0 0
        %3660 = vmatmul.mubr.bf16.gmra.mxu0 %v3580
        %v3661 = vpop.f32.mrf.mxu0
        %v3662 = vadd.f32 0.0, %v3661
        %v3663 = vpop.f32.mrf.mxu0
        %v3664 = vpop.f32.mrf.mxu0
        %v3665 = vadd.f32 0.0, %v3664
        %v3666 = vpop.f32.mrf.mxu0
        %3667 = vmatprep.mubr.bf16.mxu0 0
        %3668 = vmatmul.mubr.bf16.gmra.mxu0 %v3583
        %v3669 = vpop.f32.mrf.mxu0
        %v3670 = vadd.f32 0.0, %v3669
        %v3671 = vpop.f32.mrf.mxu0
        %v3672 = vpop.f32.mrf.mxu0
        %v3673 = vadd.f32 0.0, %v3672
        %v3674 = vpop.f32.mrf.mxu0
        %3675 = vmatprep.mubr.bf16.mxu0 0
        %3676 = vmatmul.mubr.bf16.gmra.mxu0 %v3586
        %v3677 = vpop.f32.mrf.mxu0
        %v3678 = vadd.f32 0.0, %v3677
        %v3679 = vpop.f32.mrf.mxu0
        %v3680 = vpop.f32.mrf.mxu0
        %v3681 = vadd.f32 0.0, %v3680
        %v3682 = vpop.f32.mrf.mxu0
        %3683 = vmatprep.mubr.bf16.mxu0 0
        %3684 = vmatmul.mubr.bf16.gmra.mxu0 %v3589
        %v3685 = vpop.f32.mrf.mxu0
        %v3686 = vadd.f32 0.0, %v3685
        %v3687 = vpop.f32.mrf.mxu0
        %v3688 = vpop.f32.mrf.mxu0
        %v3689 = vadd.f32 0.0, %v3688
        %v3690 = vpop.f32.mrf.mxu0
        %3691 = vmatprep.mubr.bf16.mxu0 0
        %3692 = vmatmul.mubr.bf16.gmra.mxu0 %v3592
        %v3693 = vpop.f32.mrf.mxu0
        %v3694 = vadd.f32 0.0, %v3693
        %v3695 = vpop.f32.mrf.mxu0
        %v3696 = vpop.f32.mrf.mxu0
        %v3697 = vadd.f32 0.0, %v3696
        %v3698 = vpop.f32.mrf.mxu0
        %3699 = vmatprep.mubr.bf16.mxu0 0
        %3700 = vmatmul.mubr.bf16.gmra.mxu0 %v3595
        %v3701 = vpop.f32.mrf.mxu0
        %v3702 = vadd.f32 0.0, %v3701
        %v3703 = vpop.f32.mrf.mxu0
        %v3704 = vpop.f32.mrf.mxu0
        %v3705 = vadd.f32 0.0, %v3704
        %v3706 = vpop.f32.mrf.mxu0
        %3707 = vmatprep.mubr.bf16.mxu0 0
        %3708 = vmatmul.mubr.bf16.gmra.mxu0 %v3598
        %v3709 = vpop.f32.mrf.mxu0
        %v3710 = vadd.f32 0.0, %v3709
        %v3711 = vpop.f32.mrf.mxu0
        %v3712 = vpop.f32.mrf.mxu0
        %v3713 = vadd.f32 0.0, %v3712
        %v3714 = vpop.f32.mrf.mxu0
        %3715 = vmatprep.mubr.bf16.mxu0 0
        %3716 = vmatmul.mubr.bf16.gmra.mxu0 %v3601
        %v3717 = vpop.f32.mrf.mxu0
        %v3718 = vadd.f32 0.0, %v3717
        %v3719 = vpop.f32.mrf.mxu0
        %v3720 = vpop.f32.mrf.mxu0
        %v3721 = vadd.f32 0.0, %v3720
        %v3722 = vpop.f32.mrf.mxu0
        %3723 = vmatprep.mubr.bf16.mxu0 0
        %3724 = vmatmul.mubr.bf16.gmra.mxu0 %v3604
        %v3725 = vpop.f32.mrf.mxu0
        %v3726 = vadd.f32 0.0, %v3725
        %v3727 = vpop.f32.mrf.mxu0
        %v3728 = vpop.f32.mrf.mxu0
        %v3729 = vadd.f32 0.0, %v3728
        %v3730 = vpop.f32.mrf.mxu0
        %3731 = vmatprep.mubr.bf16.mxu0 0
        %3732 = vmatmul.mubr.bf16.gmra.mxu0 %v3607
        %v3733 = vpop.f32.mrf.mxu0
        %v3734 = vadd.f32 0.0, %v3733
        %v3735 = vpop.f32.mrf.mxu0
        %v3736 = vpop.f32.mrf.mxu0
        %v3737 = vadd.f32 0.0, %v3736
        %v3738 = vpop.f32.mrf.mxu0
        %3739 = vmatprep.mubr.bf16.mxu0 0
        %3740 = vmatmul.mubr.bf16.gmra.mxu0 %v3610
        %v3741 = vpop.f32.mrf.mxu0
        %v3742 = vadd.f32 0.0, %v3741
        %v3743 = vpop.f32.mrf.mxu0
        %v3744 = vpop.f32.mrf.mxu0
        %v3745 = vadd.f32 0.0, %v3744
        %v3746 = vpop.f32.mrf.mxu0
        %3747 = vmatprep.mubr.bf16.mxu0 0
        %3748 = vmatmul.mubr.bf16.gmra.mxu0 %v3613
        %v3749 = vpop.f32.mrf.mxu0
        %v3750 = vadd.f32 0.0, %v3749
        %v3751 = vpop.f32.mrf.mxu0
        %v3752 = vpop.f32.mrf.mxu0
        %v3753 = vadd.f32 0.0, %v3752
        %v3754 = vpop.f32.mrf.mxu0
        %3755 = vmatprep.mubr.bf16.mxu0 0
        %3756 = vmatmul.mubr.bf16.gmra.mxu0 %v3616
        %v3757 = vpop.f32.mrf.mxu0
        %v3758 = vadd.f32 0.0, %v3757
        %v3759 = vpop.f32.mrf.mxu0
        %v3760 = vpop.f32.mrf.mxu0
        %v3761 = vadd.f32 0.0, %v3760
        %v3762 = vpop.f32.mrf.mxu0
        %3763 = vmatprep.mubr.bf16.mxu0 0
        %3764 = vmatmul.mubr.bf16.gmra.mxu0 %v3619
        %v3765 = vpop.f32.mrf.mxu0
        %v3766 = vadd.f32 0.0, %v3765
        %v3767 = vpop.f32.mrf.mxu0
        %v3768 = vpop.f32.mrf.mxu0
        %v3769 = vadd.f32 0.0, %v3768
        %v3770 = vpop.f32.mrf.mxu0
        %3771 = vmatprep.mubr.bf16.mxu0 0
        %3772 = vmatmul.mubr.bf16.gmra.mxu0 %v3622
        %v3773 = vpop.f32.mrf.mxu0
        %v3774 = vadd.f32 0.0, %v3773
        %v3775 = vpop.f32.mrf.mxu0
        %v3776 = vpop.f32.mrf.mxu0
        %v3777 = vadd.f32 0.0, %v3776
        %v3778 = vpop.f32.mrf.mxu0
        %3779 = vmatprep.mubr.bf16.mxu0 0
        %3780 = vmatmul.mubr.bf16.gmra.mxu0 %v3625
        %v3781 = vpop.f32.mrf.mxu0
        %v3782 = vadd.f32 0.0, %v3781
        %v3783 = vpop.f32.mrf.mxu0
        %v3784 = vpop.f32.mrf.mxu0
        %v3785 = vadd.f32 0.0, %v3784
        %v3786 = vpop.f32.mrf.mxu0
        %3787 = vdwg.mxu0
        %v3788 = vadd.f32 %v3434, %v3662
        %v3789 = vadd.f32 %v3435, %v3665
        %v3790 = vadd.f32 %v3436, %v3670
        %v3791 = vadd.f32 %v3437, %v3673
        %v3792 = vadd.f32 %v3438, %v3678
        %v3793 = vadd.f32 %v3439, %v3681
        %v3794 = vadd.f32 %v3440, %v3686
        %v3795 = vadd.f32 %v3441, %v3689
        %v3796 = vadd.f32 %v3442, %v3694
        %v3797 = vadd.f32 %v3443, %v3697
        %v3798 = vadd.f32 %v3444, %v3702
        %v3799 = vadd.f32 %v3445, %v3705
        %v3800 = vadd.f32 %v3446, %v3710
        %v3801 = vadd.f32 %v3447, %v3713
        %v3802 = vadd.f32 %v3448, %v3718
        %v3803 = vadd.f32 %v3449, %v3721
        %v3804 = vadd.f32 %v3450, %v3726
        %v3805 = vadd.f32 %v3451, %v3729
        %v3806 = vadd.f32 %v3452, %v3734
        %v3807 = vadd.f32 %v3453, %v3737
        %v3808 = vadd.f32 %v3454, %v3742
        %v3809 = vadd.f32 %v3455, %v3745
        %v3810 = vadd.f32 %v3456, %v3750
        %v3811 = vadd.f32 %v3457, %v3753
        %v3812 = vadd.f32 %v3458, %v3758
        %v3813 = vadd.f32 %v3459, %v3761
        %v3814 = vadd.f32 %v3460, %v3766
        %v3815 = vadd.f32 %v3461, %v3769
        %v3816 = vadd.f32 %v3462, %v3774
        %v3817 = vadd.f32 %v3463, %v3777
        %v3818 = vadd.f32 %v3464, %v3782
        %v3819 = vadd.f32 %v3465, %v3785
        %v3820 = vld [vmem:[%s940 + $0x4] sm:$0xf]
        %v3821 = vld [vmem:[%s940 + $0x8] sm:$0xf]
        %v3822 = vld [vmem:[%s940 + $0xc] sm:$0x1]
        %v3823 = vld [vmem:[%s940 + $0x14] sm:$0xf]
        %v3824 = vld [vmem:[%s940 + $0x18] sm:$0xf]
        %v3825 = vld [vmem:[%s940 + $0x1c] sm:$0x1]
        %v3826 = vld [vmem:[%s940 + $0x24] sm:$0xf]
        %v3827 = vld [vmem:[%s940 + $0x28] sm:$0xf]
        %v3828 = vld [vmem:[%s940 + $0x2c] sm:$0x1]
        %v3829 = vld [vmem:[%s940 + $0x34] sm:$0xf]
        %v3830 = vld [vmem:[%s940 + $0x38] sm:$0xf]
        %v3831 = vld [vmem:[%s940 + $0x3c] sm:$0x1]
        %v3832 = vld [vmem:[%s940 + $0x44] sm:$0xf]
        %v3833 = vld [vmem:[%s940 + $0x48] sm:$0xf]
        %v3834 = vld [vmem:[%s940 + $0x4c] sm:$0x1]
        %v3835 = vld [vmem:[%s940 + $0x54] sm:$0xf]
        %v3836 = vld [vmem:[%s940 + $0x58] sm:$0xf]
        %v3837 = vld [vmem:[%s940 + $0x5c] sm:$0x1]
        %v3838 = vld [vmem:[%s940 + $0x64] sm:$0xf]
        %v3839 = vld [vmem:[%s940 + $0x68] sm:$0xf]
        %v3840 = vld [vmem:[%s940 + $0x6c] sm:$0x1]
        %v3841 = vld [vmem:[%s940 + $0x74] sm:$0xf]
        %v3842 = vld [vmem:[%s940 + $0x78] sm:$0xf]
        %v3843 = vld [vmem:[%s940 + $0x7c] sm:$0x1]
        %v3844 = vld [vmem:[%s940 + $0x84] sm:$0xf]
        %v3845 = vld [vmem:[%s940 + $0x88] sm:$0xf]
        %v3846 = vld [vmem:[%s940 + $0x8c] sm:$0x1]
        %v3847 = vld [vmem:[%s940 + $0x94] sm:$0xf]
        %v3848 = vld [vmem:[%s940 + $0x98] sm:$0xf]
        %v3849 = vld [vmem:[%s940 + $0x9c] sm:$0x1]
        %v3850 = vld [vmem:[%s940 + $0xa4] sm:$0xf]
        %v3851 = vld [vmem:[%s940 + $0xa8] sm:$0xf]
        %v3852 = vld [vmem:[%s940 + $0xac] sm:$0x1]
        %v3853 = vld [vmem:[%s940 + $0xb4] sm:$0xf]
        %v3854 = vld [vmem:[%s940 + $0xb8] sm:$0xf]
        %v3855 = vld [vmem:[%s940 + $0xbc] sm:$0x1]
        %v3856 = vld [vmem:[%s940 + $0xc4] sm:$0xf]
        %v3857 = vld [vmem:[%s940 + $0xc8] sm:$0xf]
        %v3858 = vld [vmem:[%s940 + $0xcc] sm:$0x1]
        %v3859 = vld [vmem:[%s940 + $0xd4] sm:$0xf]
        %v3860 = vld [vmem:[%s940 + $0xd8] sm:$0xf]
        %v3861 = vld [vmem:[%s940 + $0xdc] sm:$0x1]
        %v3862 = vld [vmem:[%s940 + $0xe4] sm:$0xf]
        %v3863 = vld [vmem:[%s940 + $0xe8] sm:$0xf]
        %v3864 = vld [vmem:[%s940 + $0xec] sm:$0x1]
        %v3865 = vld [vmem:[%s940 + $0xf4] sm:$0xf]
        %v3866 = vld [vmem:[%s940 + $0xf8] sm:$0xf]
        %v3867 = vld [vmem:[%s940 + $0xfc] sm:$0x1]
        %v3869 = vshrl.u32 %v3820, 16
        %v3871 = vrot.slane %v3869, 4
        %v3872 = vshll.u32 %v3820, 16
        %v3874 = vrot.slane %v3872, 5
        %v3875 = vor.u32 %v3871, %v3874
        %v3876 = vrot.slane %v3875, 4
        %v3878 = vshll.u32 %v3821, 16
        %v3880 = vrot.slane %v3878, 5
        %v3881 = vsel %vm2037, %v3876, %v3880
        %v3882 = vshrl.u32 %v3821, 16
        %v3884 = vrot.slane %v3882, 4
        %v3885 = vor.u32 %v3884, %v3880
        %v3886 = vrot.slane %v3885, 4
        %v3888 = vshll.u32 %v3822, 16
        %v3890 = vrot.slane %v3888, 5
        %v3891 = vsel %vm2037, %v3886, %v3890
        %v3893 = vshrl.u32 %v3823, 16
        %v3895 = vrot.slane %v3893, 4
        %v3896 = vshll.u32 %v3823, 16
        %v3898 = vrot.slane %v3896, 5
        %v3899 = vor.u32 %v3895, %v3898
        %v3900 = vrot.slane %v3899, 4
        %v3902 = vshll.u32 %v3824, 16
        %v3904 = vrot.slane %v3902, 5
        %v3905 = vsel %vm2037, %v3900, %v3904
        %v3906 = vshrl.u32 %v3824, 16
        %v3908 = vrot.slane %v3906, 4
        %v3909 = vor.u32 %v3908, %v3904
        %v3910 = vrot.slane %v3909, 4
        %v3912 = vshll.u32 %v3825, 16
        %v3914 = vrot.slane %v3912, 5
        %v3915 = vsel %vm2037, %v3910, %v3914
        %v3917 = vshrl.u32 %v3826, 16
        %v3919 = vrot.slane %v3917, 4
        %v3920 = vshll.u32 %v3826, 16
        %v3922 = vrot.slane %v3920, 5
        %v3923 = vor.u32 %v3919, %v3922
        %v3924 = vrot.slane %v3923, 4
        %v3926 = vshll.u32 %v3827, 16
        %v3928 = vrot.slane %v3926, 5
        %v3929 = vsel %vm2037, %v3924, %v3928
        %v3930 = vshrl.u32 %v3827, 16
        %v3932 = vrot.slane %v3930, 4
        %v3933 = vor.u32 %v3932, %v3928
        %v3934 = vrot.slane %v3933, 4
        %v3936 = vshll.u32 %v3828, 16
        %v3938 = vrot.slane %v3936, 5
        %v3939 = vsel %vm2037, %v3934, %v3938
        %v3941 = vshrl.u32 %v3829, 16
        %v3943 = vrot.slane %v3941, 4
        %v3944 = vshll.u32 %v3829, 16
        %v3946 = vrot.slane %v3944, 5
        %v3947 = vor.u32 %v3943, %v3946
        %v3948 = vrot.slane %v3947, 4
        %v3950 = vshll.u32 %v3830, 16
        %v3952 = vrot.slane %v3950, 5
        %v3953 = vsel %vm2037, %v3948, %v3952
        %v3954 = vshrl.u32 %v3830, 16
        %v3956 = vrot.slane %v3954, 4
        %v3957 = vor.u32 %v3956, %v3952
        %v3958 = vrot.slane %v3957, 4
        %v3960 = vshll.u32 %v3831, 16
        %v3962 = vrot.slane %v3960, 5
        %v3963 = vsel %vm2037, %v3958, %v3962
        %v3965 = vshrl.u32 %v3832, 16
        %v3967 = vrot.slane %v3965, 4
        %v3968 = vshll.u32 %v3832, 16
        %v3970 = vrot.slane %v3968, 5
        %v3971 = vor.u32 %v3967, %v3970
        %v3972 = vrot.slane %v3971, 4
        %v3974 = vshll.u32 %v3833, 16
        %v3976 = vrot.slane %v3974, 5
        %v3977 = vsel %vm2037, %v3972, %v3976
        %v3978 = vshrl.u32 %v3833, 16
        %v3980 = vrot.slane %v3978, 4
        %v3981 = vor.u32 %v3980, %v3976
        %v3982 = vrot.slane %v3981, 4
        %v3984 = vshll.u32 %v3834, 16
        %v3986 = vrot.slane %v3984, 5
        %v3987 = vsel %vm2037, %v3982, %v3986
        %v3989 = vshrl.u32 %v3835, 16
        %v3991 = vrot.slane %v3989, 4
        %v3992 = vshll.u32 %v3835, 16
        %v3994 = vrot.slane %v3992, 5
        %v3995 = vor.u32 %v3991, %v3994
        %v3996 = vrot.slane %v3995, 4
        %v3998 = vshll.u32 %v3836, 16
        %v4000 = vrot.slane %v3998, 5
        %v4001 = vsel %vm2037, %v3996, %v4000
        %v4002 = vshrl.u32 %v3836, 16
        %v4004 = vrot.slane %v4002, 4
        %v4005 = vor.u32 %v4004, %v4000
        %v4006 = vrot.slane %v4005, 4
        %v4008 = vshll.u32 %v3837, 16
        %v4010 = vrot.slane %v4008, 5
        %v4011 = vsel %vm2037, %v4006, %v4010
        %v4013 = vshrl.u32 %v3838, 16
        %v4015 = vrot.slane %v4013, 4
        %v4016 = vshll.u32 %v3838, 16
        %v4018 = vrot.slane %v4016, 5
        %v4019 = vor.u32 %v4015, %v4018
        %v4020 = vrot.slane %v4019, 4
        %v4022 = vshll.u32 %v3839, 16
        %v4024 = vrot.slane %v4022, 5
        %v4025 = vsel %vm2037, %v4020, %v4024
        %v4026 = vshrl.u32 %v3839, 16
        %v4028 = vrot.slane %v4026, 4
        %v4029 = vor.u32 %v4028, %v4024
        %v4030 = vrot.slane %v4029, 4
        %v4032 = vshll.u32 %v3840, 16
        %v4034 = vrot.slane %v4032, 5
        %v4035 = vsel %vm2037, %v4030, %v4034
        %v4037 = vshrl.u32 %v3841, 16
        %v4039 = vrot.slane %v4037, 4
        %v4040 = vshll.u32 %v3841, 16
        %v4042 = vrot.slane %v4040, 5
        %v4043 = vor.u32 %v4039, %v4042
        %v4044 = vrot.slane %v4043, 4
        %v4046 = vshll.u32 %v3842, 16
        %v4048 = vrot.slane %v4046, 5
        %v4049 = vsel %vm2037, %v4044, %v4048
        %v4050 = vshrl.u32 %v3842, 16
        %v4052 = vrot.slane %v4050, 4
        %v4053 = vor.u32 %v4052, %v4048
        %v4054 = vrot.slane %v4053, 4
        %v4056 = vshll.u32 %v3843, 16
        %v4058 = vrot.slane %v4056, 5
        %v4059 = vsel %vm2037, %v4054, %v4058
        %v4061 = vshrl.u32 %v3844, 16
        %v4063 = vrot.slane %v4061, 4
        %v4064 = vshll.u32 %v3844, 16
        %v4066 = vrot.slane %v4064, 5
        %v4067 = vor.u32 %v4063, %v4066
        %v4068 = vrot.slane %v4067, 4
        %v4070 = vshll.u32 %v3845, 16
        %v4072 = vrot.slane %v4070, 5
        %v4073 = vsel %vm2037, %v4068, %v4072
        %v4074 = vshrl.u32 %v3845, 16
        %v4076 = vrot.slane %v4074, 4
        %v4077 = vor.u32 %v4076, %v4072
        %v4078 = vrot.slane %v4077, 4
        %v4080 = vshll.u32 %v3846, 16
        %v4082 = vrot.slane %v4080, 5
        %v4083 = vsel %vm2037, %v4078, %v4082
        %v4085 = vshrl.u32 %v3847, 16
        %v4087 = vrot.slane %v4085, 4
        %v4088 = vshll.u32 %v3847, 16
        %v4090 = vrot.slane %v4088, 5
        %v4091 = vor.u32 %v4087, %v4090
        %v4092 = vrot.slane %v4091, 4
        %v4094 = vshll.u32 %v3848, 16
        %v4096 = vrot.slane %v4094, 5
        %v4097 = vsel %vm2037, %v4092, %v4096
        %v4098 = vshrl.u32 %v3848, 16
        %v4100 = vrot.slane %v4098, 4
        %v4101 = vor.u32 %v4100, %v4096
        %v4102 = vrot.slane %v4101, 4
        %v4104 = vshll.u32 %v3849, 16
        %v4106 = vrot.slane %v4104, 5
        %v4107 = vsel %vm2037, %v4102, %v4106
        %v4109 = vshrl.u32 %v3850, 16
        %v4111 = vrot.slane %v4109, 4
        %v4112 = vshll.u32 %v3850, 16
        %v4114 = vrot.slane %v4112, 5
        %v4115 = vor.u32 %v4111, %v4114
        %v4116 = vrot.slane %v4115, 4
        %v4118 = vshll.u32 %v3851, 16
        %v4120 = vrot.slane %v4118, 5
        %v4121 = vsel %vm2037, %v4116, %v4120
        %v4122 = vshrl.u32 %v3851, 16
        %v4124 = vrot.slane %v4122, 4
        %v4125 = vor.u32 %v4124, %v4120
        %v4126 = vrot.slane %v4125, 4
        %v4128 = vshll.u32 %v3852, 16
        %v4130 = vrot.slane %v4128, 5
        %v4131 = vsel %vm2037, %v4126, %v4130
        %v4133 = vshrl.u32 %v3853, 16
        %v4135 = vrot.slane %v4133, 4
        %v4136 = vshll.u32 %v3853, 16
        %v4138 = vrot.slane %v4136, 5
        %v4139 = vor.u32 %v4135, %v4138
        %v4140 = vrot.slane %v4139, 4
        %v4142 = vshll.u32 %v3854, 16
        %v4144 = vrot.slane %v4142, 5
        %v4145 = vsel %vm2037, %v4140, %v4144
        %v4146 = vshrl.u32 %v3854, 16
        %v4148 = vrot.slane %v4146, 4
        %v4149 = vor.u32 %v4148, %v4144
        %v4150 = vrot.slane %v4149, 4
        %v4152 = vshll.u32 %v3855, 16
        %v4154 = vrot.slane %v4152, 5
        %v4155 = vsel %vm2037, %v4150, %v4154
        %v4157 = vshrl.u32 %v3856, 16
        %v4159 = vrot.slane %v4157, 4
        %v4160 = vshll.u32 %v3856, 16
        %v4162 = vrot.slane %v4160, 5
        %v4163 = vor.u32 %v4159, %v4162
        %v4164 = vrot.slane %v4163, 4
        %v4166 = vshll.u32 %v3857, 16
        %v4168 = vrot.slane %v4166, 5
        %v4169 = vsel %vm2037, %v4164, %v4168
        %v4170 = vshrl.u32 %v3857, 16
        %v4172 = vrot.slane %v4170, 4
        %v4173 = vor.u32 %v4172, %v4168
        %v4174 = vrot.slane %v4173, 4
        %v4176 = vshll.u32 %v3858, 16
        %v4178 = vrot.slane %v4176, 5
        %v4179 = vsel %vm2037, %v4174, %v4178
        %v4181 = vshrl.u32 %v3859, 16
        %v4183 = vrot.slane %v4181, 4
        %v4184 = vshll.u32 %v3859, 16
        %v4186 = vrot.slane %v4184, 5
        %v4187 = vor.u32 %v4183, %v4186
        %v4188 = vrot.slane %v4187, 4
        %v4190 = vshll.u32 %v3860, 16
        %v4192 = vrot.slane %v4190, 5
        %v4193 = vsel %vm2037, %v4188, %v4192
        %v4194 = vshrl.u32 %v3860, 16
        %v4196 = vrot.slane %v4194, 4
        %v4197 = vor.u32 %v4196, %v4192
        %v4198 = vrot.slane %v4197, 4
        %v4200 = vshll.u32 %v3861, 16
        %v4202 = vrot.slane %v4200, 5
        %v4203 = vsel %vm2037, %v4198, %v4202
        %v4205 = vshrl.u32 %v3862, 16
        %v4207 = vrot.slane %v4205, 4
        %v4208 = vshll.u32 %v3862, 16
        %v4210 = vrot.slane %v4208, 5
        %v4211 = vor.u32 %v4207, %v4210
        %v4212 = vrot.slane %v4211, 4
        %v4214 = vshll.u32 %v3863, 16
        %v4216 = vrot.slane %v4214, 5
        %v4217 = vsel %vm2037, %v4212, %v4216
        %v4218 = vshrl.u32 %v3863, 16
        %v4220 = vrot.slane %v4218, 4
        %v4221 = vor.u32 %v4220, %v4216
        %v4222 = vrot.slane %v4221, 4
        %v4224 = vshll.u32 %v3864, 16
        %v4226 = vrot.slane %v4224, 5
        %v4227 = vsel %vm2037, %v4222, %v4226
        %v4229 = vshrl.u32 %v3865, 16
        %v4231 = vrot.slane %v4229, 4
        %v4232 = vshll.u32 %v3865, 16
        %v4234 = vrot.slane %v4232, 5
        %v4235 = vor.u32 %v4231, %v4234
        %v4236 = vrot.slane %v4235, 4
        %v4238 = vshll.u32 %v3866, 16
        %v4240 = vrot.slane %v4238, 5
        %v4241 = vsel %vm2037, %v4236, %v4240
        %v4242 = vshrl.u32 %v3866, 16
        %v4244 = vrot.slane %v4242, 4
        %v4245 = vor.u32 %v4244, %v4240
        %v4246 = vrot.slane %v4245, 4
        %v4248 = vshll.u32 %v3867, 16
        %v4250 = vrot.slane %v4248, 5
        %v4251 = vsel %vm2037, %v4246, %v4250
        %s4252 = scalar_lea.vmem [#allocation9], 160
        %v4253 = vld [vmem:[%s4252] sm:$0xf]
        %v4254 = vld [vmem:[%s4252 + $0x4] sm:$0xf]
        %v4255 = vld [vmem:[%s4252 + $0x8] sm:$0xf]
        %v4256 = vld [vmem:[%s4252 + $0xc] sm:$0xf]
        %v4257 = vld [vmem:[%s4252 + $0x10] sm:$0xf]
        %v4258 = vld [vmem:[%s4252 + $0x14] sm:$0xf]
        %v4259 = vld [vmem:[%s4252 + $0x18] sm:$0xf]
        %v4260 = vld [vmem:[%s4252 + $0x1c] sm:$0xf]
        %v4261 = vunpack.c.l.b16 %v3881
        %v4262 = vunpack.c.l.b16 %v3891
        %v4263 = vunpack.c.l.b16 %v3905
        %v4264 = vunpack.c.l.b16 %v3915
        %v4265 = vunpack.c.l.b16 %v3929
        %v4266 = vunpack.c.l.b16 %v3939
        %v4267 = vunpack.c.l.b16 %v3953
        %v4268 = vunpack.c.l.b16 %v3963
        %v4269 = vunpack.c.l.b16 %v3977
        %v4270 = vunpack.c.l.b16 %v3987
        %v4271 = vunpack.c.l.b16 %v4001
        %v4272 = vunpack.c.l.b16 %v4011
        %v4273 = vunpack.c.l.b16 %v4025
        %v4274 = vunpack.c.l.b16 %v4035
        %v4275 = vunpack.c.l.b16 %v4049
        %v4276 = vunpack.c.l.b16 %v4059
        %v4277 = vunpack.c.l.b16 %v4073
        %v4278 = vunpack.c.l.b16 %v4083
        %v4279 = vunpack.c.l.b16 %v4097
        %v4280 = vunpack.c.l.b16 %v4107
        %v4281 = vunpack.c.l.b16 %v4121
        %v4282 = vunpack.c.l.b16 %v4131
        %v4283 = vunpack.c.l.b16 %v4145
        %v4284 = vunpack.c.l.b16 %v4155
        %v4285 = vunpack.c.l.b16 %v4169
        %v4286 = vunpack.c.l.b16 %v4179
        %v4287 = vunpack.c.l.b16 %v4193
        %v4288 = vunpack.c.l.b16 %v4203
        %v4289 = vunpack.c.l.b16 %v4217
        %v4290 = vunpack.c.l.b16 %v4227
        %v4291 = vunpack.c.l.b16 %v4241
        %v4292 = vunpack.c.l.b16 %v4251
        %v4293 = vpack.c.b16 %v4262, %v4261
        %v4294 = vpack.c.b16 %v4264, %v4263
        %v4295 = vpack.c.b16 %v4266, %v4265
        %v4296 = vpack.c.b16 %v4268, %v4267
        %v4297 = vpack.c.b16 %v4270, %v4269
        %v4298 = vpack.c.b16 %v4272, %v4271
        %v4299 = vpack.c.b16 %v4274, %v4273
        %v4300 = vpack.c.b16 %v4276, %v4275
        %v4301 = vpack.c.b16 %v4278, %v4277
        %v4302 = vpack.c.b16 %v4280, %v4279
        %v4303 = vpack.c.b16 %v4282, %v4281
        %v4304 = vpack.c.b16 %v4284, %v4283
        %v4305 = vpack.c.b16 %v4286, %v4285
        %v4306 = vpack.c.b16 %v4288, %v4287
        %v4307 = vpack.c.b16 %v4290, %v4289
        %v4308 = vpack.c.b16 %v4292, %v4291
        %v4317 = vunpack.c.l.b16 %v4253
        %v4318 = vunpack.c.l.b16 %v4254
        %v4319 = vunpack.c.l.b16 %v4255
        %v4320 = vunpack.c.l.b16 %v4256
        %v4321 = vunpack.c.l.b16 %v4257
        %v4322 = vunpack.c.l.b16 %v4258
        %v4323 = vunpack.c.l.b16 %v4259
        %v4324 = vunpack.c.l.b16 %v4260
        %v4325 = vpack.c.b16 %v4318, %v4317
        %v4326 = vpack.c.b16 %v4320, %v4319
        %v4327 = vpack.c.b16 %v4322, %v4321
        %v4328 = vpack.c.b16 %v4324, %v4323
        %v4334 = vsel %vm1496, %v4293, 0
        %v4337 = vsel %vm1496, %v4294, 0
        %v4340 = vsel %vm1496, %v4295, 0
        %v4343 = vsel %vm1496, %v4296, 0
        %v4346 = vsel %vm1496, %v4297, 0
        %v4349 = vsel %vm1496, %v4298, 0
        %v4352 = vsel %vm1496, %v4299, 0
        %v4355 = vsel %vm1496, %v4300, 0
        %v4358 = vsel %vm1496, %v4301, 0
        %v4361 = vsel %vm1496, %v4302, 0
        %v4364 = vsel %vm1496, %v4303, 0
        %v4367 = vsel %vm1496, %v4304, 0
        %v4370 = vsel %vm1496, %v4305, 0
        %v4373 = vsel %vm1496, %v4306, 0
        %v4376 = vsel %vm1496, %v4307, 0
        %v4379 = vsel %vm1496, %v4308, 0
        %4381 = vmatprep.subr.bf16.mxu0 0
        %4382 = vmatpush1.bf16.msra.mxu0 0
        %4383 = vmatprep.subr.bf16.mxu0 0
        %4384 = vmatpush1.bf16.msra.mxu0 0
        %4385 = vmatprep.subr.bf16.mxu0 0
        %4386 = vmatpush1.bf16.msra.mxu0 0
        %4387 = vmatprep.subr.bf16.mxu0 0
        %4388 = vmatpush1.bf16.msra.mxu0 0
        %4389 = vmatprep.subr.bf16.mxu0 0
        %4390 = vmatpush1.bf16.msra.mxu0 %v4328
        %4391 = vmatprep.subr.bf16.mxu0 0
        %4392 = vmatpush1.bf16.msra.mxu0 %v4327
        %4393 = vmatprep.subr.bf16.mxu0 0
        %4394 = vmatpush1.bf16.msra.mxu0 %v4326
        %4395 = vmatprep.subr.bf16.mxu0 0
        %4396 = vmatpush1.bf16.msra.mxu0 %v4325
        %4397 = vmatprep.subr.bf16.mxu0 0
        %4398 = vmatpush2.bf16.msra.mxu0 0
        %4399 = vmatprep.subr.bf16.mxu0 0
        %4400 = vmatpush2.bf16.msra.mxu0 0
        %4401 = vmatprep.subr.bf16.mxu0 0
        %4402 = vmatpush2.bf16.msra.mxu0 0
        %4403 = vmatprep.subr.bf16.mxu0 0
        %4404 = vmatpush2.bf16.msra.mxu0 0
        %4405 = vmatprep.subr.bf16.mxu0 0
        %4406 = vmatpush2.bf16.msra.mxu0 0
        %4407 = vmatprep.subr.bf16.mxu0 0
        %4408 = vmatpush2.bf16.msra.mxu0 0
        %4409 = vmatprep.subr.bf16.mxu0 0
        %4410 = vmatpush2.bf16.msra.mxu0 0
        %4411 = vmatprep.subr.bf16.mxu0 0
        %4412 = vmatpush2.bf16.msra.mxu0 0
        %4413 = vmatprep.mubr.bf16.mxu0 0
        %4414 = vmatmul.mubr.bf16.gmra.mxu0 %v4334
        %v4415 = vpop.f32.mrf.mxu0
        %v4416 = vadd.f32 0.0, %v4415
        %v4417 = vpop.f32.mrf.mxu0
        %v4418 = vpop.f32.mrf.mxu0
        %v4419 = vadd.f32 0.0, %v4418
        %v4420 = vpop.f32.mrf.mxu0
        %4421 = vmatprep.mubr.bf16.mxu0 0
        %4422 = vmatmul.mubr.bf16.gmra.mxu0 %v4337
        %v4423 = vpop.f32.mrf.mxu0
        %v4424 = vadd.f32 0.0, %v4423
        %v4425 = vpop.f32.mrf.mxu0
        %v4426 = vpop.f32.mrf.mxu0
        %v4427 = vadd.f32 0.0, %v4426
        %v4428 = vpop.f32.mrf.mxu0
        %4429 = vmatprep.mubr.bf16.mxu0 0
        %4430 = vmatmul.mubr.bf16.gmra.mxu0 %v4340
        %v4431 = vpop.f32.mrf.mxu0
        %v4432 = vadd.f32 0.0, %v4431
        %v4433 = vpop.f32.mrf.mxu0
        %v4434 = vpop.f32.mrf.mxu0
        %v4435 = vadd.f32 0.0, %v4434
        %v4436 = vpop.f32.mrf.mxu0
        %4437 = vmatprep.mubr.bf16.mxu0 0
        %4438 = vmatmul.mubr.bf16.gmra.mxu0 %v4343
        %v4439 = vpop.f32.mrf.mxu0
        %v4440 = vadd.f32 0.0, %v4439
        %v4441 = vpop.f32.mrf.mxu0
        %v4442 = vpop.f32.mrf.mxu0
        %v4443 = vadd.f32 0.0, %v4442
        %v4444 = vpop.f32.mrf.mxu0
        %4445 = vmatprep.mubr.bf16.mxu0 0
        %4446 = vmatmul.mubr.bf16.gmra.mxu0 %v4346
        %v4447 = vpop.f32.mrf.mxu0
        %v4448 = vadd.f32 0.0, %v4447
        %v4449 = vpop.f32.mrf.mxu0
        %v4450 = vpop.f32.mrf.mxu0
        %v4451 = vadd.f32 0.0, %v4450
        %v4452 = vpop.f32.mrf.mxu0
        %4453 = vmatprep.mubr.bf16.mxu0 0
        %4454 = vmatmul.mubr.bf16.gmra.mxu0 %v4349
        %v4455 = vpop.f32.mrf.mxu0
        %v4456 = vadd.f32 0.0, %v4455
        %v4457 = vpop.f32.mrf.mxu0
        %v4458 = vpop.f32.mrf.mxu0
        %v4459 = vadd.f32 0.0, %v4458
        %v4460 = vpop.f32.mrf.mxu0
        %4461 = vmatprep.mubr.bf16.mxu0 0
        %4462 = vmatmul.mubr.bf16.gmra.mxu0 %v4352
        %v4463 = vpop.f32.mrf.mxu0
        %v4464 = vadd.f32 0.0, %v4463
        %v4465 = vpop.f32.mrf.mxu0
        %v4466 = vpop.f32.mrf.mxu0
        %v4467 = vadd.f32 0.0, %v4466
        %v4468 = vpop.f32.mrf.mxu0
        %4469 = vmatprep.mubr.bf16.mxu0 0
        %4470 = vmatmul.mubr.bf16.gmra.mxu0 %v4355
        %v4471 = vpop.f32.mrf.mxu0
        %v4472 = vadd.f32 0.0, %v4471
        %v4473 = vpop.f32.mrf.mxu0
        %v4474 = vpop.f32.mrf.mxu0
        %v4475 = vadd.f32 0.0, %v4474
        %v4476 = vpop.f32.mrf.mxu0
        %4477 = vmatprep.mubr.bf16.mxu0 0
        %4478 = vmatmul.mubr.bf16.gmra.mxu0 %v4358
        %v4479 = vpop.f32.mrf.mxu0
        %v4480 = vadd.f32 0.0, %v4479
        %v4481 = vpop.f32.mrf.mxu0
        %v4482 = vpop.f32.mrf.mxu0
        %v4483 = vadd.f32 0.0, %v4482
        %v4484 = vpop.f32.mrf.mxu0
        %4485 = vmatprep.mubr.bf16.mxu0 0
        %4486 = vmatmul.mubr.bf16.gmra.mxu0 %v4361
        %v4487 = vpop.f32.mrf.mxu0
        %v4488 = vadd.f32 0.0, %v4487
        %v4489 = vpop.f32.mrf.mxu0
        %v4490 = vpop.f32.mrf.mxu0
        %v4491 = vadd.f32 0.0, %v4490
        %v4492 = vpop.f32.mrf.mxu0
        %4493 = vmatprep.mubr.bf16.mxu0 0
        %4494 = vmatmul.mubr.bf16.gmra.mxu0 %v4364
        %v4495 = vpop.f32.mrf.mxu0
        %v4496 = vadd.f32 0.0, %v4495
        %v4497 = vpop.f32.mrf.mxu0
        %v4498 = vpop.f32.mrf.mxu0
        %v4499 = vadd.f32 0.0, %v4498
        %v4500 = vpop.f32.mrf.mxu0
        %4501 = vmatprep.mubr.bf16.mxu0 0
        %4502 = vmatmul.mubr.bf16.gmra.mxu0 %v4367
        %v4503 = vpop.f32.mrf.mxu0
        %v4504 = vadd.f32 0.0, %v4503
        %v4505 = vpop.f32.mrf.mxu0
        %v4506 = vpop.f32.mrf.mxu0
        %v4507 = vadd.f32 0.0, %v4506
        %v4508 = vpop.f32.mrf.mxu0
        %4509 = vmatprep.mubr.bf16.mxu0 0
        %4510 = vmatmul.mubr.bf16.gmra.mxu0 %v4370
        %v4511 = vpop.f32.mrf.mxu0
        %v4512 = vadd.f32 0.0, %v4511
        %v4513 = vpop.f32.mrf.mxu0
        %v4514 = vpop.f32.mrf.mxu0
        %v4515 = vadd.f32 0.0, %v4514
        %v4516 = vpop.f32.mrf.mxu0
        %4517 = vmatprep.mubr.bf16.mxu0 0
        %4518 = vmatmul.mubr.bf16.gmra.mxu0 %v4373
        %v4519 = vpop.f32.mrf.mxu0
        %v4520 = vadd.f32 0.0, %v4519
        %v4521 = vpop.f32.mrf.mxu0
        %v4522 = vpop.f32.mrf.mxu0
        %v4523 = vadd.f32 0.0, %v4522
        %v4524 = vpop.f32.mrf.mxu0
        %4525 = vmatprep.mubr.bf16.mxu0 0
        %4526 = vmatmul.mubr.bf16.gmra.mxu0 %v4376
        %v4527 = vpop.f32.mrf.mxu0
        %v4528 = vadd.f32 0.0, %v4527
        %v4529 = vpop.f32.mrf.mxu0
        %v4530 = vpop.f32.mrf.mxu0
        %v4531 = vadd.f32 0.0, %v4530
        %v4532 = vpop.f32.mrf.mxu0
        %4533 = vmatprep.mubr.bf16.mxu0 0
        %4534 = vmatmul.mubr.bf16.gmra.mxu0 %v4379
        %v4535 = vpop.f32.mrf.mxu0
        %v4536 = vadd.f32 0.0, %v4535
        %v4537 = vpop.f32.mrf.mxu0
        %v4538 = vpop.f32.mrf.mxu0
        %v4539 = vadd.f32 0.0, %v4538
        %v4540 = vpop.f32.mrf.mxu0
        %4541 = vdwg.mxu0
        %v4542 = vadd.f32 %v3788, %v4416
        %v4543 = vadd.f32 %v3789, %v4419
        %v4544 = vadd.f32 %v3790, %v4424
        %v4545 = vadd.f32 %v3791, %v4427
        %v4546 = vadd.f32 %v3792, %v4432
        %v4547 = vadd.f32 %v3793, %v4435
        %v4548 = vadd.f32 %v3794, %v4440
        %v4549 = vadd.f32 %v3795, %v4443
        %v4550 = vadd.f32 %v3796, %v4448
        %v4551 = vadd.f32 %v3797, %v4451
        %v4552 = vadd.f32 %v3798, %v4456
        %v4553 = vadd.f32 %v3799, %v4459
        %v4554 = vadd.f32 %v3800, %v4464
        %v4555 = vadd.f32 %v3801, %v4467
        %v4556 = vadd.f32 %v3802, %v4472
        %v4557 = vadd.f32 %v3803, %v4475
        %v4558 = vadd.f32 %v3804, %v4480
        %v4559 = vadd.f32 %v3805, %v4483
        %v4560 = vadd.f32 %v3806, %v4488
        %v4561 = vadd.f32 %v3807, %v4491
        %v4562 = vadd.f32 %v3808, %v4496
        %v4563 = vadd.f32 %v3809, %v4499
        %v4564 = vadd.f32 %v3810, %v4504
        %v4565 = vadd.f32 %v3811, %v4507
        %v4566 = vadd.f32 %v3812, %v4512
        %v4567 = vadd.f32 %v3813, %v4515
        %v4568 = vadd.f32 %v3814, %v4520
        %v4569 = vadd.f32 %v3815, %v4523
        %v4570 = vadd.f32 %v3816, %v4528
        %v4571 = vadd.f32 %v3817, %v4531
        %v4572 = vadd.f32 %v3818, %v4536
        %v4573 = vadd.f32 %v3819, %v4539
        %s4574 = scalar_lea.vmem [#allocation2], 32
        %v4575 = vld [vmem:[%s4574] sm:$0x8]
        %v4576 = vld [vmem:[%s4574 + $0x4] sm:$0xf]
        %v4577 = vld [vmem:[%s4574 + $0x8] sm:$0xf]
        %v4578 = vld [vmem:[%s4574 + $0x10] sm:$0x8]
        %v4579 = vld [vmem:[%s4574 + $0x14] sm:$0xf]
        %v4580 = vld [vmem:[%s4574 + $0x18] sm:$0xf]
        %v4581 = vld [vmem:[%s4574 + $0x20] sm:$0x8]
        %v4582 = vld [vmem:[%s4574 + $0x24] sm:$0xf]
        %v4583 = vld [vmem:[%s4574 + $0x28] sm:$0xf]
        %v4584 = vld [vmem:[%s4574 + $0x30] sm:$0x8]
        %v4585 = vld [vmem:[%s4574 + $0x34] sm:$0xf]
        %v4586 = vld [vmem:[%s4574 + $0x38] sm:$0xf]
        %v4587 = vld [vmem:[%s4574 + $0x40] sm:$0x8]
        %v4588 = vld [vmem:[%s4574 + $0x44] sm:$0xf]
        %v4589 = vld [vmem:[%s4574 + $0x48] sm:$0xf]
        %v4590 = vld [vmem:[%s4574 + $0x50] sm:$0x8]
        %v4591 = vld [vmem:[%s4574 + $0x54] sm:$0xf]
        %v4592 = vld [vmem:[%s4574 + $0x58] sm:$0xf]
        %v4593 = vld [vmem:[%s4574 + $0x60] sm:$0x8]
        %v4594 = vld [vmem:[%s4574 + $0x64] sm:$0xf]
        %v4595 = vld [vmem:[%s4574 + $0x68] sm:$0xf]
        %v4596 = vld [vmem:[%s4574 + $0x70] sm:$0x8]
        %v4597 = vld [vmem:[%s4574 + $0x74] sm:$0xf]
        %v4598 = vld [vmem:[%s4574 + $0x78] sm:$0xf]
        %v4599 = vld [vmem:[%s4574 + $0x80] sm:$0x8]
        %v4600 = vld [vmem:[%s4574 + $0x84] sm:$0xf]
        %v4601 = vld [vmem:[%s4574 + $0x88] sm:$0xf]
        %v4602 = vld [vmem:[%s4574 + $0x90] sm:$0x8]
        %v4603 = vld [vmem:[%s4574 + $0x94] sm:$0xf]
        %v4604 = vld [vmem:[%s4574 + $0x98] sm:$0xf]
        %v4605 = vld [vmem:[%s4574 + $0xa0] sm:$0x8]
        %v4606 = vld [vmem:[%s4574 + $0xa4] sm:$0xf]
        %v4607 = vld [vmem:[%s4574 + $0xa8] sm:$0xf]
        %v4608 = vld [vmem:[%s4574 + $0xb0] sm:$0x8]
        %v4609 = vld [vmem:[%s4574 + $0xb4] sm:$0xf]
        %v4610 = vld [vmem:[%s4574 + $0xb8] sm:$0xf]
        %v4611 = vld [vmem:[%s4574 + $0xc0] sm:$0x8]
        %v4612 = vld [vmem:[%s4574 + $0xc4] sm:$0xf]
        %v4613 = vld [vmem:[%s4574 + $0xc8] sm:$0xf]
        %v4614 = vld [vmem:[%s4574 + $0xd0] sm:$0x8]
        %v4615 = vld [vmem:[%s4574 + $0xd4] sm:$0xf]
        %v4616 = vld [vmem:[%s4574 + $0xd8] sm:$0xf]
        %v4617 = vld [vmem:[%s4574 + $0xe0] sm:$0x8]
        %v4618 = vld [vmem:[%s4574 + $0xe4] sm:$0xf]
        %v4619 = vld [vmem:[%s4574 + $0xe8] sm:$0xf]
        %v4620 = vld [vmem:[%s4574 + $0xf0] sm:$0x8]
        %v4621 = vld [vmem:[%s4574 + $0xf4] sm:$0xf]
        %v4622 = vld [vmem:[%s4574 + $0xf8] sm:$0xf]
        %v4624 = vshrl.u32 %v4575, 16
        %v4626 = vrot.slane %v4624, 7
        %v4627 = vrot.slane %v4626, 4
        %v4629 = vshrl.u32 %v4576, 16
        %v4631 = vrot.slane %v4629, 7
        %v4632 = vshll.u32 %v4576, 16
        %v4634 = vor.u32 %v4631, %v4632
        %v4635 = vsel %vm1022, %v4627, %v4634
        %v4636 = vrot.slane %v4631, 4
        %v4638 = vshrl.u32 %v4577, 16
        %v4640 = vrot.slane %v4638, 7
        %v4641 = vshll.u32 %v4577, 16
        %v4643 = vor.u32 %v4640, %v4641
        %v4644 = vsel %vm1022, %v4636, %v4643
        %v4646 = vshrl.u32 %v4578, 16
        %v4648 = vrot.slane %v4646, 7
        %v4649 = vrot.slane %v4648, 4
        %v4651 = vshrl.u32 %v4579, 16
        %v4653 = vrot.slane %v4651, 7
        %v4654 = vshll.u32 %v4579, 16
        %v4656 = vor.u32 %v4653, %v4654
        %v4657 = vsel %vm1022, %v4649, %v4656
        %v4658 = vrot.slane %v4653, 4
        %v4660 = vshrl.u32 %v4580, 16
        %v4662 = vrot.slane %v4660, 7
        %v4663 = vshll.u32 %v4580, 16
        %v4665 = vor.u32 %v4662, %v4663
        %v4666 = vsel %vm1022, %v4658, %v4665
        %v4668 = vshrl.u32 %v4581, 16
        %v4670 = vrot.slane %v4668, 7
        %v4671 = vrot.slane %v4670, 4
        %v4673 = vshrl.u32 %v4582, 16
        %v4675 = vrot.slane %v4673, 7
        %v4676 = vshll.u32 %v4582, 16
        %v4678 = vor.u32 %v4675, %v4676
        %v4679 = vsel %vm1022, %v4671, %v4678
        %v4680 = vrot.slane %v4675, 4
        %v4682 = vshrl.u32 %v4583, 16
        %v4684 = vrot.slane %v4682, 7
        %v4685 = vshll.u32 %v4583, 16
        %v4687 = vor.u32 %v4684, %v4685
        %v4688 = vsel %vm1022, %v4680, %v4687
        %v4690 = vshrl.u32 %v4584, 16
        %v4692 = vrot.slane %v4690, 7
        %v4693 = vrot.slane %v4692, 4
        %v4695 = vshrl.u32 %v4585, 16
        %v4697 = vrot.slane %v4695, 7
        %v4698 = vshll.u32 %v4585, 16
        %v4700 = vor.u32 %v4697, %v4698
        %v4701 = vsel %vm1022, %v4693, %v4700
        %v4702 = vrot.slane %v4697, 4
        %v4704 = vshrl.u32 %v4586, 16
        %v4706 = vrot.slane %v4704, 7
        %v4707 = vshll.u32 %v4586, 16
        %v4709 = vor.u32 %v4706, %v4707
        %v4710 = vsel %vm1022, %v4702, %v4709
        %v4712 = vshrl.u32 %v4587, 16
        %v4714 = vrot.slane %v4712, 7
        %v4715 = vrot.slane %v4714, 4
        %v4717 = vshrl.u32 %v4588, 16
        %v4719 = vrot.slane %v4717, 7
        %v4720 = vshll.u32 %v4588, 16
        %v4722 = vor.u32 %v4719, %v4720
        %v4723 = vsel %vm1022, %v4715, %v4722
        %v4724 = vrot.slane %v4719, 4
        %v4726 = vshrl.u32 %v4589, 16
        %v4728 = vrot.slane %v4726, 7
        %v4729 = vshll.u32 %v4589, 16
        %v4731 = vor.u32 %v4728, %v4729
        %v4732 = vsel %vm1022, %v4724, %v4731
        %v4734 = vshrl.u32 %v4590, 16
        %v4736 = vrot.slane %v4734, 7
        %v4737 = vrot.slane %v4736, 4
        %v4739 = vshrl.u32 %v4591, 16
        %v4741 = vrot.slane %v4739, 7
        %v4742 = vshll.u32 %v4591, 16
        %v4744 = vor.u32 %v4741, %v4742
        %v4745 = vsel %vm1022, %v4737, %v4744
        %v4746 = vrot.slane %v4741, 4
        %v4748 = vshrl.u32 %v4592, 16
        %v4750 = vrot.slane %v4748, 7
        %v4751 = vshll.u32 %v4592, 16
        %v4753 = vor.u32 %v4750, %v4751
        %v4754 = vsel %vm1022, %v4746, %v4753
        %v4756 = vshrl.u32 %v4593, 16
        %v4758 = vrot.slane %v4756, 7
        %v4759 = vrot.slane %v4758, 4
        %v4761 = vshrl.u32 %v4594, 16
        %v4763 = vrot.slane %v4761, 7
        %v4764 = vshll.u32 %v4594, 16
        %v4766 = vor.u32 %v4763, %v4764
        %v4767 = vsel %vm1022, %v4759, %v4766
        %v4768 = vrot.slane %v4763, 4
        %v4770 = vshrl.u32 %v4595, 16
        %v4772 = vrot.slane %v4770, 7
        %v4773 = vshll.u32 %v4595, 16
        %v4775 = vor.u32 %v4772, %v4773
        %v4776 = vsel %vm1022, %v4768, %v4775
        %v4778 = vshrl.u32 %v4596, 16
        %v4780 = vrot.slane %v4778, 7
        %v4781 = vrot.slane %v4780, 4
        %v4783 = vshrl.u32 %v4597, 16
        %v4785 = vrot.slane %v4783, 7
        %v4786 = vshll.u32 %v4597, 16
        %v4788 = vor.u32 %v4785, %v4786
        %v4789 = vsel %vm1022, %v4781, %v4788
        %v4790 = vrot.slane %v4785, 4
        %v4792 = vshrl.u32 %v4598, 16
        %v4794 = vrot.slane %v4792, 7
        %v4795 = vshll.u32 %v4598, 16
        %v4797 = vor.u32 %v4794, %v4795
        %v4798 = vsel %vm1022, %v4790, %v4797
        %v4800 = vshrl.u32 %v4599, 16
        %v4802 = vrot.slane %v4800, 7
        %v4803 = vrot.slane %v4802, 4
        %v4805 = vshrl.u32 %v4600, 16
        %v4807 = vrot.slane %v4805, 7
        %v4808 = vshll.u32 %v4600, 16
        %v4810 = vor.u32 %v4807, %v4808
        %v4811 = vsel %vm1022, %v4803, %v4810
        %v4812 = vrot.slane %v4807, 4
        %v4814 = vshrl.u32 %v4601, 16
        %v4816 = vrot.slane %v4814, 7
        %v4817 = vshll.u32 %v4601, 16
        %v4819 = vor.u32 %v4816, %v4817
        %v4820 = vsel %vm1022, %v4812, %v4819
        %v4822 = vshrl.u32 %v4602, 16
        %v4824 = vrot.slane %v4822, 7
        %v4825 = vrot.slane %v4824, 4
        %v4827 = vshrl.u32 %v4603, 16
        %v4829 = vrot.slane %v4827, 7
        %v4830 = vshll.u32 %v4603, 16
        %v4832 = vor.u32 %v4829, %v4830
        %v4833 = vsel %vm1022, %v4825, %v4832
        %v4834 = vrot.slane %v4829, 4
        %v4836 = vshrl.u32 %v4604, 16
        %v4838 = vrot.slane %v4836, 7
        %v4839 = vshll.u32 %v4604, 16
        %v4841 = vor.u32 %v4838, %v4839
        %v4842 = vsel %vm1022, %v4834, %v4841
        %v4844 = vshrl.u32 %v4605, 16
        %v4846 = vrot.slane %v4844, 7
        %v4847 = vrot.slane %v4846, 4
        %v4849 = vshrl.u32 %v4606, 16
        %v4851 = vrot.slane %v4849, 7
        %v4852 = vshll.u32 %v4606, 16
        %v4854 = vor.u32 %v4851, %v4852
        %v4855 = vsel %vm1022, %v4847, %v4854
        %v4856 = vrot.slane %v4851, 4
        %v4858 = vshrl.u32 %v4607, 16
        %v4860 = vrot.slane %v4858, 7
        %v4861 = vshll.u32 %v4607, 16
        %v4863 = vor.u32 %v4860, %v4861
        %v4864 = vsel %vm1022, %v4856, %v4863
        %v4866 = vshrl.u32 %v4608, 16
        %v4868 = vrot.slane %v4866, 7
        %v4869 = vrot.slane %v4868, 4
        %v4871 = vshrl.u32 %v4609, 16
        %v4873 = vrot.slane %v4871, 7
        %v4874 = vshll.u32 %v4609, 16
        %v4876 = vor.u32 %v4873, %v4874
        %v4877 = vsel %vm1022, %v4869, %v4876
        %v4878 = vrot.slane %v4873, 4
        %v4880 = vshrl.u32 %v4610, 16
        %v4882 = vrot.slane %v4880, 7
        %v4883 = vshll.u32 %v4610, 16
        %v4885 = vor.u32 %v4882, %v4883
        %v4886 = vsel %vm1022, %v4878, %v4885
        %v4888 = vshrl.u32 %v4611, 16
        %v4890 = vrot.slane %v4888, 7
        %v4891 = vrot.slane %v4890, 4
        %v4893 = vshrl.u32 %v4612, 16
        %v4895 = vrot.slane %v4893, 7
        %v4896 = vshll.u32 %v4612, 16
        %v4898 = vor.u32 %v4895, %v4896
        %v4899 = vsel %vm1022, %v4891, %v4898
        %v4900 = vrot.slane %v4895, 4
        %v4902 = vshrl.u32 %v4613, 16
        %v4904 = vrot.slane %v4902, 7
        %v4905 = vshll.u32 %v4613, 16
        %v4907 = vor.u32 %v4904, %v4905
        %v4908 = vsel %vm1022, %v4900, %v4907
        %v4910 = vshrl.u32 %v4614, 16
        %v4912 = vrot.slane %v4910, 7
        %v4913 = vrot.slane %v4912, 4
        %v4915 = vshrl.u32 %v4615, 16
        %v4917 = vrot.slane %v4915, 7
        %v4918 = vshll.u32 %v4615, 16
        %v4920 = vor.u32 %v4917, %v4918
        %v4921 = vsel %vm1022, %v4913, %v4920
        %v4922 = vrot.slane %v4917, 4
        %v4924 = vshrl.u32 %v4616, 16
        %v4926 = vrot.slane %v4924, 7
        %v4927 = vshll.u32 %v4616, 16
        %v4929 = vor.u32 %v4926, %v4927
        %v4930 = vsel %vm1022, %v4922, %v4929
        %v4932 = vshrl.u32 %v4617, 16
        %v4934 = vrot.slane %v4932, 7
        %v4935 = vrot.slane %v4934, 4
        %v4937 = vshrl.u32 %v4618, 16
        %v4939 = vrot.slane %v4937, 7
        %v4940 = vshll.u32 %v4618, 16
        %v4942 = vor.u32 %v4939, %v4940
        %v4943 = vsel %vm1022, %v4935, %v4942
        %v4944 = vrot.slane %v4939, 4
        %v4946 = vshrl.u32 %v4619, 16
        %v4948 = vrot.slane %v4946, 7
        %v4949 = vshll.u32 %v4619, 16
        %v4951 = vor.u32 %v4948, %v4949
        %v4952 = vsel %vm1022, %v4944, %v4951
        %v4954 = vshrl.u32 %v4620, 16
        %v4956 = vrot.slane %v4954, 7
        %v4957 = vrot.slane %v4956, 4
        %v4959 = vshrl.u32 %v4621, 16
        %v4961 = vrot.slane %v4959, 7
        %v4962 = vshll.u32 %v4621, 16
        %v4964 = vor.u32 %v4961, %v4962
        %v4965 = vsel %vm1022, %v4957, %v4964
        %v4966 = vrot.slane %v4961, 4
        %v4968 = vshrl.u32 %v4622, 16
        %v4970 = vrot.slane %v4968, 7
        %v4971 = vshll.u32 %v4622, 16
        %v4973 = vor.u32 %v4970, %v4971
        %v4974 = vsel %vm1022, %v4966, %v4973
        %s4975 = scalar_lea.vmem [#allocation9], 192
        %v4976 = vld [vmem:[%s4975] sm:$0xf]
        %v4977 = vld [vmem:[%s4975 + $0x4] sm:$0xf]
        %v4978 = vld [vmem:[%s4975 + $0x8] sm:$0xf]
        %v4979 = vld [vmem:[%s4975 + $0xc] sm:$0xf]
        %v4980 = vld [vmem:[%s4975 + $0x10] sm:$0xf]
        %v4981 = vld [vmem:[%s4975 + $0x14] sm:$0xf]
        %v4982 = vld [vmem:[%s4975 + $0x18] sm:$0xf]
        %v4983 = vld [vmem:[%s4975 + $0x1c] sm:$0xf]
        %v4984 = vunpack.c.l.b16 %v4635
        %v4985 = vunpack.c.l.b16 %v4644
        %v4986 = vunpack.c.l.b16 %v4657
        %v4987 = vunpack.c.l.b16 %v4666
        %v4988 = vunpack.c.l.b16 %v4679
        %v4989 = vunpack.c.l.b16 %v4688
        %v4990 = vunpack.c.l.b16 %v4701
        %v4991 = vunpack.c.l.b16 %v4710
        %v4992 = vunpack.c.l.b16 %v4723
        %v4993 = vunpack.c.l.b16 %v4732
        %v4994 = vunpack.c.l.b16 %v4745
        %v4995 = vunpack.c.l.b16 %v4754
        %v4996 = vunpack.c.l.b16 %v4767
        %v4997 = vunpack.c.l.b16 %v4776
        %v4998 = vunpack.c.l.b16 %v4789
        %v4999 = vunpack.c.l.b16 %v4798
        %v5000 = vunpack.c.l.b16 %v4811
        %v5001 = vunpack.c.l.b16 %v4820
        %v5002 = vunpack.c.l.b16 %v4833
        %v5003 = vunpack.c.l.b16 %v4842
        %v5004 = vunpack.c.l.b16 %v4855
        %v5005 = vunpack.c.l.b16 %v4864
        %v5006 = vunpack.c.l.b16 %v4877
        %v5007 = vunpack.c.l.b16 %v4886
        %v5008 = vunpack.c.l.b16 %v4899
        %v5009 = vunpack.c.l.b16 %v4908
        %v5010 = vunpack.c.l.b16 %v4921
        %v5011 = vunpack.c.l.b16 %v4930
        %v5012 = vunpack.c.l.b16 %v4943
        %v5013 = vunpack.c.l.b16 %v4952
        %v5014 = vunpack.c.l.b16 %v4965
        %v5015 = vunpack.c.l.b16 %v4974
        %v5016 = vpack.c.b16 %v4985, %v4984
        %v5017 = vpack.c.b16 %v4987, %v4986
        %v5018 = vpack.c.b16 %v4989, %v4988
        %v5019 = vpack.c.b16 %v4991, %v4990
        %v5020 = vpack.c.b16 %v4993, %v4992
        %v5021 = vpack.c.b16 %v4995, %v4994
        %v5022 = vpack.c.b16 %v4997, %v4996
        %v5023 = vpack.c.b16 %v4999, %v4998
        %v5024 = vpack.c.b16 %v5001, %v5000
        %v5025 = vpack.c.b16 %v5003, %v5002
        %v5026 = vpack.c.b16 %v5005, %v5004
        %v5027 = vpack.c.b16 %v5007, %v5006
        %v5028 = vpack.c.b16 %v5009, %v5008
        %v5029 = vpack.c.b16 %v5011, %v5010
        %v5030 = vpack.c.b16 %v5013, %v5012
        %v5031 = vpack.c.b16 %v5015, %v5014
        %v5040 = vunpack.c.l.b16 %v4976
        %v5041 = vunpack.c.l.b16 %v4977
        %v5042 = vunpack.c.l.b16 %v4978
        %v5043 = vunpack.c.l.b16 %v4979
        %v5044 = vunpack.c.l.b16 %v4980
        %v5045 = vunpack.c.l.b16 %v4981
        %v5046 = vunpack.c.l.b16 %v4982
        %v5047 = vunpack.c.l.b16 %v4983
        %v5048 = vpack.c.b16 %v5041, %v5040
        %v5049 = vpack.c.b16 %v5043, %v5042
        %v5050 = vpack.c.b16 %v5045, %v5044
        %v5051 = vpack.c.b16 %v5047, %v5046
        %v5057 = vsel %vm1496, %v5016, 0
        %v5060 = vsel %vm1496, %v5017, 0
        %v5063 = vsel %vm1496, %v5018, 0
        %v5066 = vsel %vm1496, %v5019, 0
        %v5069 = vsel %vm1496, %v5020, 0
        %v5072 = vsel %vm1496, %v5021, 0
        %v5075 = vsel %vm1496, %v5022, 0
        %v5078 = vsel %vm1496, %v5023, 0
        %v5081 = vsel %vm1496, %v5024, 0
        %v5084 = vsel %vm1496, %v5025, 0
        %v5087 = vsel %vm1496, %v5026, 0
        %v5090 = vsel %vm1496, %v5027, 0
        %v5093 = vsel %vm1496, %v5028, 0
        %v5096 = vsel %vm1496, %v5029, 0
        %v5099 = vsel %vm1496, %v5030, 0
        %v5102 = vsel %vm1496, %v5031, 0
        %5104 = vmatprep.subr.bf16.mxu0 0
        %5105 = vmatpush1.bf16.msra.mxu0 0
        %5106 = vmatprep.subr.bf16.mxu0 0
        %5107 = vmatpush1.bf16.msra.mxu0 0
        %5108 = vmatprep.subr.bf16.mxu0 0
        %5109 = vmatpush1.bf16.msra.mxu0 0
        %5110 = vmatprep.subr.bf16.mxu0 0
        %5111 = vmatpush1.bf16.msra.mxu0 0
        %5112 = vmatprep.subr.bf16.mxu0 0
        %5113 = vmatpush1.bf16.msra.mxu0 %v5051
        %5114 = vmatprep.subr.bf16.mxu0 0
        %5115 = vmatpush1.bf16.msra.mxu0 %v5050
        %5116 = vmatprep.subr.bf16.mxu0 0
        %5117 = vmatpush1.bf16.msra.mxu0 %v5049
        %5118 = vmatprep.subr.bf16.mxu0 0
        %5119 = vmatpush1.bf16.msra.mxu0 %v5048
        %5120 = vmatprep.subr.bf16.mxu0 0
        %5121 = vmatpush2.bf16.msra.mxu0 0
        %5122 = vmatprep.subr.bf16.mxu0 0
        %5123 = vmatpush2.bf16.msra.mxu0 0
        %5124 = vmatprep.subr.bf16.mxu0 0
        %5125 = vmatpush2.bf16.msra.mxu0 0
        %5126 = vmatprep.subr.bf16.mxu0 0
        %5127 = vmatpush2.bf16.msra.mxu0 0
        %5128 = vmatprep.subr.bf16.mxu0 0
        %5129 = vmatpush2.bf16.msra.mxu0 0
        %5130 = vmatprep.subr.bf16.mxu0 0
        %5131 = vmatpush2.bf16.msra.mxu0 0
        %5132 = vmatprep.subr.bf16.mxu0 0
        %5133 = vmatpush2.bf16.msra.mxu0 0
        %5134 = vmatprep.subr.bf16.mxu0 0
        %5135 = vmatpush2.bf16.msra.mxu0 0
        %5136 = vmatprep.mubr.bf16.mxu0 0
        %5137 = vmatmul.mubr.bf16.gmra.mxu0 %v5057
        %v5138 = vpop.f32.mrf.mxu0
        %v5139 = vadd.f32 0.0, %v5138
        %v5140 = vpop.f32.mrf.mxu0
        %v5141 = vpop.f32.mrf.mxu0
        %v5142 = vadd.f32 0.0, %v5141
        %v5143 = vpop.f32.mrf.mxu0
        %5144 = vmatprep.mubr.bf16.mxu0 0
        %5145 = vmatmul.mubr.bf16.gmra.mxu0 %v5060
        %v5146 = vpop.f32.mrf.mxu0
        %v5147 = vadd.f32 0.0, %v5146
        %v5148 = vpop.f32.mrf.mxu0
        %v5149 = vpop.f32.mrf.mxu0
        %v5150 = vadd.f32 0.0, %v5149
        %v5151 = vpop.f32.mrf.mxu0
        %5152 = vmatprep.mubr.bf16.mxu0 0
        %5153 = vmatmul.mubr.bf16.gmra.mxu0 %v5063
        %v5154 = vpop.f32.mrf.mxu0
        %v5155 = vadd.f32 0.0, %v5154
        %v5156 = vpop.f32.mrf.mxu0
        %v5157 = vpop.f32.mrf.mxu0
        %v5158 = vadd.f32 0.0, %v5157
        %v5159 = vpop.f32.mrf.mxu0
        %5160 = vmatprep.mubr.bf16.mxu0 0
        %5161 = vmatmul.mubr.bf16.gmra.mxu0 %v5066
        %v5162 = vpop.f32.mrf.mxu0
        %v5163 = vadd.f32 0.0, %v5162
        %v5164 = vpop.f32.mrf.mxu0
        %v5165 = vpop.f32.mrf.mxu0
        %v5166 = vadd.f32 0.0, %v5165
        %v5167 = vpop.f32.mrf.mxu0
        %5168 = vmatprep.mubr.bf16.mxu0 0
        %5169 = vmatmul.mubr.bf16.gmra.mxu0 %v5069
        %v5170 = vpop.f32.mrf.mxu0
        %v5171 = vadd.f32 0.0, %v5170
        %v5172 = vpop.f32.mrf.mxu0
        %v5173 = vpop.f32.mrf.mxu0
        %v5174 = vadd.f32 0.0, %v5173
        %v5175 = vpop.f32.mrf.mxu0
        %5176 = vmatprep.mubr.bf16.mxu0 0
        %5177 = vmatmul.mubr.bf16.gmra.mxu0 %v5072
        %v5178 = vpop.f32.mrf.mxu0
        %v5179 = vadd.f32 0.0, %v5178
        %v5180 = vpop.f32.mrf.mxu0
        %v5181 = vpop.f32.mrf.mxu0
        %v5182 = vadd.f32 0.0, %v5181
        %v5183 = vpop.f32.mrf.mxu0
        %5184 = vmatprep.mubr.bf16.mxu0 0
        %5185 = vmatmul.mubr.bf16.gmra.mxu0 %v5075
        %v5186 = vpop.f32.mrf.mxu0
        %v5187 = vadd.f32 0.0, %v5186
        %v5188 = vpop.f32.mrf.mxu0
        %v5189 = vpop.f32.mrf.mxu0
        %v5190 = vadd.f32 0.0, %v5189
        %v5191 = vpop.f32.mrf.mxu0
        %5192 = vmatprep.mubr.bf16.mxu0 0
        %5193 = vmatmul.mubr.bf16.gmra.mxu0 %v5078
        %v5194 = vpop.f32.mrf.mxu0
        %v5195 = vadd.f32 0.0, %v5194
        %v5196 = vpop.f32.mrf.mxu0
        %v5197 = vpop.f32.mrf.mxu0
        %v5198 = vadd.f32 0.0, %v5197
        %v5199 = vpop.f32.mrf.mxu0
        %5200 = vmatprep.mubr.bf16.mxu0 0
        %5201 = vmatmul.mubr.bf16.gmra.mxu0 %v5081
        %v5202 = vpop.f32.mrf.mxu0
        %v5203 = vadd.f32 0.0, %v5202
        %v5204 = vpop.f32.mrf.mxu0
        %v5205 = vpop.f32.mrf.mxu0
        %v5206 = vadd.f32 0.0, %v5205
        %v5207 = vpop.f32.mrf.mxu0
        %5208 = vmatprep.mubr.bf16.mxu0 0
        %5209 = vmatmul.mubr.bf16.gmra.mxu0 %v5084
        %v5210 = vpop.f32.mrf.mxu0
        %v5211 = vadd.f32 0.0, %v5210
        %v5212 = vpop.f32.mrf.mxu0
        %v5213 = vpop.f32.mrf.mxu0
        %v5214 = vadd.f32 0.0, %v5213
        %v5215 = vpop.f32.mrf.mxu0
        %5216 = vmatprep.mubr.bf16.mxu0 0
        %5217 = vmatmul.mubr.bf16.gmra.mxu0 %v5087
        %v5218 = vpop.f32.mrf.mxu0
        %v5219 = vadd.f32 0.0, %v5218
        %v5220 = vpop.f32.mrf.mxu0
        %v5221 = vpop.f32.mrf.mxu0
        %v5222 = vadd.f32 0.0, %v5221
        %v5223 = vpop.f32.mrf.mxu0
        %5224 = vmatprep.mubr.bf16.mxu0 0
        %5225 = vmatmul.mubr.bf16.gmra.mxu0 %v5090
        %v5226 = vpop.f32.mrf.mxu0
        %v5227 = vadd.f32 0.0, %v5226
        %v5228 = vpop.f32.mrf.mxu0
        %v5229 = vpop.f32.mrf.mxu0
        %v5230 = vadd.f32 0.0, %v5229
        %v5231 = vpop.f32.mrf.mxu0
        %5232 = vmatprep.mubr.bf16.mxu0 0
        %5233 = vmatmul.mubr.bf16.gmra.mxu0 %v5093
        %v5234 = vpop.f32.mrf.mxu0
        %v5235 = vadd.f32 0.0, %v5234
        %v5236 = vpop.f32.mrf.mxu0
        %v5237 = vpop.f32.mrf.mxu0
        %v5238 = vadd.f32 0.0, %v5237
        %v5239 = vpop.f32.mrf.mxu0
        %5240 = vmatprep.mubr.bf16.mxu0 0
        %5241 = vmatmul.mubr.bf16.gmra.mxu0 %v5096
        %v5242 = vpop.f32.mrf.mxu0
        %v5243 = vadd.f32 0.0, %v5242
        %v5244 = vpop.f32.mrf.mxu0
        %v5245 = vpop.f32.mrf.mxu0
        %v5246 = vadd.f32 0.0, %v5245
        %v5247 = vpop.f32.mrf.mxu0
        %5248 = vmatprep.mubr.bf16.mxu0 0
        %5249 = vmatmul.mubr.bf16.gmra.mxu0 %v5099
        %v5250 = vpop.f32.mrf.mxu0
        %v5251 = vadd.f32 0.0, %v5250
        %v5252 = vpop.f32.mrf.mxu0
        %v5253 = vpop.f32.mrf.mxu0
        %v5254 = vadd.f32 0.0, %v5253
        %v5255 = vpop.f32.mrf.mxu0
        %5256 = vmatprep.mubr.bf16.mxu0 0
        %5257 = vmatmul.mubr.bf16.gmra.mxu0 %v5102
        %v5258 = vpop.f32.mrf.mxu0
        %v5259 = vadd.f32 0.0, %v5258
        %v5260 = vpop.f32.mrf.mxu0
        %v5261 = vpop.f32.mrf.mxu0
        %v5262 = vadd.f32 0.0, %v5261
        %v5263 = vpop.f32.mrf.mxu0
        %5264 = vdwg.mxu0
        %v5265 = vadd.f32 %v4542, %v5139
        %v5266 = vadd.f32 %v4543, %v5142
        %v5267 = vadd.f32 %v4544, %v5147
        %v5268 = vadd.f32 %v4545, %v5150
        %v5269 = vadd.f32 %v4546, %v5155
        %v5270 = vadd.f32 %v4547, %v5158
        %v5271 = vadd.f32 %v4548, %v5163
        %v5272 = vadd.f32 %v4549, %v5166
        %v5273 = vadd.f32 %v4550, %v5171
        %v5274 = vadd.f32 %v4551, %v5174
        %v5275 = vadd.f32 %v4552, %v5179
        %v5276 = vadd.f32 %v4553, %v5182
        %v5277 = vadd.f32 %v4554, %v5187
        %v5278 = vadd.f32 %v4555, %v5190
        %v5279 = vadd.f32 %v4556, %v5195
        %v5280 = vadd.f32 %v4557, %v5198
        %v5281 = vadd.f32 %v4558, %v5203
        %v5282 = vadd.f32 %v4559, %v5206
        %v5283 = vadd.f32 %v4560, %v5211
        %v5284 = vadd.f32 %v4561, %v5214
        %v5285 = vadd.f32 %v4562, %v5219
        %v5286 = vadd.f32 %v4563, %v5222
        %v5287 = vadd.f32 %v4564, %v5227
        %v5288 = vadd.f32 %v4565, %v5230
        %v5289 = vadd.f32 %v4566, %v5235
        %v5290 = vadd.f32 %v4567, %v5238
        %v5291 = vadd.f32 %v4568, %v5243
        %v5292 = vadd.f32 %v4569, %v5246
        %v5293 = vadd.f32 %v4570, %v5251
        %v5294 = vadd.f32 %v4571, %v5254
        %v5295 = vadd.f32 %v4572, %v5259
        %v5296 = vadd.f32 %v4573, %v5262
        %s5297 = scalar_lea.vmem [#allocation9], 224
        %v5298 = vld [vmem:[%s5297] sm:$0xf]
        %v5299 = vld [vmem:[%s5297 + $0x4] sm:$0xf]
        %v5300 = vld [vmem:[%s5297 + $0x8] sm:$0xf]
        %v5301 = vld [vmem:[%s5297 + $0xc] sm:$0xf]
        %v5302 = vld [vmem:[%s5297 + $0x10] sm:$0xf]
        %v5303 = vld [vmem:[%s5297 + $0x14] sm:$0xf]
        %v5304 = vld [vmem:[%s5297 + $0x18] sm:$0xf]
        %v5305 = vld [vmem:[%s5297 + $0x1c] sm:$0xf]
        %v5338 = vunpack.c.l.b16 %v4576
        %v5339 = vunpack.c.l.b16 %v4577
        %v5340 = vunpack.c.l.b16 %v4579
        %v5341 = vunpack.c.l.b16 %v4580
        %v5342 = vunpack.c.l.b16 %v4582
        %v5343 = vunpack.c.l.b16 %v4583
        %v5344 = vunpack.c.l.b16 %v4585
        %v5345 = vunpack.c.l.b16 %v4586
        %v5346 = vunpack.c.l.b16 %v4588
        %v5347 = vunpack.c.l.b16 %v4589
        %v5348 = vunpack.c.l.b16 %v4591
        %v5349 = vunpack.c.l.b16 %v4592
        %v5350 = vunpack.c.l.b16 %v4594
        %v5351 = vunpack.c.l.b16 %v4595
        %v5352 = vunpack.c.l.b16 %v4597
        %v5353 = vunpack.c.l.b16 %v4598
        %v5354 = vunpack.c.l.b16 %v4600
        %v5355 = vunpack.c.l.b16 %v4601
        %v5356 = vunpack.c.l.b16 %v4603
        %v5357 = vunpack.c.l.b16 %v4604
        %v5358 = vunpack.c.l.b16 %v4606
        %v5359 = vunpack.c.l.b16 %v4607
        %v5360 = vunpack.c.l.b16 %v4609
        %v5361 = vunpack.c.l.b16 %v4610
        %v5362 = vunpack.c.l.b16 %v4612
        %v5363 = vunpack.c.l.b16 %v4613
        %v5364 = vunpack.c.l.b16 %v4615
        %v5365 = vunpack.c.l.b16 %v4616
        %v5366 = vunpack.c.l.b16 %v4618
        %v5367 = vunpack.c.l.b16 %v4619
        %v5368 = vunpack.c.l.b16 %v4621
        %v5369 = vunpack.c.l.b16 %v4622
        %v5370 = vpack.c.b16 %v5339, %v5338
        %v5371 = vpack.c.b16 %v5341, %v5340
        %v5372 = vpack.c.b16 %v5343, %v5342
        %v5373 = vpack.c.b16 %v5345, %v5344
        %v5374 = vpack.c.b16 %v5347, %v5346
        %v5375 = vpack.c.b16 %v5349, %v5348
        %v5376 = vpack.c.b16 %v5351, %v5350
        %v5377 = vpack.c.b16 %v5353, %v5352
        %v5378 = vpack.c.b16 %v5355, %v5354
        %v5379 = vpack.c.b16 %v5357, %v5356
        %v5380 = vpack.c.b16 %v5359, %v5358
        %v5381 = vpack.c.b16 %v5361, %v5360
        %v5382 = vpack.c.b16 %v5363, %v5362
        %v5383 = vpack.c.b16 %v5365, %v5364
        %v5384 = vpack.c.b16 %v5367, %v5366
        %v5385 = vpack.c.b16 %v5369, %v5368
        %v5394 = vunpack.c.l.b16 %v5298
        %v5395 = vunpack.c.l.b16 %v5299
        %v5396 = vunpack.c.l.b16 %v5300
        %v5397 = vunpack.c.l.b16 %v5301
        %v5398 = vunpack.c.l.b16 %v5302
        %v5399 = vunpack.c.l.b16 %v5303
        %v5400 = vunpack.c.l.b16 %v5304
        %v5401 = vunpack.c.l.b16 %v5305
        %v5402 = vpack.c.b16 %v5395, %v5394
        %v5403 = vpack.c.b16 %v5397, %v5396
        %v5404 = vpack.c.b16 %v5399, %v5398
        %v5405 = vpack.c.b16 %v5401, %v5400
        %v5411 = vsel %vm1496, %v5370, 0
        %v5414 = vsel %vm1496, %v5371, 0
        %v5417 = vsel %vm1496, %v5372, 0
        %v5420 = vsel %vm1496, %v5373, 0
        %v5423 = vsel %vm1496, %v5374, 0
        %v5426 = vsel %vm1496, %v5375, 0
        %v5429 = vsel %vm1496, %v5376, 0
        %v5432 = vsel %vm1496, %v5377, 0
        %v5435 = vsel %vm1496, %v5378, 0
        %v5438 = vsel %vm1496, %v5379, 0
        %v5441 = vsel %vm1496, %v5380, 0
        %v5444 = vsel %vm1496, %v5381, 0
        %v5447 = vsel %vm1496, %v5382, 0
        %v5450 = vsel %vm1496, %v5383, 0
        %v5453 = vsel %vm1496, %v5384, 0
        %v5456 = vsel %vm1496, %v5385, 0
        %5458 = vmatprep.subr.bf16.mxu0 0
        %5459 = vmatpush1.bf16.msra.mxu0 0
        %5460 = vmatprep.subr.bf16.mxu0 0
        %5461 = vmatpush1.bf16.msra.mxu0 0
        %5462 = vmatprep.subr.bf16.mxu0 0
        %5463 = vmatpush1.bf16.msra.mxu0 0
        %5464 = vmatprep.subr.bf16.mxu0 0
        %5465 = vmatpush1.bf16.msra.mxu0 0
        %5466 = vmatprep.subr.bf16.mxu0 0
        %5467 = vmatpush1.bf16.msra.mxu0 %v5405
        %5468 = vmatprep.subr.bf16.mxu0 0
        %5469 = vmatpush1.bf16.msra.mxu0 %v5404
        %5470 = vmatprep.subr.bf16.mxu0 0
        %5471 = vmatpush1.bf16.msra.mxu0 %v5403
        %5472 = vmatprep.subr.bf16.mxu0 0
        %5473 = vmatpush1.bf16.msra.mxu0 %v5402
        %5474 = vmatprep.subr.bf16.mxu0 0
        %5475 = vmatpush2.bf16.msra.mxu0 0
        %5476 = vmatprep.subr.bf16.mxu0 0
        %5477 = vmatpush2.bf16.msra.mxu0 0
        %5478 = vmatprep.subr.bf16.mxu0 0
        %5479 = vmatpush2.bf16.msra.mxu0 0
        %5480 = vmatprep.subr.bf16.mxu0 0
        %5481 = vmatpush2.bf16.msra.mxu0 0
        %5482 = vmatprep.subr.bf16.mxu0 0
        %5483 = vmatpush2.bf16.msra.mxu0 0
        %5484 = vmatprep.subr.bf16.mxu0 0
        %5485 = vmatpush2.bf16.msra.mxu0 0
        %5486 = vmatprep.subr.bf16.mxu0 0
        %5487 = vmatpush2.bf16.msra.mxu0 0
        %5488 = vmatprep.subr.bf16.mxu0 0
        %5489 = vmatpush2.bf16.msra.mxu0 0
        %5490 = vmatprep.mubr.bf16.mxu0 0
        %5491 = vmatmul.mubr.bf16.gmra.mxu0 %v5411
        %v5492 = vpop.f32.mrf.mxu0
        %v5493 = vadd.f32 0.0, %v5492
        %v5494 = vpop.f32.mrf.mxu0
        %v5495 = vpop.f32.mrf.mxu0
        %v5496 = vadd.f32 0.0, %v5495
        %v5497 = vpop.f32.mrf.mxu0
        %5498 = vmatprep.mubr.bf16.mxu0 0
        %5499 = vmatmul.mubr.bf16.gmra.mxu0 %v5414
        %v5500 = vpop.f32.mrf.mxu0
        %v5501 = vadd.f32 0.0, %v5500
        %v5502 = vpop.f32.mrf.mxu0
        %v5503 = vpop.f32.mrf.mxu0
        %v5504 = vadd.f32 0.0, %v5503
        %v5505 = vpop.f32.mrf.mxu0
        %5506 = vmatprep.mubr.bf16.mxu0 0
        %5507 = vmatmul.mubr.bf16.gmra.mxu0 %v5417
        %v5508 = vpop.f32.mrf.mxu0
        %v5509 = vadd.f32 0.0, %v5508
        %v5510 = vpop.f32.mrf.mxu0
        %v5511 = vpop.f32.mrf.mxu0
        %v5512 = vadd.f32 0.0, %v5511
        %v5513 = vpop.f32.mrf.mxu0
        %5514 = vmatprep.mubr.bf16.mxu0 0
        %5515 = vmatmul.mubr.bf16.gmra.mxu0 %v5420
        %v5516 = vpop.f32.mrf.mxu0
        %v5517 = vadd.f32 0.0, %v5516
        %v5518 = vpop.f32.mrf.mxu0
        %v5519 = vpop.f32.mrf.mxu0
        %v5520 = vadd.f32 0.0, %v5519
        %v5521 = vpop.f32.mrf.mxu0
        %5522 = vmatprep.mubr.bf16.mxu0 0
        %5523 = vmatmul.mubr.bf16.gmra.mxu0 %v5423
        %v5524 = vpop.f32.mrf.mxu0
        %v5525 = vadd.f32 0.0, %v5524
        %v5526 = vpop.f32.mrf.mxu0
        %v5527 = vpop.f32.mrf.mxu0
        %v5528 = vadd.f32 0.0, %v5527
        %v5529 = vpop.f32.mrf.mxu0
        %5530 = vmatprep.mubr.bf16.mxu0 0
        %5531 = vmatmul.mubr.bf16.gmra.mxu0 %v5426
        %v5532 = vpop.f32.mrf.mxu0
        %v5533 = vadd.f32 0.0, %v5532
        %v5534 = vpop.f32.mrf.mxu0
        %v5535 = vpop.f32.mrf.mxu0
        %v5536 = vadd.f32 0.0, %v5535
        %v5537 = vpop.f32.mrf.mxu0
        %5538 = vmatprep.mubr.bf16.mxu0 0
        %5539 = vmatmul.mubr.bf16.gmra.mxu0 %v5429
        %v5540 = vpop.f32.mrf.mxu0
        %v5541 = vadd.f32 0.0, %v5540
        %v5542 = vpop.f32.mrf.mxu0
        %v5543 = vpop.f32.mrf.mxu0
        %v5544 = vadd.f32 0.0, %v5543
        %v5545 = vpop.f32.mrf.mxu0
        %5546 = vmatprep.mubr.bf16.mxu0 0
        %5547 = vmatmul.mubr.bf16.gmra.mxu0 %v5432
        %v5548 = vpop.f32.mrf.mxu0
        %v5549 = vadd.f32 0.0, %v5548
        %v5550 = vpop.f32.mrf.mxu0
        %v5551 = vpop.f32.mrf.mxu0
        %v5552 = vadd.f32 0.0, %v5551
        %v5553 = vpop.f32.mrf.mxu0
        %5554 = vmatprep.mubr.bf16.mxu0 0
        %5555 = vmatmul.mubr.bf16.gmra.mxu0 %v5435
        %v5556 = vpop.f32.mrf.mxu0
        %v5557 = vadd.f32 0.0, %v5556
        %v5558 = vpop.f32.mrf.mxu0
        %v5559 = vpop.f32.mrf.mxu0
        %v5560 = vadd.f32 0.0, %v5559
        %v5561 = vpop.f32.mrf.mxu0
        %5562 = vmatprep.mubr.bf16.mxu0 0
        %5563 = vmatmul.mubr.bf16.gmra.mxu0 %v5438
        %v5564 = vpop.f32.mrf.mxu0
        %v5565 = vadd.f32 0.0, %v5564
        %v5566 = vpop.f32.mrf.mxu0
        %v5567 = vpop.f32.mrf.mxu0
        %v5568 = vadd.f32 0.0, %v5567
        %v5569 = vpop.f32.mrf.mxu0
        %5570 = vmatprep.mubr.bf16.mxu0 0
        %5571 = vmatmul.mubr.bf16.gmra.mxu0 %v5441
        %v5572 = vpop.f32.mrf.mxu0
        %v5573 = vadd.f32 0.0, %v5572
        %v5574 = vpop.f32.mrf.mxu0
        %v5575 = vpop.f32.mrf.mxu0
        %v5576 = vadd.f32 0.0, %v5575
        %v5577 = vpop.f32.mrf.mxu0
        %5578 = vmatprep.mubr.bf16.mxu0 0
        %5579 = vmatmul.mubr.bf16.gmra.mxu0 %v5444
        %v5580 = vpop.f32.mrf.mxu0
        %v5581 = vadd.f32 0.0, %v5580
        %v5582 = vpop.f32.mrf.mxu0
        %v5583 = vpop.f32.mrf.mxu0
        %v5584 = vadd.f32 0.0, %v5583
        %v5585 = vpop.f32.mrf.mxu0
        %5586 = vmatprep.mubr.bf16.mxu0 0
        %5587 = vmatmul.mubr.bf16.gmra.mxu0 %v5447
        %v5588 = vpop.f32.mrf.mxu0
        %v5589 = vadd.f32 0.0, %v5588
        %v5590 = vpop.f32.mrf.mxu0
        %v5591 = vpop.f32.mrf.mxu0
        %v5592 = vadd.f32 0.0, %v5591
        %v5593 = vpop.f32.mrf.mxu0
        %5594 = vmatprep.mubr.bf16.mxu0 0
        %5595 = vmatmul.mubr.bf16.gmra.mxu0 %v5450
        %v5596 = vpop.f32.mrf.mxu0
        %v5597 = vadd.f32 0.0, %v5596
        %v5598 = vpop.f32.mrf.mxu0
        %v5599 = vpop.f32.mrf.mxu0
        %v5600 = vadd.f32 0.0, %v5599
        %v5601 = vpop.f32.mrf.mxu0
        %5602 = vmatprep.mubr.bf16.mxu0 0
        %5603 = vmatmul.mubr.bf16.gmra.mxu0 %v5453
        %v5604 = vpop.f32.mrf.mxu0
        %v5605 = vadd.f32 0.0, %v5604
        %v5606 = vpop.f32.mrf.mxu0
        %v5607 = vpop.f32.mrf.mxu0
        %v5608 = vadd.f32 0.0, %v5607
        %v5609 = vpop.f32.mrf.mxu0
        %5610 = vmatprep.mubr.bf16.mxu0 0
        %5611 = vmatmul.mubr.bf16.gmra.mxu0 %v5456
        %v5612 = vpop.f32.mrf.mxu0
        %v5613 = vadd.f32 0.0, %v5612
        %v5614 = vpop.f32.mrf.mxu0
        %v5615 = vpop.f32.mrf.mxu0
        %v5616 = vadd.f32 0.0, %v5615
        %v5617 = vpop.f32.mrf.mxu0
        %5618 = vdwg.mxu0
        %v5619 = vadd.f32 %v5265, %v5493
        %v5620 = vadd.f32 %v5266, %v5496
        %v5621 = vadd.f32 %v5267, %v5501
        %v5622 = vadd.f32 %v5268, %v5504
        %v5623 = vadd.f32 %v5269, %v5509
        %v5624 = vadd.f32 %v5270, %v5512
        %v5625 = vadd.f32 %v5271, %v5517
        %v5626 = vadd.f32 %v5272, %v5520
        %v5627 = vadd.f32 %v5273, %v5525
        %v5628 = vadd.f32 %v5274, %v5528
        %v5629 = vadd.f32 %v5275, %v5533
        %v5630 = vadd.f32 %v5276, %v5536
        %v5631 = vadd.f32 %v5277, %v5541
        %v5632 = vadd.f32 %v5278, %v5544
        %v5633 = vadd.f32 %v5279, %v5549
        %v5634 = vadd.f32 %v5280, %v5552
        %v5635 = vadd.f32 %v5281, %v5557
        %v5636 = vadd.f32 %v5282, %v5560
        %v5637 = vadd.f32 %v5283, %v5565
        %v5638 = vadd.f32 %v5284, %v5568
        %v5639 = vadd.f32 %v5285, %v5573
        %v5640 = vadd.f32 %v5286, %v5576
        %v5641 = vadd.f32 %v5287, %v5581
        %v5642 = vadd.f32 %v5288, %v5584
        %v5643 = vadd.f32 %v5289, %v5589
        %v5644 = vadd.f32 %v5290, %v5592
        %v5645 = vadd.f32 %v5291, %v5597
        %v5646 = vadd.f32 %v5292, %v5600
        %v5647 = vadd.f32 %v5293, %v5605
        %v5648 = vadd.f32 %v5294, %v5608
        %v5649 = vadd.f32 %v5295, %v5613
        %v5650 = vadd.f32 %v5296, %v5616
        %v5651 = vld [vmem:[%s4574 + $0x4] sm:$0xf]
        %v5652 = vld [vmem:[%s4574 + $0x8] sm:$0xf]
        %v5653 = vld [vmem:[%s4574 + $0xc] sm:$0x1]
        %v5654 = vld [vmem:[%s4574 + $0x14] sm:$0xf]
        %v5655 = vld [vmem:[%s4574 + $0x18] sm:$0xf]
        %v5656 = vld [vmem:[%s4574 + $0x1c] sm:$0x1]
        %v5657 = vld [vmem:[%s4574 + $0x24] sm:$0xf]
        %v5658 = vld [vmem:[%s4574 + $0x28] sm:$0xf]
        %v5659 = vld [vmem:[%s4574 + $0x2c] sm:$0x1]
        %v5660 = vld [vmem:[%s4574 + $0x34] sm:$0xf]
        %v5661 = vld [vmem:[%s4574 + $0x38] sm:$0xf]
        %v5662 = vld [vmem:[%s4574 + $0x3c] sm:$0x1]
        %v5663 = vld [vmem:[%s4574 + $0x44] sm:$0xf]
        %v5664 = vld [vmem:[%s4574 + $0x48] sm:$0xf]
        %v5665 = vld [vmem:[%s4574 + $0x4c] sm:$0x1]
        %v5666 = vld [vmem:[%s4574 + $0x54] sm:$0xf]
        %v5667 = vld [vmem:[%s4574 + $0x58] sm:$0xf]
        %v5668 = vld [vmem:[%s4574 + $0x5c] sm:$0x1]
        %v5669 = vld [vmem:[%s4574 + $0x64] sm:$0xf]
        %v5670 = vld [vmem:[%s4574 + $0x68] sm:$0xf]
        %v5671 = vld [vmem:[%s4574 + $0x6c] sm:$0x1]
        %v5672 = vld [vmem:[%s4574 + $0x74] sm:$0xf]
        %v5673 = vld [vmem:[%s4574 + $0x78] sm:$0xf]
        %v5674 = vld [vmem:[%s4574 + $0x7c] sm:$0x1]
        %v5675 = vld [vmem:[%s4574 + $0x84] sm:$0xf]
        %v5676 = vld [vmem:[%s4574 + $0x88] sm:$0xf]
        %v5677 = vld [vmem:[%s4574 + $0x8c] sm:$0x1]
        %v5678 = vld [vmem:[%s4574 + $0x94] sm:$0xf]
        %v5679 = vld [vmem:[%s4574 + $0x98] sm:$0xf]
        %v5680 = vld [vmem:[%s4574 + $0x9c] sm:$0x1]
        %v5681 = vld [vmem:[%s4574 + $0xa4] sm:$0xf]
        %v5682 = vld [vmem:[%s4574 + $0xa8] sm:$0xf]
        %v5683 = vld [vmem:[%s4574 + $0xac] sm:$0x1]
        %v5684 = vld [vmem:[%s4574 + $0xb4] sm:$0xf]
        %v5685 = vld [vmem:[%s4574 + $0xb8] sm:$0xf]
        %v5686 = vld [vmem:[%s4574 + $0xbc] sm:$0x1]
        %v5687 = vld [vmem:[%s4574 + $0xc4] sm:$0xf]
        %v5688 = vld [vmem:[%s4574 + $0xc8] sm:$0xf]
        %v5689 = vld [vmem:[%s4574 + $0xcc] sm:$0x1]
        %v5690 = vld [vmem:[%s4574 + $0xd4] sm:$0xf]
        %v5691 = vld [vmem:[%s4574 + $0xd8] sm:$0xf]
        %v5692 = vld [vmem:[%s4574 + $0xdc] sm:$0x1]
        %v5693 = vld [vmem:[%s4574 + $0xe4] sm:$0xf]
        %v5694 = vld [vmem:[%s4574 + $0xe8] sm:$0xf]
        %v5695 = vld [vmem:[%s4574 + $0xec] sm:$0x1]
        %v5696 = vld [vmem:[%s4574 + $0xf4] sm:$0xf]
        %v5697 = vld [vmem:[%s4574 + $0xf8] sm:$0xf]
        %v5698 = vld [vmem:[%s4574 + $0xfc] sm:$0x1]
        %v5700 = vshrl.u32 %v5651, 16
        %v5702 = vrot.slane %v5700, 4
        %v5703 = vshll.u32 %v5651, 16
        %v5705 = vrot.slane %v5703, 5
        %v5706 = vor.u32 %v5702, %v5705
        %v5707 = vrot.slane %v5706, 4
        %v5709 = vshll.u32 %v5652, 16
        %v5711 = vrot.slane %v5709, 5
        %v5712 = vsel %vm2037, %v5707, %v5711
        %v5713 = vshrl.u32 %v5652, 16
        %v5715 = vrot.slane %v5713, 4
        %v5716 = vor.u32 %v5715, %v5711
        %v5717 = vrot.slane %v5716, 4
        %v5719 = vshll.u32 %v5653, 16
        %v5721 = vrot.slane %v5719, 5
        %v5722 = vsel %vm2037, %v5717, %v5721
        %v5724 = vshrl.u32 %v5654, 16
        %v5726 = vrot.slane %v5724, 4
        %v5727 = vshll.u32 %v5654, 16
        %v5729 = vrot.slane %v5727, 5
        %v5730 = vor.u32 %v5726, %v5729
        %v5731 = vrot.slane %v5730, 4
        %v5733 = vshll.u32 %v5655, 16
        %v5735 = vrot.slane %v5733, 5
        %v5736 = vsel %vm2037, %v5731, %v5735
        %v5737 = vshrl.u32 %v5655, 16
        %v5739 = vrot.slane %v5737, 4
        %v5740 = vor.u32 %v5739, %v5735
        %v5741 = vrot.slane %v5740, 4
        %v5743 = vshll.u32 %v5656, 16
        %v5745 = vrot.slane %v5743, 5
        %v5746 = vsel %vm2037, %v5741, %v5745
        %v5748 = vshrl.u32 %v5657, 16
        %v5750 = vrot.slane %v5748, 4
        %v5751 = vshll.u32 %v5657, 16
        %v5753 = vrot.slane %v5751, 5
        %v5754 = vor.u32 %v5750, %v5753
        %v5755 = vrot.slane %v5754, 4
        %v5757 = vshll.u32 %v5658, 16
        %v5759 = vrot.slane %v5757, 5
        %v5760 = vsel %vm2037, %v5755, %v5759
        %v5761 = vshrl.u32 %v5658, 16
        %v5763 = vrot.slane %v5761, 4
        %v5764 = vor.u32 %v5763, %v5759
        %v5765 = vrot.slane %v5764, 4
        %v5767 = vshll.u32 %v5659, 16
        %v5769 = vrot.slane %v5767, 5
        %v5770 = vsel %vm2037, %v5765, %v5769
        %v5772 = vshrl.u32 %v5660, 16
        %v5774 = vrot.slane %v5772, 4
        %v5775 = vshll.u32 %v5660, 16
        %v5777 = vrot.slane %v5775, 5
        %v5778 = vor.u32 %v5774, %v5777
        %v5779 = vrot.slane %v5778, 4
        %v5781 = vshll.u32 %v5661, 16
        %v5783 = vrot.slane %v5781, 5
        %v5784 = vsel %vm2037, %v5779, %v5783
        %v5785 = vshrl.u32 %v5661, 16
        %v5787 = vrot.slane %v5785, 4
        %v5788 = vor.u32 %v5787, %v5783
        %v5789 = vrot.slane %v5788, 4
        %v5791 = vshll.u32 %v5662, 16
        %v5793 = vrot.slane %v5791, 5
        %v5794 = vsel %vm2037, %v5789, %v5793
        %v5796 = vshrl.u32 %v5663, 16
        %v5798 = vrot.slane %v5796, 4
        %v5799 = vshll.u32 %v5663, 16
        %v5801 = vrot.slane %v5799, 5
        %v5802 = vor.u32 %v5798, %v5801
        %v5803 = vrot.slane %v5802, 4
        %v5805 = vshll.u32 %v5664, 16
        %v5807 = vrot.slane %v5805, 5
        %v5808 = vsel %vm2037, %v5803, %v5807
        %v5809 = vshrl.u32 %v5664, 16
        %v5811 = vrot.slane %v5809, 4
        %v5812 = vor.u32 %v5811, %v5807
        %v5813 = vrot.slane %v5812, 4
        %v5815 = vshll.u32 %v5665, 16
        %v5817 = vrot.slane %v5815, 5
        %v5818 = vsel %vm2037, %v5813, %v5817
        %v5820 = vshrl.u32 %v5666, 16
        %v5822 = vrot.slane %v5820, 4
        %v5823 = vshll.u32 %v5666, 16
        %v5825 = vrot.slane %v5823, 5
        %v5826 = vor.u32 %v5822, %v5825
        %v5827 = vrot.slane %v5826, 4
        %v5829 = vshll.u32 %v5667, 16
        %v5831 = vrot.slane %v5829, 5
        %v5832 = vsel %vm2037, %v5827, %v5831
        %v5833 = vshrl.u32 %v5667, 16
        %v5835 = vrot.slane %v5833, 4
        %v5836 = vor.u32 %v5835, %v5831
        %v5837 = vrot.slane %v5836, 4
        %v5839 = vshll.u32 %v5668, 16
        %v5841 = vrot.slane %v5839, 5
        %v5842 = vsel %vm2037, %v5837, %v5841
        %v5844 = vshrl.u32 %v5669, 16
        %v5846 = vrot.slane %v5844, 4
        %v5847 = vshll.u32 %v5669, 16
        %v5849 = vrot.slane %v5847, 5
        %v5850 = vor.u32 %v5846, %v5849
        %v5851 = vrot.slane %v5850, 4
        %v5853 = vshll.u32 %v5670, 16
        %v5855 = vrot.slane %v5853, 5
        %v5856 = vsel %vm2037, %v5851, %v5855
        %v5857 = vshrl.u32 %v5670, 16
        %v5859 = vrot.slane %v5857, 4
        %v5860 = vor.u32 %v5859, %v5855
        %v5861 = vrot.slane %v5860, 4
        %v5863 = vshll.u32 %v5671, 16
        %v5865 = vrot.slane %v5863, 5
        %v5866 = vsel %vm2037, %v5861, %v5865
        %v5868 = vshrl.u32 %v5672, 16
        %v5870 = vrot.slane %v5868, 4
        %v5871 = vshll.u32 %v5672, 16
        %v5873 = vrot.slane %v5871, 5
        %v5874 = vor.u32 %v5870, %v5873
        %v5875 = vrot.slane %v5874, 4
        %v5877 = vshll.u32 %v5673, 16
        %v5879 = vrot.slane %v5877, 5
        %v5880 = vsel %vm2037, %v5875, %v5879
        %v5881 = vshrl.u32 %v5673, 16
        %v5883 = vrot.slane %v5881, 4
        %v5884 = vor.u32 %v5883, %v5879
        %v5885 = vrot.slane %v5884, 4
        %v5887 = vshll.u32 %v5674, 16
        %v5889 = vrot.slane %v5887, 5
        %v5890 = vsel %vm2037, %v5885, %v5889
        %v5892 = vshrl.u32 %v5675, 16
        %v5894 = vrot.slane %v5892, 4
        %v5895 = vshll.u32 %v5675, 16
        %v5897 = vrot.slane %v5895, 5
        %v5898 = vor.u32 %v5894, %v5897
        %v5899 = vrot.slane %v5898, 4
        %v5901 = vshll.u32 %v5676, 16
        %v5903 = vrot.slane %v5901, 5
        %v5904 = vsel %vm2037, %v5899, %v5903
        %v5905 = vshrl.u32 %v5676, 16
        %v5907 = vrot.slane %v5905, 4
        %v5908 = vor.u32 %v5907, %v5903
        %v5909 = vrot.slane %v5908, 4
        %v5911 = vshll.u32 %v5677, 16
        %v5913 = vrot.slane %v5911, 5
        %v5914 = vsel %vm2037, %v5909, %v5913
        %v5916 = vshrl.u32 %v5678, 16
        %v5918 = vrot.slane %v5916, 4
        %v5919 = vshll.u32 %v5678, 16
        %v5921 = vrot.slane %v5919, 5
        %v5922 = vor.u32 %v5918, %v5921
        %v5923 = vrot.slane %v5922, 4
        %v5925 = vshll.u32 %v5679, 16
        %v5927 = vrot.slane %v5925, 5
        %v5928 = vsel %vm2037, %v5923, %v5927
        %v5929 = vshrl.u32 %v5679, 16
        %v5931 = vrot.slane %v5929, 4
        %v5932 = vor.u32 %v5931, %v5927
        %v5933 = vrot.slane %v5932, 4
        %v5935 = vshll.u32 %v5680, 16
        %v5937 = vrot.slane %v5935, 5
        %v5938 = vsel %vm2037, %v5933, %v5937
        %v5940 = vshrl.u32 %v5681, 16
        %v5942 = vrot.slane %v5940, 4
        %v5943 = vshll.u32 %v5681, 16
        %v5945 = vrot.slane %v5943, 5
        %v5946 = vor.u32 %v5942, %v5945
        %v5947 = vrot.slane %v5946, 4
        %v5949 = vshll.u32 %v5682, 16
        %v5951 = vrot.slane %v5949, 5
        %v5952 = vsel %vm2037, %v5947, %v5951
        %v5953 = vshrl.u32 %v5682, 16
        %v5955 = vrot.slane %v5953, 4
        %v5956 = vor.u32 %v5955, %v5951
        %v5957 = vrot.slane %v5956, 4
        %v5959 = vshll.u32 %v5683, 16
        %v5961 = vrot.slane %v5959, 5
        %v5962 = vsel %vm2037, %v5957, %v5961
        %v5964 = vshrl.u32 %v5684, 16
        %v5966 = vrot.slane %v5964, 4
        %v5967 = vshll.u32 %v5684, 16
        %v5969 = vrot.slane %v5967, 5
        %v5970 = vor.u32 %v5966, %v5969
        %v5971 = vrot.slane %v5970, 4
        %v5973 = vshll.u32 %v5685, 16
        %v5975 = vrot.slane %v5973, 5
        %v5976 = vsel %vm2037, %v5971, %v5975
        %v5977 = vshrl.u32 %v5685, 16
        %v5979 = vrot.slane %v5977, 4
        %v5980 = vor.u32 %v5979, %v5975
        %v5981 = vrot.slane %v5980, 4
        %v5983 = vshll.u32 %v5686, 16
        %v5985 = vrot.slane %v5983, 5
        %v5986 = vsel %vm2037, %v5981, %v5985
        %v5988 = vshrl.u32 %v5687, 16
        %v5990 = vrot.slane %v5988, 4
        %v5991 = vshll.u32 %v5687, 16
        %v5993 = vrot.slane %v5991, 5
        %v5994 = vor.u32 %v5990, %v5993
        %v5995 = vrot.slane %v5994, 4
        %v5997 = vshll.u32 %v5688, 16
        %v5999 = vrot.slane %v5997, 5
        %v6000 = vsel %vm2037, %v5995, %v5999
        %v6001 = vshrl.u32 %v5688, 16
        %v6003 = vrot.slane %v6001, 4
        %v6004 = vor.u32 %v6003, %v5999
        %v6005 = vrot.slane %v6004, 4
        %v6007 = vshll.u32 %v5689, 16
        %v6009 = vrot.slane %v6007, 5
        %v6010 = vsel %vm2037, %v6005, %v6009
        %v6012 = vshrl.u32 %v5690, 16
        %v6014 = vrot.slane %v6012, 4
        %v6015 = vshll.u32 %v5690, 16
        %v6017 = vrot.slane %v6015, 5
        %v6018 = vor.u32 %v6014, %v6017
        %v6019 = vrot.slane %v6018, 4
        %v6021 = vshll.u32 %v5691, 16
        %v6023 = vrot.slane %v6021, 5
        %v6024 = vsel %vm2037, %v6019, %v6023
        %v6025 = vshrl.u32 %v5691, 16
        %v6027 = vrot.slane %v6025, 4
        %v6028 = vor.u32 %v6027, %v6023
        %v6029 = vrot.slane %v6028, 4
        %v6031 = vshll.u32 %v5692, 16
        %v6033 = vrot.slane %v6031, 5
        %v6034 = vsel %vm2037, %v6029, %v6033
        %v6036 = vshrl.u32 %v5693, 16
        %v6038 = vrot.slane %v6036, 4
        %v6039 = vshll.u32 %v5693, 16
        %v6041 = vrot.slane %v6039, 5
        %v6042 = vor.u32 %v6038, %v6041
        %v6043 = vrot.slane %v6042, 4
        %v6045 = vshll.u32 %v5694, 16
        %v6047 = vrot.slane %v6045, 5
        %v6048 = vsel %vm2037, %v6043, %v6047
        %v6049 = vshrl.u32 %v5694, 16
        %v6051 = vrot.slane %v6049, 4
        %v6052 = vor.u32 %v6051, %v6047
        %v6053 = vrot.slane %v6052, 4
        %v6055 = vshll.u32 %v5695, 16
        %v6057 = vrot.slane %v6055, 5
        %v6058 = vsel %vm2037, %v6053, %v6057
        %v6060 = vshrl.u32 %v5696, 16
        %v6062 = vrot.slane %v6060, 4
        %v6063 = vshll.u32 %v5696, 16
        %v6065 = vrot.slane %v6063, 5
        %v6066 = vor.u32 %v6062, %v6065
        %v6067 = vrot.slane %v6066, 4
        %v6069 = vshll.u32 %v5697, 16
        %v6071 = vrot.slane %v6069, 5
        %v6072 = vsel %vm2037, %v6067, %v6071
        %v6073 = vshrl.u32 %v5697, 16
        %v6075 = vrot.slane %v6073, 4
        %v6076 = vor.u32 %v6075, %v6071
        %v6077 = vrot.slane %v6076, 4
        %v6079 = vshll.u32 %v5698, 16
        %v6081 = vrot.slane %v6079, 5
        %v6082 = vsel %vm2037, %v6077, %v6081
        %s6083 = scalar_lea.vmem [#allocation9], 256
        %v6084 = vld [vmem:[%s6083] sm:$0xf]
        %v6085 = vld [vmem:[%s6083 + $0x4] sm:$0xf]
        %v6086 = vld [vmem:[%s6083 + $0x8] sm:$0xf]
        %v6087 = vld [vmem:[%s6083 + $0xc] sm:$0xf]
        %v6088 = vld [vmem:[%s6083 + $0x10] sm:$0xf]
        %v6089 = vld [vmem:[%s6083 + $0x14] sm:$0xf]
        %v6090 = vld [vmem:[%s6083 + $0x18] sm:$0xf]
        %v6091 = vld [vmem:[%s6083 + $0x1c] sm:$0xf]
        %v6092 = vunpack.c.l.b16 %v5712
        %v6093 = vunpack.c.l.b16 %v5722
        %v6094 = vunpack.c.l.b16 %v5736
        %v6095 = vunpack.c.l.b16 %v5746
        %v6096 = vunpack.c.l.b16 %v5760
        %v6097 = vunpack.c.l.b16 %v5770
        %v6098 = vunpack.c.l.b16 %v5784
        %v6099 = vunpack.c.l.b16 %v5794
        %v6100 = vunpack.c.l.b16 %v5808
        %v6101 = vunpack.c.l.b16 %v5818
        %v6102 = vunpack.c.l.b16 %v5832
        %v6103 = vunpack.c.l.b16 %v5842
        %v6104 = vunpack.c.l.b16 %v5856
        %v6105 = vunpack.c.l.b16 %v5866
        %v6106 = vunpack.c.l.b16 %v5880
        %v6107 = vunpack.c.l.b16 %v5890
        %v6108 = vunpack.c.l.b16 %v5904
        %v6109 = vunpack.c.l.b16 %v5914
        %v6110 = vunpack.c.l.b16 %v5928
        %v6111 = vunpack.c.l.b16 %v5938
        %v6112 = vunpack.c.l.b16 %v5952
        %v6113 = vunpack.c.l.b16 %v5962
        %v6114 = vunpack.c.l.b16 %v5976
        %v6115 = vunpack.c.l.b16 %v5986
        %v6116 = vunpack.c.l.b16 %v6000
        %v6117 = vunpack.c.l.b16 %v6010
        %v6118 = vunpack.c.l.b16 %v6024
        %v6119 = vunpack.c.l.b16 %v6034
        %v6120 = vunpack.c.l.b16 %v6048
        %v6121 = vunpack.c.l.b16 %v6058
        %v6122 = vunpack.c.l.b16 %v6072
        %v6123 = vunpack.c.l.b16 %v6082
        %v6124 = vpack.c.b16 %v6093, %v6092
        %v6125 = vpack.c.b16 %v6095, %v6094
        %v6126 = vpack.c.b16 %v6097, %v6096
        %v6127 = vpack.c.b16 %v6099, %v6098
        %v6128 = vpack.c.b16 %v6101, %v6100
        %v6129 = vpack.c.b16 %v6103, %v6102
        %v6130 = vpack.c.b16 %v6105, %v6104
        %v6131 = vpack.c.b16 %v6107, %v6106
        %v6132 = vpack.c.b16 %v6109, %v6108
        %v6133 = vpack.c.b16 %v6111, %v6110
        %v6134 = vpack.c.b16 %v6113, %v6112
        %v6135 = vpack.c.b16 %v6115, %v6114
        %v6136 = vpack.c.b16 %v6117, %v6116
        %v6137 = vpack.c.b16 %v6119, %v6118
        %v6138 = vpack.c.b16 %v6121, %v6120
        %v6139 = vpack.c.b16 %v6123, %v6122
        %v6148 = vunpack.c.l.b16 %v6084
        %v6149 = vunpack.c.l.b16 %v6085
        %v6150 = vunpack.c.l.b16 %v6086
        %v6151 = vunpack.c.l.b16 %v6087
        %v6152 = vunpack.c.l.b16 %v6088
        %v6153 = vunpack.c.l.b16 %v6089
        %v6154 = vunpack.c.l.b16 %v6090
        %v6155 = vunpack.c.l.b16 %v6091
        %v6156 = vpack.c.b16 %v6149, %v6148
        %v6157 = vpack.c.b16 %v6151, %v6150
        %v6158 = vpack.c.b16 %v6153, %v6152
        %v6159 = vpack.c.b16 %v6155, %v6154
        %v6165 = vsel %vm1496, %v6124, 0
        %v6168 = vsel %vm1496, %v6125, 0
        %v6171 = vsel %vm1496, %v6126, 0
        %v6174 = vsel %vm1496, %v6127, 0
        %v6177 = vsel %vm1496, %v6128, 0
        %v6180 = vsel %vm1496, %v6129, 0
        %v6183 = vsel %vm1496, %v6130, 0
        %v6186 = vsel %vm1496, %v6131, 0
        %v6189 = vsel %vm1496, %v6132, 0
        %v6192 = vsel %vm1496, %v6133, 0
        %v6195 = vsel %vm1496, %v6134, 0
        %v6198 = vsel %vm1496, %v6135, 0
        %v6201 = vsel %vm1496, %v6136, 0
        %v6204 = vsel %vm1496, %v6137, 0
        %v6207 = vsel %vm1496, %v6138, 0
        %v6210 = vsel %vm1496, %v6139, 0
        %6212 = vmatprep.subr.bf16.mxu0 0
        %6213 = vmatpush1.bf16.msra.mxu0 0
        %6214 = vmatprep.subr.bf16.mxu0 0
        %6215 = vmatpush1.bf16.msra.mxu0 0
        %6216 = vmatprep.subr.bf16.mxu0 0
        %6217 = vmatpush1.bf16.msra.mxu0 0
        %6218 = vmatprep.subr.bf16.mxu0 0
        %6219 = vmatpush1.bf16.msra.mxu0 0
        %6220 = vmatprep.subr.bf16.mxu0 0
        %6221 = vmatpush1.bf16.msra.mxu0 %v6159
        %6222 = vmatprep.subr.bf16.mxu0 0
        %6223 = vmatpush1.bf16.msra.mxu0 %v6158
        %6224 = vmatprep.subr.bf16.mxu0 0
        %6225 = vmatpush1.bf16.msra.mxu0 %v6157
        %6226 = vmatprep.subr.bf16.mxu0 0
        %6227 = vmatpush1.bf16.msra.mxu0 %v6156
        %6228 = vmatprep.subr.bf16.mxu0 0
        %6229 = vmatpush2.bf16.msra.mxu0 0
        %6230 = vmatprep.subr.bf16.mxu0 0
        %6231 = vmatpush2.bf16.msra.mxu0 0
        %6232 = vmatprep.subr.bf16.mxu0 0
        %6233 = vmatpush2.bf16.msra.mxu0 0
        %6234 = vmatprep.subr.bf16.mxu0 0
        %6235 = vmatpush2.bf16.msra.mxu0 0
        %6236 = vmatprep.subr.bf16.mxu0 0
        %6237 = vmatpush2.bf16.msra.mxu0 0
        %6238 = vmatprep.subr.bf16.mxu0 0
        %6239 = vmatpush2.bf16.msra.mxu0 0
        %6240 = vmatprep.subr.bf16.mxu0 0
        %6241 = vmatpush2.bf16.msra.mxu0 0
        %6242 = vmatprep.subr.bf16.mxu0 0
        %6243 = vmatpush2.bf16.msra.mxu0 0
        %6244 = vmatprep.mubr.bf16.mxu0 0
        %6245 = vmatmul.mubr.bf16.gmra.mxu0 %v6165
        %v6246 = vpop.f32.mrf.mxu0
        %v6247 = vadd.f32 0.0, %v6246
        %v6248 = vpop.f32.mrf.mxu0
        %v6249 = vpop.f32.mrf.mxu0
        %v6250 = vadd.f32 0.0, %v6249
        %v6251 = vpop.f32.mrf.mxu0
        %6252 = vmatprep.mubr.bf16.mxu0 0
        %6253 = vmatmul.mubr.bf16.gmra.mxu0 %v6168
        %v6254 = vpop.f32.mrf.mxu0
        %v6255 = vadd.f32 0.0, %v6254
        %v6256 = vpop.f32.mrf.mxu0
        %v6257 = vpop.f32.mrf.mxu0
        %v6258 = vadd.f32 0.0, %v6257
        %v6259 = vpop.f32.mrf.mxu0
        %6260 = vmatprep.mubr.bf16.mxu0 0
        %6261 = vmatmul.mubr.bf16.gmra.mxu0 %v6171
        %v6262 = vpop.f32.mrf.mxu0
        %v6263 = vadd.f32 0.0, %v6262
        %v6264 = vpop.f32.mrf.mxu0
        %v6265 = vpop.f32.mrf.mxu0
        %v6266 = vadd.f32 0.0, %v6265
        %v6267 = vpop.f32.mrf.mxu0
        %6268 = vmatprep.mubr.bf16.mxu0 0
        %6269 = vmatmul.mubr.bf16.gmra.mxu0 %v6174
        %v6270 = vpop.f32.mrf.mxu0
        %v6271 = vadd.f32 0.0, %v6270
        %v6272 = vpop.f32.mrf.mxu0
        %v6273 = vpop.f32.mrf.mxu0
        %v6274 = vadd.f32 0.0, %v6273
        %v6275 = vpop.f32.mrf.mxu0
        %6276 = vmatprep.mubr.bf16.mxu0 0
        %6277 = vmatmul.mubr.bf16.gmra.mxu0 %v6177
        %v6278 = vpop.f32.mrf.mxu0
        %v6279 = vadd.f32 0.0, %v6278
        %v6280 = vpop.f32.mrf.mxu0
        %v6281 = vpop.f32.mrf.mxu0
        %v6282 = vadd.f32 0.0, %v6281
        %v6283 = vpop.f32.mrf.mxu0
        %6284 = vmatprep.mubr.bf16.mxu0 0
        %6285 = vmatmul.mubr.bf16.gmra.mxu0 %v6180
        %v6286 = vpop.f32.mrf.mxu0
        %v6287 = vadd.f32 0.0, %v6286
        %v6288 = vpop.f32.mrf.mxu0
        %v6289 = vpop.f32.mrf.mxu0
        %v6290 = vadd.f32 0.0, %v6289
        %v6291 = vpop.f32.mrf.mxu0
        %6292 = vmatprep.mubr.bf16.mxu0 0
        %6293 = vmatmul.mubr.bf16.gmra.mxu0 %v6183
        %v6294 = vpop.f32.mrf.mxu0
        %v6295 = vadd.f32 0.0, %v6294
        %v6296 = vpop.f32.mrf.mxu0
        %v6297 = vpop.f32.mrf.mxu0
        %v6298 = vadd.f32 0.0, %v6297
        %v6299 = vpop.f32.mrf.mxu0
        %6300 = vmatprep.mubr.bf16.mxu0 0
        %6301 = vmatmul.mubr.bf16.gmra.mxu0 %v6186
        %v6302 = vpop.f32.mrf.mxu0
        %v6303 = vadd.f32 0.0, %v6302
        %v6304 = vpop.f32.mrf.mxu0
        %v6305 = vpop.f32.mrf.mxu0
        %v6306 = vadd.f32 0.0, %v6305
        %v6307 = vpop.f32.mrf.mxu0
        %6308 = vmatprep.mubr.bf16.mxu0 0
        %6309 = vmatmul.mubr.bf16.gmra.mxu0 %v6189
        %v6310 = vpop.f32.mrf.mxu0
        %v6311 = vadd.f32 0.0, %v6310
        %v6312 = vpop.f32.mrf.mxu0
        %v6313 = vpop.f32.mrf.mxu0
        %v6314 = vadd.f32 0.0, %v6313
        %v6315 = vpop.f32.mrf.mxu0
        %6316 = vmatprep.mubr.bf16.mxu0 0
        %6317 = vmatmul.mubr.bf16.gmra.mxu0 %v6192
        %v6318 = vpop.f32.mrf.mxu0
        %v6319 = vadd.f32 0.0, %v6318
        %v6320 = vpop.f32.mrf.mxu0
        %v6321 = vpop.f32.mrf.mxu0
        %v6322 = vadd.f32 0.0, %v6321
        %v6323 = vpop.f32.mrf.mxu0
        %6324 = vmatprep.mubr.bf16.mxu0 0
        %6325 = vmatmul.mubr.bf16.gmra.mxu0 %v6195
        %v6326 = vpop.f32.mrf.mxu0
        %v6327 = vadd.f32 0.0, %v6326
        %v6328 = vpop.f32.mrf.mxu0
        %v6329 = vpop.f32.mrf.mxu0
        %v6330 = vadd.f32 0.0, %v6329
        %v6331 = vpop.f32.mrf.mxu0
        %6332 = vmatprep.mubr.bf16.mxu0 0
        %6333 = vmatmul.mubr.bf16.gmra.mxu0 %v6198
        %v6334 = vpop.f32.mrf.mxu0
        %v6335 = vadd.f32 0.0, %v6334
        %v6336 = vpop.f32.mrf.mxu0
        %v6337 = vpop.f32.mrf.mxu0
        %v6338 = vadd.f32 0.0, %v6337
        %v6339 = vpop.f32.mrf.mxu0
        %6340 = vmatprep.mubr.bf16.mxu0 0
        %6341 = vmatmul.mubr.bf16.gmra.mxu0 %v6201
        %v6342 = vpop.f32.mrf.mxu0
        %v6343 = vadd.f32 0.0, %v6342
        %v6344 = vpop.f32.mrf.mxu0
        %v6345 = vpop.f32.mrf.mxu0
        %v6346 = vadd.f32 0.0, %v6345
        %v6347 = vpop.f32.mrf.mxu0
        %6348 = vmatprep.mubr.bf16.mxu0 0
        %6349 = vmatmul.mubr.bf16.gmra.mxu0 %v6204
        %v6350 = vpop.f32.mrf.mxu0
        %v6351 = vadd.f32 0.0, %v6350
        %v6352 = vpop.f32.mrf.mxu0
        %v6353 = vpop.f32.mrf.mxu0
        %v6354 = vadd.f32 0.0, %v6353
        %v6355 = vpop.f32.mrf.mxu0
        %6356 = vmatprep.mubr.bf16.mxu0 0
        %6357 = vmatmul.mubr.bf16.gmra.mxu0 %v6207
        %v6358 = vpop.f32.mrf.mxu0
        %v6359 = vadd.f32 0.0, %v6358
        %v6360 = vpop.f32.mrf.mxu0
        %v6361 = vpop.f32.mrf.mxu0
        %v6362 = vadd.f32 0.0, %v6361
        %v6363 = vpop.f32.mrf.mxu0
        %6364 = vmatprep.mubr.bf16.mxu0 0
        %6365 = vmatmul.mubr.bf16.gmra.mxu0 %v6210
        %v6366 = vpop.f32.mrf.mxu0
        %v6367 = vadd.f32 0.0, %v6366
        %v6368 = vpop.f32.mrf.mxu0
        %v6369 = vpop.f32.mrf.mxu0
        %v6370 = vadd.f32 0.0, %v6369
        %v6371 = vpop.f32.mrf.mxu0
        %6372 = vdwg.mxu0
        %v6373 = vadd.f32 %v5619, %v6247
        %v6374 = vadd.f32 %v5620, %v6250
        %v6375 = vadd.f32 %v5621, %v6255
        %v6376 = vadd.f32 %v5622, %v6258
        %v6377 = vadd.f32 %v5623, %v6263
        %v6378 = vadd.f32 %v5624, %v6266
        %v6379 = vadd.f32 %v5625, %v6271
        %v6380 = vadd.f32 %v5626, %v6274
        %v6381 = vadd.f32 %v5627, %v6279
        %v6382 = vadd.f32 %v5628, %v6282
        %v6383 = vadd.f32 %v5629, %v6287
        %v6384 = vadd.f32 %v5630, %v6290
        %v6385 = vadd.f32 %v5631, %v6295
        %v6386 = vadd.f32 %v5632, %v6298
        %v6387 = vadd.f32 %v5633, %v6303
        %v6388 = vadd.f32 %v5634, %v6306
        %v6389 = vadd.f32 %v5635, %v6311
        %v6390 = vadd.f32 %v5636, %v6314
        %v6391 = vadd.f32 %v5637, %v6319
        %v6392 = vadd.f32 %v5638, %v6322
        %v6393 = vadd.f32 %v5639, %v6327
        %v6394 = vadd.f32 %v5640, %v6330
        %v6395 = vadd.f32 %v5641, %v6335
        %v6396 = vadd.f32 %v5642, %v6338
        %v6397 = vadd.f32 %v5643, %v6343
        %v6398 = vadd.f32 %v5644, %v6346
        %v6399 = vadd.f32 %v5645, %v6351
        %v6400 = vadd.f32 %v5646, %v6354
        %v6401 = vadd.f32 %v5647, %v6359
        %v6402 = vadd.f32 %v5648, %v6362
        %v6403 = vadd.f32 %v5649, %v6367
        %v6404 = vadd.f32 %v5650, %v6370
        %v6405 = vld [vmem:[%s4] sm:$0x1]
        %v6407 = vlaneseq
        %v6408 = vshrl.u32 %v6407, 7
        %v6409 = vsub.s32 0, %v6408
        %v6410 = vrot.slane %v6405, %v6409
        %v6412 = vadd.f32 %v6373, %v6410
        %v6413 = vadd.f32 %v6374, %v6410
        %v6414 = vadd.f32 %v6375, %v6410
        %v6415 = vadd.f32 %v6376, %v6410
        %v6416 = vadd.f32 %v6377, %v6410
        %v6417 = vadd.f32 %v6378, %v6410
        %v6418 = vadd.f32 %v6379, %v6410
        %v6419 = vadd.f32 %v6380, %v6410
        %v6420 = vadd.f32 %v6381, %v6410
        %v6421 = vadd.f32 %v6382, %v6410
        %v6422 = vadd.f32 %v6383, %v6410
        %v6423 = vadd.f32 %v6384, %v6410
        %v6424 = vadd.f32 %v6385, %v6410
        %v6425 = vadd.f32 %v6386, %v6410
        %v6426 = vadd.f32 %v6387, %v6410
        %v6427 = vadd.f32 %v6388, %v6410
        %v6428 = vadd.f32 %v6389, %v6410
        %v6429 = vadd.f32 %v6390, %v6410
        %v6430 = vadd.f32 %v6391, %v6410
        %v6431 = vadd.f32 %v6392, %v6410
        %v6432 = vadd.f32 %v6393, %v6410
        %v6433 = vadd.f32 %v6394, %v6410
        %v6434 = vadd.f32 %v6395, %v6410
        %v6435 = vadd.f32 %v6396, %v6410
        %v6436 = vadd.f32 %v6397, %v6410
        %v6437 = vadd.f32 %v6398, %v6410
        %v6438 = vadd.f32 %v6399, %v6410
        %v6439 = vadd.f32 %v6400, %v6410
        %v6440 = vadd.f32 %v6401, %v6410
        %v6441 = vadd.f32 %v6402, %v6410
        %v6442 = vadd.f32 %v6403, %v6410
        %v6443 = vadd.f32 %v6404, %v6410
        %v6444 = vmax.f32 %v6412, 0.0
        %v6445 = vmax.f32 %v6413, 0.0
        %v6446 = vmax.f32 %v6414, 0.0
        %v6447 = vmax.f32 %v6415, 0.0
        %v6448 = vmax.f32 %v6416, 0.0
        %v6449 = vmax.f32 %v6417, 0.0
        %v6450 = vmax.f32 %v6418, 0.0
        %v6451 = vmax.f32 %v6419, 0.0
        %v6452 = vmax.f32 %v6420, 0.0
        %v6453 = vmax.f32 %v6421, 0.0
        %v6454 = vmax.f32 %v6422, 0.0
        %v6455 = vmax.f32 %v6423, 0.0
        %v6456 = vmax.f32 %v6424, 0.0
        %v6457 = vmax.f32 %v6425, 0.0
        %v6458 = vmax.f32 %v6426, 0.0
        %v6459 = vmax.f32 %v6427, 0.0
        %v6460 = vmax.f32 %v6428, 0.0
        %v6461 = vmax.f32 %v6429, 0.0
        %v6462 = vmax.f32 %v6430, 0.0
        %v6463 = vmax.f32 %v6431, 0.0
        %v6464 = vmax.f32 %v6432, 0.0
        %v6465 = vmax.f32 %v6433, 0.0
        %v6466 = vmax.f32 %v6434, 0.0
        %v6467 = vmax.f32 %v6435, 0.0
        %v6468 = vmax.f32 %v6436, 0.0
        %v6469 = vmax.f32 %v6437, 0.0
        %v6470 = vmax.f32 %v6438, 0.0
        %v6471 = vmax.f32 %v6439, 0.0
        %v6472 = vmax.f32 %v6440, 0.0
        %v6473 = vmax.f32 %v6441, 0.0
        %v6474 = vmax.f32 %v6442, 0.0
        %v6475 = vmax.f32 %v6443, 0.0
        %6476 = vst.msk [vmem:[#allocation3] sm:$0xff] %vm1496, %v6444
        %6477 = vst.msk [vmem:[#allocation3 + $0x8] sm:$0xff] %vm1496, %v6445
        %6478 = vst.msk [vmem:[#allocation3 + $0x10] sm:$0xff] %vm1496, %v6446
        %6479 = vst.msk [vmem:[#allocation3 + $0x18] sm:$0xff] %vm1496, %v6447
        %6480 = vst.msk [vmem:[#allocation3 + $0x20] sm:$0xff] %vm1496, %v6448
        %6481 = vst.msk [vmem:[#allocation3 + $0x28] sm:$0xff] %vm1496, %v6449
        %6482 = vst.msk [vmem:[#allocation3 + $0x30] sm:$0xff] %vm1496, %v6450
        %6483 = vst.msk [vmem:[#allocation3 + $0x38] sm:$0xff] %vm1496, %v6451
        %6484 = vst.msk [vmem:[#allocation3 + $0x40] sm:$0xff] %vm1496, %v6452
        %6485 = vst.msk [vmem:[#allocation3 + $0x48] sm:$0xff] %vm1496, %v6453
        %6486 = vst.msk [vmem:[#allocation3 + $0x50] sm:$0xff] %vm1496, %v6454
        %6487 = vst.msk [vmem:[#allocation3 + $0x58] sm:$0xff] %vm1496, %v6455
        %6488 = vst.msk [vmem:[#allocation3 + $0x60] sm:$0xff] %vm1496, %v6456
        %6489 = vst.msk [vmem:[#allocation3 + $0x68] sm:$0xff] %vm1496, %v6457
        %6490 = vst.msk [vmem:[#allocation3 + $0x70] sm:$0xff] %vm1496, %v6458
        %6491 = vst.msk [vmem:[#allocation3 + $0x78] sm:$0xff] %vm1496, %v6459
        %6492 = vst.msk [vmem:[#allocation3 + $0x80] sm:$0xff] %vm1496, %v6460
        %6493 = vst.msk [vmem:[#allocation3 + $0x88] sm:$0xff] %vm1496, %v6461
        %6494 = vst.msk [vmem:[#allocation3 + $0x90] sm:$0xff] %vm1496, %v6462
        %6495 = vst.msk [vmem:[#allocation3 + $0x98] sm:$0xff] %vm1496, %v6463
        %6496 = vst.msk [vmem:[#allocation3 + $0xa0] sm:$0xff] %vm1496, %v6464
        %6497 = vst.msk [vmem:[#allocation3 + $0xa8] sm:$0xff] %vm1496, %v6465
        %6498 = vst.msk [vmem:[#allocation3 + $0xb0] sm:$0xff] %vm1496, %v6466
        %6499 = vst.msk [vmem:[#allocation3 + $0xb8] sm:$0xff] %vm1496, %v6467
        %6500 = vst.msk [vmem:[#allocation3 + $0xc0] sm:$0xff] %vm1496, %v6468
        %6501 = vst.msk [vmem:[#allocation3 + $0xc8] sm:$0xff] %vm1496, %v6469
        %6502 = vst.msk [vmem:[#allocation3 + $0xd0] sm:$0xff] %vm1496, %v6470
        %6503 = vst.msk [vmem:[#allocation3 + $0xd8] sm:$0xff] %vm1496, %v6471
        %6504 = vst.msk [vmem:[#allocation3 + $0xe0] sm:$0xff] %vm1496, %v6472
        %6505 = vst.msk [vmem:[#allocation3 + $0xe8] sm:$0xff] %vm1496, %v6473
        %6506 = vst.msk [vmem:[#allocation3 + $0xf0] sm:$0xff] %vm1496, %v6474
        %6507 = vst.msk [vmem:[#allocation3 + $0xf8] sm:$0xff] %vm1496, %v6475
        %v6508 = vld [vmem:[#allocation3] ss:$2 sm:$0xff]
        %s6509 = scalar_lea.vmem [#allocation3], 32
        %v6510 = vld [vmem:[%s6509] ss:$2 sm:$0xff]
        %s6511 = scalar_lea.vmem [#allocation3], 64
        %v6512 = vld [vmem:[%s6511] ss:$2 sm:$0xff]
        %s6513 = scalar_lea.vmem [#allocation3], 96
        %v6514 = vld [vmem:[%s6513] ss:$2 sm:$0xff]
        %s6515 = scalar_lea.vmem [#allocation3], 128
        %v6516 = vld [vmem:[%s6515] ss:$2 sm:$0xff]
        %s6517 = scalar_lea.vmem [#allocation3], 160
        %v6518 = vld [vmem:[%s6517] ss:$2 sm:$0xff]
        %s6519 = scalar_lea.vmem [#allocation3], 192
        %v6520 = vld [vmem:[%s6519] ss:$2 sm:$0xff]
        %s6521 = scalar_lea.vmem [#allocation3], 224
        %v6522 = vld [vmem:[%s6521] ss:$2 sm:$0xff]
        %s6523 = scalar_lea.vmem [#allocation3], 1
        %v6524 = vld [vmem:[%s6523] ss:$2 sm:$0xff]
        %s6525 = scalar_lea.vmem [#allocation3], 33
        %v6526 = vld [vmem:[%s6525] ss:$2 sm:$0xff]
        %s6527 = scalar_lea.vmem [#allocation3], 65
        %v6528 = vld [vmem:[%s6527] ss:$2 sm:$0xff]
        %s6529 = scalar_lea.vmem [#allocation3], 97
        %v6530 = vld [vmem:[%s6529] ss:$2 sm:$0xff]
        %s6531 = scalar_lea.vmem [#allocation3], 129
        %v6532 = vld [vmem:[%s6531] ss:$2 sm:$0xff]
        %s6533 = scalar_lea.vmem [#allocation3], 161
        %v6534 = vld [vmem:[%s6533] ss:$2 sm:$0xff]
        %s6535 = scalar_lea.vmem [#allocation3], 193
        %v6536 = vld [vmem:[%s6535] ss:$2 sm:$0xff]
        %s6537 = scalar_lea.vmem [#allocation3], 225
        %v6538 = vld [vmem:[%s6537] ss:$2 sm:$0xff]
        %s6539 = scalar_lea.vmem [#allocation3], 16
        %v6540 = vld [vmem:[%s6539] ss:$2 sm:$0xff]
        %s6541 = scalar_lea.vmem %s6539, 32 [#allocation3]
        %v6542 = vld [vmem:[%s6541] ss:$2 sm:$0xff]
        %s6543 = scalar_lea.vmem %s6539, 64 [#allocation3]
        %v6544 = vld [vmem:[%s6543] ss:$2 sm:$0xff]
        %s6545 = scalar_lea.vmem %s6539, 96 [#allocation3]
        %v6546 = vld [vmem:[%s6545] ss:$2 sm:$0xff]
        %s6547 = scalar_lea.vmem %s6539, 128 [#allocation3]
        %v6548 = vld [vmem:[%s6547] ss:$2 sm:$0xff]
        %s6549 = scalar_lea.vmem %s6539, 160 [#allocation3]
        %v6550 = vld [vmem:[%s6549] ss:$2 sm:$0xff]
        %s6551 = scalar_lea.vmem %s6539, 192 [#allocation3]
        %v6552 = vld [vmem:[%s6551] ss:$2 sm:$0xff]
        %s6553 = scalar_lea.vmem %s6539, 224 [#allocation3]
        %v6554 = vld [vmem:[%s6553] ss:$2 sm:$0xff]
        %s6555 = scalar_lea.vmem %s6539, 1 [#allocation3]
        %v6556 = vld [vmem:[%s6555] ss:$2 sm:$0xff]
        %s6557 = scalar_lea.vmem %s6539, 33 [#allocation3]
        %v6558 = vld [vmem:[%s6557] ss:$2 sm:$0xff]
        %s6559 = scalar_lea.vmem %s6539, 65 [#allocation3]
        %v6560 = vld [vmem:[%s6559] ss:$2 sm:$0xff]
        %s6561 = scalar_lea.vmem %s6539, 97 [#allocation3]
        %v6562 = vld [vmem:[%s6561] ss:$2 sm:$0xff]
        %s6563 = scalar_lea.vmem %s6539, 129 [#allocation3]
        %v6564 = vld [vmem:[%s6563] ss:$2 sm:$0xff]
        %s6565 = scalar_lea.vmem %s6539, 161 [#allocation3]
        %v6566 = vld [vmem:[%s6565] ss:$2 sm:$0xff]
        %s6567 = scalar_lea.vmem %s6539, 193 [#allocation3]
        %v6568 = vld [vmem:[%s6567] ss:$2 sm:$0xff]
        %s6569 = scalar_lea.vmem %s6539, 225 [#allocation3]
        %v6570 = vld [vmem:[%s6569] ss:$2 sm:$0xff]
        %v6571 = vlaneseq
        %v6572 = vshrl.u32 %v6571, 7
        %v6573 = vmul.u32 %v6572, 2
        %v6574 = vadd.s32 %v6573, 32
        %v6575 = vadd.s32 %v6573, 64
        %v6576 = vadd.s32 %v6573, 96
        %v6577 = vadd.s32 %v6573, 128
        %v6578 = vadd.s32 %v6573, 160
        %v6579 = vadd.s32 %v6573, 192
        %v6580 = vadd.s32 %v6573, 224
        %vm6581 = vcmp.gt.f32.partialorder %v6524, %v6508
        %vm6582 = vcmp.gt.f32.partialorder %v6526, %v6510
        %vm6583 = vcmp.gt.f32.partialorder %v6528, %v6512
        %vm6584 = vcmp.gt.f32.partialorder %v6530, %v6514
        %vm6585 = vcmp.gt.f32.partialorder %v6532, %v6516
        %vm6586 = vcmp.gt.f32.partialorder %v6534, %v6518
        %vm6587 = vcmp.gt.f32.partialorder %v6536, %v6520
        %vm6588 = vcmp.gt.f32.partialorder %v6538, %v6522
        %v6589 = vadd.s32 %v6573, 1
        %v6590 = vadd.s32 %v6574, 1
        %v6591 = vadd.s32 %v6575, 1
        %v6592 = vadd.s32 %v6576, 1
        %v6593 = vadd.s32 %v6577, 1
        %v6594 = vadd.s32 %v6578, 1
        %v6595 = vadd.s32 %v6579, 1
        %v6596 = vadd.s32 %v6580, 1
        %v6597 = vsel %vm6581, %v6589, %v6573
        %v6598 = vsel %vm6582, %v6590, %v6574
        %v6599 = vsel %vm6583, %v6591, %v6575
        %v6600 = vsel %vm6584, %v6592, %v6576
        %v6601 = vsel %vm6585, %v6593, %v6577
        %v6602 = vsel %vm6586, %v6594, %v6578
        %v6603 = vsel %vm6587, %v6595, %v6579
        %v6604 = vsel %vm6588, %v6596, %v6580
        %v6605 = vsel %vm6581, %v6524, %v6508
        %v6606 = vsel %vm6582, %v6526, %v6510
        %v6607 = vsel %vm6583, %v6528, %v6512
        %v6608 = vsel %vm6584, %v6530, %v6514
        %v6609 = vsel %vm6585, %v6532, %v6516
        %v6610 = vsel %vm6586, %v6534, %v6518
        %v6611 = vsel %vm6587, %v6536, %v6520
        %v6612 = vsel %vm6588, %v6538, %v6522
        %vm6613 = vcmp.gt.f32.partialorder %v6540, %v6605
        %vm6614 = vcmp.gt.f32.partialorder %v6542, %v6606
        %vm6615 = vcmp.gt.f32.partialorder %v6544, %v6607
        %vm6616 = vcmp.gt.f32.partialorder %v6546, %v6608
        %vm6617 = vcmp.gt.f32.partialorder %v6548, %v6609
        %vm6618 = vcmp.gt.f32.partialorder %v6550, %v6610
        %vm6619 = vcmp.gt.f32.partialorder %v6552, %v6611
        %vm6620 = vcmp.gt.f32.partialorder %v6554, %v6612
        %v6621 = vadd.s32 %v6573, 16
        %v6622 = vadd.s32 %v6574, 16
        %v6623 = vadd.s32 %v6575, 16
        %v6624 = vadd.s32 %v6576, 16
        %v6625 = vadd.s32 %v6577, 16
        %v6626 = vadd.s32 %v6578, 16
        %v6627 = vadd.s32 %v6579, 16
        %v6628 = vadd.s32 %v6580, 16
        %v6629 = vsel %vm6613, %v6621, %v6597
        %v6630 = vsel %vm6614, %v6622, %v6598
        %v6631 = vsel %vm6615, %v6623, %v6599
        %v6632 = vsel %vm6616, %v6624, %v6600
        %v6633 = vsel %vm6617, %v6625, %v6601
        %v6634 = vsel %vm6618, %v6626, %v6602
        %v6635 = vsel %vm6619, %v6627, %v6603
        %v6636 = vsel %vm6620, %v6628, %v6604
        %v6637 = vsel %vm6613, %v6540, %v6605
        %v6638 = vsel %vm6614, %v6542, %v6606
        %v6639 = vsel %vm6615, %v6544, %v6607
        %v6640 = vsel %vm6616, %v6546, %v6608
        %v6641 = vsel %vm6617, %v6548, %v6609
        %v6642 = vsel %vm6618, %v6550, %v6610
        %v6643 = vsel %vm6619, %v6552, %v6611
        %v6644 = vsel %vm6620, %v6554, %v6612
        %vm6645 = vcmp.gt.f32.partialorder %v6556, %v6637
        %vm6646 = vcmp.gt.f32.partialorder %v6558, %v6638
        %vm6647 = vcmp.gt.f32.partialorder %v6560, %v6639
        %vm6648 = vcmp.gt.f32.partialorder %v6562, %v6640
        %vm6649 = vcmp.gt.f32.partialorder %v6564, %v6641
        %vm6650 = vcmp.gt.f32.partialorder %v6566, %v6642
        %vm6651 = vcmp.gt.f32.partialorder %v6568, %v6643
        %vm6652 = vcmp.gt.f32.partialorder %v6570, %v6644
        %v6653 = vadd.s32 %v6573, 17
        %v6654 = vadd.s32 %v6574, 17
        %v6655 = vadd.s32 %v6575, 17
        %v6656 = vadd.s32 %v6576, 17
        %v6657 = vadd.s32 %v6577, 17
        %v6658 = vadd.s32 %v6578, 17
        %v6659 = vadd.s32 %v6579, 17
        %v6660 = vadd.s32 %v6580, 17
        %v6661 = vsel %vm6645, %v6653, %v6629
        %v6662 = vsel %vm6646, %v6654, %v6630
        %v6663 = vsel %vm6647, %v6655, %v6631
        %v6664 = vsel %vm6648, %v6656, %v6632
        %v6665 = vsel %vm6649, %v6657, %v6633
        %v6666 = vsel %vm6650, %v6658, %v6634
        %v6667 = vsel %vm6651, %v6659, %v6635
        %v6668 = vsel %vm6652, %v6660, %v6636
        %v6669 = vsel %vm6645, %v6556, %v6637
        %v6670 = vsel %vm6646, %v6558, %v6638
        %v6671 = vsel %vm6647, %v6560, %v6639
        %v6672 = vsel %vm6648, %v6562, %v6640
        %v6673 = vsel %vm6649, %v6564, %v6641
        %v6674 = vsel %vm6650, %v6566, %v6642
        %v6675 = vsel %vm6651, %v6568, %v6643
        %v6676 = vsel %vm6652, %v6570, %v6644
        %6677 = vst.msk [vmem:[%s302] sm:$0xff] %vm1496, %v6669
        %6678 = vst.msk [vmem:[%s302 + $0x8] sm:$0xff] %vm1496, %v6670
        %6679 = vst.msk [vmem:[%s302 + $0x10] sm:$0xff] %vm1496, %v6671
        %6680 = vst.msk [vmem:[%s302 + $0x18] sm:$0xff] %vm1496, %v6672
        %6681 = vst.msk [vmem:[%s302 + $0x20] sm:$0xff] %vm1496, %v6673
        %6682 = vst.msk [vmem:[%s302 + $0x28] sm:$0xff] %vm1496, %v6674
        %6683 = vst.msk [vmem:[%s302 + $0x30] sm:$0xff] %vm1496, %v6675
        %6684 = vst.msk [vmem:[%s302 + $0x38] sm:$0xff] %vm1496, %v6676
        %6685 = vst.msk [vmem:[%s309] sm:$0xff] %vm1496, %v6661
        %6686 = vst.msk [vmem:[%s309 + $0x8] sm:$0xff] %vm1496, %v6662
        %6687 = vst.msk [vmem:[%s309 + $0x10] sm:$0xff] %vm1496, %v6663
        %6688 = vst.msk [vmem:[%s309 + $0x18] sm:$0xff] %vm1496, %v6664
        %6689 = vst.msk [vmem:[%s309 + $0x20] sm:$0xff] %vm1496, %v6665
        %6690 = vst.msk [vmem:[%s309 + $0x28] sm:$0xff] %vm1496, %v6666
        %6691 = vst.msk [vmem:[%s309 + $0x30] sm:$0xff] %vm1496, %v6667
        %6692 = vst.msk [vmem:[%s309 + $0x38] sm:$0xff] %vm1496, %v6668
        %s6693 = sand.u32 %s146, 1
        %s6694 = scalar_lea.sflag [#allocation6], %s6693
        %s6695 = sand.u32 %s146, 1
        %s6696 = smul.addr %s6695, 64
        %s6697 = scalar_lea.vmem [#allocation10], %s6696
        %s6698 = sand.u32 %s172, 1
        %s6699 = scalar_lea.sflag [#allocation12], %s6698
        %s6700 = sand.u32 %s172, 1
        %s6701 = smul.addr %s6700, 64
        %s6702 = scalar_lea.vmem [#allocation11], %s6701
        // Predicated region
        $region53: #{tpu_custom_call.1} parent=39 // pred_check
          %p6703 = pneg %p156
        $region54: #{tpu_custom_call.1} parent=39 // pred_check_branch
          %6705 = sbr.rel (%p6703) target = $region56
        $region55: #{tpu_custom_call.1} parent=39 // pred_region
          %s6707 = ssub.s32 1024, 1024
          %6708 = vsyncadd %s6694, %s6707
          %s6709 = smul.addr %s28, 8
          %s6710 = smul.addr %s6709, 128
          %s6711 = scalar_lea.hbm %s5, %s6710
          %s6712 = sshll.u32 %s6697, 4
          %s6713 = int_to_ptr.vmem [resolvable:$true] %s6712
          %6718 = dma.vmem_to_hbm [thread:$0]  %s6713, 1024, %s6711, %s6694, 128, 128, 8
        $region56: #{tpu_custom_call.1} parent=39 // pred_fallthru
          _
        // Predicated region
        $region57: #{tpu_custom_call.1} parent=39 // pred_check
          %p6719 = pneg %p182
        $region58: #{tpu_custom_call.1} parent=39 // pred_check_branch
          %6721 = sbr.rel (%p6719) target = $region60
        $region59: #{tpu_custom_call.1} parent=39 // pred_region
          %s6723 = ssub.s32 1024, 1024
          %6724 = vsyncadd %s6699, %s6723
          %s6725 = smul.addr %s28, 8
          %s6726 = smul.addr %s6725, 128
          %s6727 = scalar_lea.hbm %s6, %s6726
          %s6728 = sshll.u32 %s6702, 4
          %s6729 = int_to_ptr.vmem [resolvable:$true] %s6728
          %6734 = dma.vmem_to_hbm [thread:$0]  %s6729, 1024, %s6727, %s6699, 128, 128, 8
        $region60: #{tpu_custom_call.1} parent=39 // pred_fallthru
          _
      $region40: #{tpu_custom_call.1} parent=5 // pred_fallthru
        _
      %p6735 = scmp.le.s32.totalorder 2, %s23
      // Predicated region
      $region61: #{tpu_custom_call.1} parent=5 // pred_check
        %p6736 = pneg %p6735
      $region62: #{tpu_custom_call.1} parent=5 // pred_check_branch
        %6738 = sbr.rel (%p6736) target = $region64
      $region63: #{tpu_custom_call.1} parent=5 // pred_region
        %s6739 = ssub.s32 %s23, 2
        // Predicated region
        $region65: #{tpu_custom_call.1} parent=63 // pred_check
          %p6740 = pneg %p162
        $region66: #{tpu_custom_call.1} parent=63 // pred_check_branch
          %6742 = sbr.rel (%p6740) target = $region68
        $region67: #{tpu_custom_call.1} parent=63 // pred_region
          %s6743 = sand.u32 %s147, 1
          %s6744 = scalar_lea.sflag [#allocation6], %s6743
          %s6745 = sand.u32 %s147, 1
          %s6746 = smul.addr %s6745, 64
          %s6747 = scalar_lea.vmem [#allocation10], %s6746
          %6748 = dma.done %s6744, 1024
        $region68: #{tpu_custom_call.1} parent=63 // pred_fallthru
          _
        // Predicated region
        $region69: #{tpu_custom_call.1} parent=63 // pred_check
          %p6749 = pneg %p188
        $region70: #{tpu_custom_call.1} parent=63 // pred_check_branch
          %6751 = sbr.rel (%p6749) target = $region72
        $region71: #{tpu_custom_call.1} parent=63 // pred_region
          %s6752 = sand.u32 %s173, 1
          %s6753 = scalar_lea.sflag [#allocation12], %s6752
          %s6754 = sand.u32 %s173, 1
          %s6755 = smul.addr %s6754, 64
          %s6756 = scalar_lea.vmem [#allocation11], %s6755
          %6757 = dma.done %s6753, 1024
        $region72: #{tpu_custom_call.1} parent=63 // pred_fallthru
          _
      $region64: #{tpu_custom_call.1} parent=5 // pred_fallthru
        _
    $region6: #{tpu_custom_call.1} parent=1 // loop_footer
      %s27 = sadd.s32 1, %s23
    $region7: #{tpu_custom_call.1} parent=1 // loop_footer_branch
      %22 = sbr.rel target = $region3
    $region8: #{tpu_custom_call.1} parent=1 // loop_exit
      _
    %6758 = vsyncpa [#allocation5], 1
    %s6759 = scalar_lea.sflag [#allocation5], 1
    %6760 = vsyncpa %s6759, 1
    %6761 = vsyncpa [#allocation8], 1
    %6762 = vsyncpa [#allocation6], 1
    %s6763 = scalar_lea.sflag [#allocation6], 1
    %6764 = vsyncpa %s6763, 1
    %6765 = vsyncpa [#allocation12], 1
    %s6766 = scalar_lea.sflag [#allocation12], 1
    %6767 = vsyncpa %s6766, 1

</llo_original>
